<compile_context>
chip_gen: v6e
topology: v6e:2x2x1
jax: 0.10.0
libtpu: 0.0.40
codegen_flags: <defaults>
</compile_context>

<pallas_src>
import numpy as np
import jax
import jax.numpy as jnp
from jax import lax
from jax.experimental import pallas as pl
from jax.experimental.pallas import tpu as pltpu

# ---------------- model dimensions (small but consistent with the module) ----
N_IMG = 2            # batch of images
C, H, W = 3, 16, 16
IMG_IN = C * H * W   # 768, matches the CLIP embedding dim feeding the MLP head
M_LOC = 300          # number of GPS locations (small stand-in gallery)
LOC_HID = 256        # hidden width of the synthetic location encoder
D_MODEL = 512        # gps_features_dim
TILE_M = 256         # location tile per grid step (fills 256x256 MXU on v6e/v7x)
SUBLANE = 8          # f32 sublane tile


def _round_up(x, k):
    return (x + k - 1) // k * k


# ------------------- prologue kernel: image MLP head + normalize -------------
def _image_encoder_kernel(img_ref, iw1_ref, ib1_ref, iw2_ref, ib2_ref,
                          logit_scale_ref, feat_ref):
    x = img_ref[...]                                          # (n_pad, IMG_IN) bf16
    h = jnp.dot(x, iw1_ref[...], preferred_element_type=jnp.float32)
    h = jnp.maximum(h + ib1_ref[...], 0.0)
    f = jnp.dot(h.astype(jnp.bfloat16), iw2_ref[...],
                preferred_element_type=jnp.float32) + ib2_ref[...]
    # F.normalize(dim=1): x / max(||x||, 1e-12) == x * rsqrt(max(||x||^2, 1e-24))
    inv = lax.rsqrt(jnp.maximum(jnp.sum(f * f, axis=1, keepdims=True), 1e-24))
    # Fold exp(logit_scale) into the cached features so the gallery kernel
    # writes the similarity tile directly.
    scale = jnp.exp(logit_scale_ref[0, 0])
    feat_ref[...] = (f * inv * scale).astype(jnp.bfloat16)


# ------------------- gallery kernel: one 256-wide location tile --------------
def _gallery_kernel(img_feat_ref, loc_ref, lw1_ref, lb1_ref, lw2_ref, lb2_ref,
                    out_ref):
    loc = loc_ref[...]                                        # (TILE_M, 2) f32
    lat = loc[:, 0:1]
    lon = loc[:, 1:2]
    # First layer contracts over only 2 features -> VPU broadcast FMA, no MXU.
    h = jnp.maximum(lat * lw1_ref[0:1, :] + lon * lw1_ref[1:2, :] + lb1_ref[...],
                    0.0)
    f = jnp.dot(h.astype(jnp.bfloat16), lw2_ref[...],
                preferred_element_type=jnp.float32) + lb2_ref[...]
    inv = lax.rsqrt(jnp.maximum(jnp.sum(f * f, axis=1, keepdims=True), 1e-24))
    loc_norm = (f * inv).astype(jnp.bfloat16)
    # logits tile = (scaled, normalized image features) @ loc_norm.T
    # dot_general contracts the feature dims directly (no transposed copy).
    out_ref[...] = lax.dot_general(
        img_feat_ref[...], loc_norm,
        dimension_numbers=(((1,), (1,)), ((), ())),
        preferred_element_type=jnp.float32)


def geoclip_forward(image, location, params):
    """image: (n, 3, H, W) float32 NCHW; location: (m, 2) float32."""
    n = image.shape[0]
    m = location.shape[0]
    n_pad = _round_up(max(n, SUBLANE), SUBLANE)
    m_pad = _round_up(max(m, TILE_M), TILE_M)
    n_tiles = m_pad // TILE_M

    # glue: flatten NCHW -> (n, 768) once as bf16 (CLIP-backbone stand-in),
    # pad batch / gallery dims.
    img_flat = image.reshape(n, -1).astype(jnp.bfloat16)
    img_flat = jnp.pad(img_flat, ((0, n_pad - n), (0, 0)))
    loc_pad = jnp.pad(location.astype(jnp.float32), ((0, m_pad - m), (0, 0)))

    vmem = pltpu.MemorySpace.VMEM
    smem = pltpu.MemorySpace.SMEM

    # ---- prologue pallas_call: runs once, outputs bf16 image features -------
    img_feat = pl.pallas_call(
        _image_encoder_kernel,
        out_shape=jax.ShapeDtypeStruct((n_pad, D_MODEL), jnp.bfloat16),
        in_specs=[pl.BlockSpec(memory_space=vmem)] * 5
                 + [pl.BlockSpec(memory_space=smem)],
        out_specs=pl.BlockSpec(memory_space=vmem),
    )(img_flat, params["iw1"], params["ib1"], params["iw2"], params["ib2"],
      params["logit_scale"])

    # constant-index inputs: single-buffered (block index never changes, so the
    # pipeliner never re-DMAs; Buffered(1) also drops the dead second buffer).
    def const_spec(shape):
        return pl.BlockSpec(shape, lambda j: (0, 0),
                            pipeline_mode=pl.Buffered(1))

    grid_spec = pltpu.PrefetchScalarGridSpec(
        num_scalar_prefetch=0,
        grid=(n_tiles,),
        in_specs=[
            const_spec((n_pad, D_MODEL)),                  # scaled img feats (bf16)
            pl.BlockSpec((TILE_M, 2), lambda j: (j, 0)),   # per-tile gallery coords
            const_spec((2, LOC_HID)),                      # lw1 (f32, VPU path)
            const_spec((1, LOC_HID)),                      # lb1 (f32)
            const_spec((LOC_HID, D_MODEL)),                # lw2 (bf16, MXU)
            const_spec((1, D_MODEL)),                      # lb2 (f32)
        ],
        out_specs=pl.BlockSpec((n_pad, TILE_M), lambda j: (0, j)),
    )

    out = pl.pallas_call(
        _gallery_kernel,
        out_shape=jax.ShapeDtypeStruct((n_pad, m_pad), jnp.float32),
        grid_spec=grid_spec,
        # gallery tiles are fully independent -> megacore-shardable on v7x.
        compiler_params=pltpu.CompilerParams(
            dimension_semantics=("parallel",)),
    )(img_feat, loc_pad,
      params["lw1"], params["lb1"], params["lw2"], params["lb2"])

    return out[:n, :m]


def init_params(key):
    ks = jax.random.split(key, 4)

    def lin(k, fan_in, fan_out, dtype):
        w = jax.random.normal(k, (fan_in, fan_out), jnp.float32) / np.sqrt(fan_in)
        return w.astype(dtype)

    return {
        # image encoder MLP head: 768 -> 768 -> 512 (bf16 weights, f32 accum)
        "iw1": lin(ks[0], IMG_IN, IMG_IN, jnp.bfloat16),
        "ib1": jnp.zeros((1, IMG_IN), jnp.float32),
        "iw2": lin(ks[1], IMG_IN, D_MODEL, jnp.bfloat16),
        "ib2": jnp.zeros((1, D_MODEL), jnp.float32),
        # location encoder: 2 -> 256 (VPU, f32) -> 512 (MXU, bf16)
        "lw1": lin(ks[2], 2, LOC_HID, jnp.float32),
        "lb1": jnp.zeros((1, LOC_HID), jnp.float32),
        "lw2": lin(ks[3], LOC_HID, D_MODEL, jnp.bfloat16),
        "lb2": jnp.zeros((1, D_MODEL), jnp.float32),
        # logit_scale = log(1/0.07), exp'd once in the prologue (SMEM scalar)
        "logit_scale": jnp.full((1, 1), np.log(1.0 / 0.07), jnp.float32),
    }


if __name__ == "__main__":
    key = jax.random.PRNGKey(0)
    k_img, k_lat, k_lon, k_par = jax.random.split(key, 4)

    image = jax.random.normal(k_img, (N_IMG, C, H, W), jnp.float32)
    # GPS-like coordinates: lat in [-90, 90], lon in [-180, 180]
    location = jnp.concatenate(
        [jax.random.uniform(k_lat, (M_LOC, 1), minval=-90.0, maxval=90.0),
         jax.random.uniform(k_lon, (M_LOC, 1), minval=-180.0, maxval=180.0)],
        axis=1).astype(jnp.float32)

    params = init_params(k_par)

    logits_per_image = jax.jit(geoclip_forward)(image, location, params)
    jax.block_until_ready(logits_per_image)

    assert logits_per_image.shape == (N_IMG, M_LOC)
    assert logits_per_image.dtype == jnp.float32
    assert bool(jnp.all(jnp.isfinite(logits_per_image)))
    print("KERNEL_OK")
</pallas_src>

<mosaic_0001>
module attributes {stable_mosaic.version = 11 : i64} {
  func.func @_image_encoder_kernel(%arg0: memref<8x768xbf16, #tpu.memory_space<vmem>>, %arg1: memref<768x768xbf16, #tpu.memory_space<vmem>>, %arg2: memref<1x768xf32, #tpu.memory_space<vmem>>, %arg3: memref<768x512xbf16, #tpu.memory_space<vmem>>, %arg4: memref<1x512xf32, #tpu.memory_space<vmem>>, %arg5: memref<1x1xf32, #tpu.memory_space<smem>>, %arg6: memref<8x512xbf16, #tpu.memory_space<vmem>>) attributes {dimension_semantics = [], scalar_prefetch = 0 : i64, scratch_operands = 0 : i64, tpu.core_type = #tpu.core_type<tc>} {
    %c0 = arith.constant 0 : index
    %c0_0 = arith.constant 0 : index
    %0 = vector.load %arg0[%c0, %c0_0] : memref<8x768xbf16, #tpu.memory_space<vmem>>, vector<8x768xbf16>
    %c0_1 = arith.constant 0 : index
    %c0_2 = arith.constant 0 : index
    %1 = vector.load %arg1[%c0_1, %c0_2] : memref<768x768xbf16, #tpu.memory_space<vmem>>, vector<768x768xbf16>
    %cst = arith.constant dense<0.000000e+00> : vector<8x768xf32>
    %2 = tpu.matmul %0, %1, %cst {dimension_numbers = #tpu.dot_dimension_numbers<[1], [0], [0], [1], [0, 0, 1, 1], [], []>} : vector<8x768xbf16>, vector<768x768xbf16>, vector<8x768xf32> -> vector<8x768xf32>
    %c0_3 = arith.constant 0 : index
    %c0_4 = arith.constant 0 : index
    %3 = vector.load %arg2[%c0_3, %c0_4] : memref<1x768xf32, #tpu.memory_space<vmem>>, vector<1x768xf32>
    %4 = vector.broadcast %3 : vector<1x768xf32> to vector<8x768xf32>
    %5 = arith.addf %2, %4 : vector<8x768xf32>
    %cst_5 = arith.constant 0.000000e+00 : f32
    %6 = vector.broadcast %cst_5 : f32 to vector<8x768xf32>
    %7 = arith.maximumf %5, %6 : vector<8x768xf32>
    %8 = arith.truncf %7 : vector<8x768xf32> to vector<8x768xbf16>
    %c0_6 = arith.constant 0 : index
    %c0_7 = arith.constant 0 : index
    %9 = vector.load %arg3[%c0_6, %c0_7] : memref<768x512xbf16, #tpu.memory_space<vmem>>, vector<768x512xbf16>
    %cst_8 = arith.constant dense<0.000000e+00> : vector<8x512xf32>
    %10 = tpu.matmul %8, %9, %cst_8 {dimension_numbers = #tpu.dot_dimension_numbers<[1], [0], [0], [1], [0, 0, 1, 1], [], []>} : vector<8x768xbf16>, vector<768x512xbf16>, vector<8x512xf32> -> vector<8x512xf32>
    %c0_9 = arith.constant 0 : index
    %c0_10 = arith.constant 0 : index
    %11 = vector.load %arg4[%c0_9, %c0_10] : memref<1x512xf32, #tpu.memory_space<vmem>>, vector<1x512xf32>
    %12 = vector.broadcast %11 : vector<1x512xf32> to vector<8x512xf32>
    %13 = arith.addf %10, %12 : vector<8x512xf32>
    %14 = arith.mulf %13, %13 : vector<8x512xf32>
    %cst_11 = arith.constant dense<0.000000e+00> : vector<8xf32>
    %15 = vector.multi_reduction <add>, %14, %cst_11 [1] : vector<8x512xf32> to vector<8xf32>
    %16 = vector.shape_cast %15 : vector<8xf32> to vector<8x1xf32>
    %cst_12 = arith.constant 1.000000e-24 : f32
    %17 = vector.broadcast %cst_12 : f32 to vector<8x1xf32>
    %18 = arith.maximumf %16, %17 : vector<8x1xf32>
    %19 = math.rsqrt %18 : vector<8x1xf32>
    %c0_13 = arith.constant 0 : index
    %c0_14 = arith.constant 0 : index
    %20 = memref.load %arg5[%c0_13, %c0_14] : memref<1x1xf32, #tpu.memory_space<smem>>
    %21 = math.exp %20 : f32
    %22 = vector.broadcast %19 : vector<8x1xf32> to vector<8x512xf32>
    %23 = arith.mulf %13, %22 : vector<8x512xf32>
    %24 = vector.broadcast %21 : f32 to vector<8x512xf32>
    %25 = arith.mulf %23, %24 : vector<8x512xf32>
    %26 = arith.truncf %25 : vector<8x512xf32> to vector<8x512xbf16>
    %c0_15 = arith.constant 0 : index
    %c0_16 = arith.constant 0 : index
    %27 = vector.load %arg6[%c0_15, %c0_16] : memref<8x512xbf16, #tpu.memory_space<vmem>>, vector<8x512xbf16>
    tpu.vector_store %arg6[%c0_15, %c0_16], %26 {strides = array<i32>} : memref<8x512xbf16, #tpu.memory_space<vmem>>, vector<8x512xbf16>,
    return
  }
}

module attributes {stable_mosaic.version = 11 : i64} {
  func.func @_gallery_kernel(%arg0: i32, %arg1: memref<8x512xbf16, #tpu.memory_space<vmem>>, %arg2: memref<256x2xf32, #tpu.memory_space<vmem>>, %arg3: memref<2x256xf32, #tpu.memory_space<vmem>>, %arg4: memref<1x256xf32, #tpu.memory_space<vmem>>, %arg5: memref<256x512xbf16, #tpu.memory_space<vmem>>, %arg6: memref<1x512xf32, #tpu.memory_space<vmem>>, %arg7: memref<8x256xf32, #tpu.memory_space<vmem>>) attributes {dimension_semantics = [#tpu.dimension_semantics<parallel>], iteration_bounds = array<i64: 2>, scalar_prefetch = 0 : i64, scratch_operands = 0 : i64, tpu.core_type = #tpu.core_type<tc>, window_params = [{pipeline_mode = #tpu.pipeline_mode<synchronous>, transform_indices = @transform_0, window_bounds = array<i64: 8, 512>}, {transform_indices = @transform_1, window_bounds = array<i64: 256, 2>}, {pipeline_mode = #tpu.pipeline_mode<synchronous>, transform_indices = @transform_2, window_bounds = array<i64: 2, 256>}, {pipeline_mode = #tpu.pipeline_mode<synchronous>, transform_indices = @transform_3, window_bounds = array<i64: 1, 256>}, {pipeline_mode = #tpu.pipeline_mode<synchronous>, transform_indices = @transform_4, window_bounds = array<i64: 256, 512>}, {pipeline_mode = #tpu.pipeline_mode<synchronous>, transform_indices = @transform_5, window_bounds = array<i64: 1, 512>}, {transform_indices = @transform_6, window_bounds = array<i64: 8, 256>}]} {
    %c0 = arith.constant 0 : index
    %c0_0 = arith.constant 0 : index
    %0 = vector.load %arg2[%c0, %c0_0] : memref<256x2xf32, #tpu.memory_space<vmem>>, vector<256x2xf32>
    %1 = vector.extract_strided_slice %0 {offsets = [0, 0], sizes = [256, 1], strides = [1, 1]} : vector<256x2xf32> to vector<256x1xf32>
    %2 = vector.extract_strided_slice %0 {offsets = [0, 1], sizes = [256, 1], strides = [1, 1]} : vector<256x2xf32> to vector<256x1xf32>
    %c0_1 = arith.constant 0 : index
    %c0_2 = arith.constant 0 : index
    %3 = vector.load %arg3[%c0_1, %c0_2] : memref<2x256xf32, #tpu.memory_space<vmem>>, vector<1x256xf32>
    %4 = vector.broadcast %1 : vector<256x1xf32> to vector<256x256xf32>
    %5 = vector.broadcast %3 : vector<1x256xf32> to vector<256x256xf32>
    %6 = arith.mulf %4, %5 : vector<256x256xf32>
    %c1 = arith.constant 1 : index
    %c0_3 = arith.constant 0 : index
    %7 = vector.load %arg3[%c1, %c0_3] : memref<2x256xf32, #tpu.memory_space<vmem>>, vector<1x256xf32>
    %8 = vector.broadcast %2 : vector<256x1xf32> to vector<256x256xf32>
    %9 = vector.broadcast %7 : vector<1x256xf32> to vector<256x256xf32>
    %10 = arith.mulf %8, %9 : vector<256x256xf32>
    %11 = arith.addf %6, %10 : vector<256x256xf32>
    %c0_4 = arith.constant 0 : index
    %c0_5 = arith.constant 0 : index
    %12 = vector.load %arg4[%c0_4, %c0_5] : memref<1x256xf32, #tpu.memory_space<vmem>>, vector<1x256xf32>
    %13 = vector.broadcast %12 : vector<1x256xf32> to vector<256x256xf32>
    %14 = arith.addf %11, %13 : vector<256x256xf32>
    %cst = arith.constant 0.000000e+00 : f32
    %15 = vector.broadcast %cst : f32 to vector<256x256xf32>
    %16 = arith.maximumf %14, %15 : vector<256x256xf32>
    %17 = arith.truncf %16 : vector<256x256xf32> to vector<256x256xbf16>
    %c0_6 = arith.constant 0 : index
    %c0_7 = arith.constant 0 : index
    %18 = vector.load %arg5[%c0_6, %c0_7] : memref<256x512xbf16, #tpu.memory_space<vmem>>, vector<256x512xbf16>
    %cst_8 = arith.constant dense<0.000000e+00> : vector<256x512xf32>
    %19 = tpu.matmul %17, %18, %cst_8 {dimension_numbers = #tpu.dot_dimension_numbers<[1], [0], [0], [1], [0, 0, 1, 1], [], []>} : vector<256x256xbf16>, vector<256x512xbf16>, vector<256x512xf32> -> vector<256x512xf32>
    %c0_9 = arith.constant 0 : index
    %c0_10 = arith.constant 0 : index
    %20 = vector.load %arg6[%c0_9, %c0_10] : memref<1x512xf32, #tpu.memory_space<vmem>>, vector<1x512xf32>
    %21 = vector.broadcast %20 : vector<1x512xf32> to vector<256x512xf32>
    %22 = arith.addf %19, %21 : vector<256x512xf32>
    %23 = arith.mulf %22, %22 : vector<256x512xf32>
    %cst_11 = arith.constant dense<0.000000e+00> : vector<256xf32>
    %24 = vector.multi_reduction <add>, %23, %cst_11 [1] : vector<256x512xf32> to vector<256xf32>
    %25 = vector.shape_cast %24 : vector<256xf32> to vector<256x1xf32>
    %cst_12 = arith.constant 1.000000e-24 : f32
    %26 = vector.broadcast %cst_12 : f32 to vector<256x1xf32>
    %27 = arith.maximumf %25, %26 : vector<256x1xf32>
    %28 = math.rsqrt %27 : vector<256x1xf32>
    %29 = vector.broadcast %28 : vector<256x1xf32> to vector<256x512xf32>
    %30 = arith.mulf %22, %29 : vector<256x512xf32>
    %31 = arith.truncf %30 : vector<256x512xf32> to vector<256x512xbf16>
    %c0_13 = arith.constant 0 : index
    %c0_14 = arith.constant 0 : index
    %32 = vector.load %arg1[%c0_13, %c0_14] : memref<8x512xbf16, #tpu.memory_space<vmem>>, vector<8x512xbf16>
    %cst_15 = arith.constant dense<0.000000e+00> : vector<8x256xf32>
    %33 = tpu.matmul %32, %31, %cst_15 {dimension_numbers = #tpu.dot_dimension_numbers<[1], [1], [0], [0], [0, 0, 1, 0], [], []>} : vector<8x512xbf16>, vector<256x512xbf16>, vector<8x256xf32> -> vector<8x256xf32>
    %c0_16 = arith.constant 0 : index
    %c0_17 = arith.constant 0 : index
    %34 = vector.load %arg7[%c0_16, %c0_17] : memref<8x256xf32, #tpu.memory_space<vmem>>, vector<8x256xf32>
    tpu.vector_store %arg7[%c0_16, %c0_17], %33 {strides = array<i32>} : memref<8x256xf32, #tpu.memory_space<vmem>>, vector<8x256xf32>,
    return
  }
  func.func @transform_0(%arg0: i32) -> (i32, i32) {
    %c0_i32 = arith.constant 0 : i32
    %c0_i32_0 = arith.constant 0 : i32
    %c0_i32_1 = arith.constant 0 : i32
    return %c0_i32, %c0_i32_0 : i32, i32
  }
  func.func @transform_1(%arg0: i32) -> (i32, i32) {
    %c0_i32 = arith.constant 0 : i32
    %c0_i32_0 = arith.constant 0 : i32
    return %arg0, %c0_i32 : i32, i32
  }
  func.func @transform_2(%arg0: i32) -> (i32, i32) {
    %c0_i32 = arith.constant 0 : i32
    %c0_i32_0 = arith.constant 0 : i32
    %c0_i32_1 = arith.constant 0 : i32
    return %c0_i32, %c0_i32_0 : i32, i32
  }
  func.func @transform_3(%arg0: i32) -> (i32, i32) {
    %c0_i32 = arith.constant 0 : i32
    %c0_i32_0 = arith.constant 0 : i32
    %c0_i32_1 = arith.constant 0 : i32
    return %c0_i32, %c0_i32_0 : i32, i32
  }
  func.func @transform_4(%arg0: i32) -> (i32, i32) {
    %c0_i32 = arith.constant 0 : i32
    %c0_i32_0 = arith.constant 0 : i32
    %c0_i32_1 = arith.constant 0 : i32
    return %c0_i32, %c0_i32_0 : i32, i32
  }
  func.func @transform_5(%arg0: i32) -> (i32, i32) {
    %c0_i32 = arith.constant 0 : i32
    %c0_i32_0 = arith.constant 0 : i32
    %c0_i32_1 = arith.constant 0 : i32
    return %c0_i32, %c0_i32_0 : i32, i32
  }
  func.func @transform_6(%arg0: i32) -> (i32, i32) {
    %c0_i32 = arith.constant 0 : i32
    %c0_i32_0 = arith.constant 0 : i32
    return %c0_i32, %arg0 : i32, i32
  }
}

</mosaic_0001>

<llo_original>
// kernel: geoclip_forward.3
$region0: #{geoclip_forward.3}
  #allocation0 [shape = 'u32[]', space=smem, size = 0x4, offset = 0x4, fixed_abs, tag = 'smem constant byte address 0x4 - core index']
  #allocation1 [shape = 'u32[144,128]{1,0:T(1,128)}', space=vmem, size = 0x12000, scoped, tag = 'internal scratch']
  %s0 = inlined_call_operand.vmem [shape: bf16[8,512], index: 0, kind: input, shape index: {}]
  %s1 = inlined_call_operand.vmem [shape: f32[512,2], index: 1, kind: input, shape index: {}]
  %s2 = inlined_call_operand.vmem [shape: f32[2,256], index: 2, kind: input, shape index: {}]
  %s3 = inlined_call_operand.vmem [shape: f32[1,256], index: 3, kind: input, shape index: {}]
  %s4 = inlined_call_operand.vmem [shape: bf16[256,512], index: 4, kind: input, shape index: {}]
  %s5 = inlined_call_operand.vmem [shape: f32[1,512], index: 5, kind: input, shape index: {}]
  %s6 = inlined_call_operand.vmem [shape: f32[8,512], index: 6, kind: output, shape index: {}]
  %s7 = sld [smem:[#allocation0]]
  $region57: #{geoclip_forward.3} parent=0
    _
  %s9 = ssub.s32 1, %s7
  %s10 = scalar_select 0, %s9, %s7
  loop: start=0, step=1, limit=4
  $region2: #{geoclip_forward.3} parent=0 // loop_pre_header
    _
  $region3: #{geoclip_forward.3} parent=0 // loop_header
    %s12 = sphi 0, %s16
    %p13 = scmp.ge.s32.totalorder %s12, 4
    %s20 = sphi 0, %s20
    %s22 = sphi 0, %s20
    %s23 = sphi 0, %s22
    %s37 = sphi 0, %s23
    %s43 = sphi 0, %s45
    %s46 = sphi 0, %s43
    %s47 = sphi 0, %s46
    %s63 = sphi 0, %s47
    %s67 = sphi 0, %s67
    %s69 = sphi 0, %s67
    %s70 = sphi 0, %s69
    %s84 = sphi 0, %s70
    %s88 = sphi 0, %s88
    %s90 = sphi 0, %s88
    %s91 = sphi 0, %s90
    %s105 = sphi 0, %s91
    %s109 = sphi 0, %s109
    %s111 = sphi 0, %s109
    %s112 = sphi 0, %s111
    %s126 = sphi 0, %s112
    %s130 = sphi 0, %s130
    %s132 = sphi 0, %s130
    %s133 = sphi 0, %s132
    %s147 = sphi 0, %s133
    %s153 = sphi 0, %s155
    %s156 = sphi 0, %s153
    %s157 = sphi 0, %s156
    %s173 = sphi 0, %s157
  $region4: #{geoclip_forward.3} parent=0 // loop_header_branch
    %15 = sbr.rel (%p13) target = $region8
  $region5: #{geoclip_forward.3} parent=0 // loop_body
    %s17 = ssub.s32 %s12, 1
    %s18 = ssub.s32 %s12, 2
    %s19 = sadd.s32 %s12, 1
    %s21 = sadd.s32 %s20, 1
    %p24 = scmp.eq.s32.totalorder %s12, 1
    %p25 = scmp.ne.s32.totalorder %s20, %s22
    %p26 = scmp.eq.s32.totalorder %s12, 0
    %p27 = por %p25, %p26
    %p28 = scmp.ne.s32.totalorder %s20, %s22
    %p29 = scmp.eq.s32.totalorder %s17, 1
    %p30 = por %p28, %p29
    %p31 = scmp.ne.s32.totalorder %s22, %s23
    %p32 = scmp.eq.s32.totalorder %s17, 0
    %p33 = por %p31, %p32
    %p34 = scmp.ne.s32.totalorder %s22, %s23
    %p35 = scmp.eq.s32.totalorder %s18, 1
    %p36 = por %p34, %p35
    %p38 = scmp.ne.s32.totalorder %s23, %s37
    %p39 = scmp.eq.s32.totalorder %s18, 0
    %p40 = por %p38, %p39
    %s41 = ssub.s32 %s12, %s19
    %p42 = scmp.eq.s32.totalorder %s41, 0
    %s44 = sadd.s32 %s43, 1
    %s45 = scalar_select %p42, %s43, %s44
    %p48 = pneg %p42
    %p49 = scmp.eq.s32.totalorder %s12, 1
    %p50 = por %p48, %p49
    %p51 = scmp.ne.s32.totalorder %s43, %s46
    %p52 = scmp.eq.s32.totalorder %s12, 0
    %p53 = por %p51, %p52
    %p54 = scmp.ne.s32.totalorder %s43, %s46
    %p55 = scmp.eq.s32.totalorder %s17, 1
    %p56 = por %p54, %p55
    %p57 = scmp.ne.s32.totalorder %s46, %s47
    %p58 = scmp.eq.s32.totalorder %s17, 0
    %p59 = por %p57, %p58
    %p60 = scmp.ne.s32.totalorder %s46, %s47
    %p61 = scmp.eq.s32.totalorder %s18, 1
    %p62 = por %p60, %p61
    %p64 = scmp.ne.s32.totalorder %s47, %s63
    %p65 = scmp.eq.s32.totalorder %s18, 0
    %p66 = por %p64, %p65
    %s68 = sadd.s32 %s67, 1
    %p71 = scmp.eq.s32.totalorder %s12, 1
    %p72 = scmp.ne.s32.totalorder %s67, %s69
    %p73 = scmp.eq.s32.totalorder %s12, 0
    %p74 = por %p72, %p73
    %p75 = scmp.ne.s32.totalorder %s67, %s69
    %p76 = scmp.eq.s32.totalorder %s17, 1
    %p77 = por %p75, %p76
    %p78 = scmp.ne.s32.totalorder %s69, %s70
    %p79 = scmp.eq.s32.totalorder %s17, 0
    %p80 = por %p78, %p79
    %p81 = scmp.ne.s32.totalorder %s69, %s70
    %p82 = scmp.eq.s32.totalorder %s18, 1
    %p83 = por %p81, %p82
    %p85 = scmp.ne.s32.totalorder %s70, %s84
    %p86 = scmp.eq.s32.totalorder %s18, 0
    %p87 = por %p85, %p86
    %s89 = sadd.s32 %s88, 1
    %p92 = scmp.eq.s32.totalorder %s12, 1
    %p93 = scmp.ne.s32.totalorder %s88, %s90
    %p94 = scmp.eq.s32.totalorder %s12, 0
    %p95 = por %p93, %p94
    %p96 = scmp.ne.s32.totalorder %s88, %s90
    %p97 = scmp.eq.s32.totalorder %s17, 1
    %p98 = por %p96, %p97
    %p99 = scmp.ne.s32.totalorder %s90, %s91
    %p100 = scmp.eq.s32.totalorder %s17, 0
    %p101 = por %p99, %p100
    %p102 = scmp.ne.s32.totalorder %s90, %s91
    %p103 = scmp.eq.s32.totalorder %s18, 1
    %p104 = por %p102, %p103
    %p106 = scmp.ne.s32.totalorder %s91, %s105
    %p107 = scmp.eq.s32.totalorder %s18, 0
    %p108 = por %p106, %p107
    %s110 = sadd.s32 %s109, 1
    %p113 = scmp.eq.s32.totalorder %s12, 1
    %p114 = scmp.ne.s32.totalorder %s109, %s111
    %p115 = scmp.eq.s32.totalorder %s12, 0
    %p116 = por %p114, %p115
    %p117 = scmp.ne.s32.totalorder %s109, %s111
    %p118 = scmp.eq.s32.totalorder %s17, 1
    %p119 = por %p117, %p118
    %p120 = scmp.ne.s32.totalorder %s111, %s112
    %p121 = scmp.eq.s32.totalorder %s17, 0
    %p122 = por %p120, %p121
    %p123 = scmp.ne.s32.totalorder %s111, %s112
    %p124 = scmp.eq.s32.totalorder %s18, 1
    %p125 = por %p123, %p124
    %p127 = scmp.ne.s32.totalorder %s112, %s126
    %p128 = scmp.eq.s32.totalorder %s18, 0
    %p129 = por %p127, %p128
    %s131 = sadd.s32 %s130, 1
    %p134 = scmp.eq.s32.totalorder %s12, 1
    %p135 = scmp.ne.s32.totalorder %s130, %s132
    %p136 = scmp.eq.s32.totalorder %s12, 0
    %p137 = por %p135, %p136
    %p138 = scmp.ne.s32.totalorder %s130, %s132
    %p139 = scmp.eq.s32.totalorder %s17, 1
    %p140 = por %p138, %p139
    %p141 = scmp.ne.s32.totalorder %s132, %s133
    %p142 = scmp.eq.s32.totalorder %s17, 0
    %p143 = por %p141, %p142
    %p144 = scmp.ne.s32.totalorder %s132, %s133
    %p145 = scmp.eq.s32.totalorder %s18, 1
    %p146 = por %p144, %p145
    %p148 = scmp.ne.s32.totalorder %s133, %s147
    %p149 = scmp.eq.s32.totalorder %s18, 0
    %p150 = por %p148, %p149
    %s151 = ssub.s32 %s12, %s19
    %p152 = scmp.eq.s32.totalorder %s151, 0
    %s154 = sadd.s32 %s153, 1
    %s155 = scalar_select %p152, %s153, %s154
    %p158 = pneg %p152
    %p159 = scmp.eq.s32.totalorder %s12, 1
    %p160 = por %p158, %p159
    %p161 = scmp.ne.s32.totalorder %s153, %s156
    %p162 = scmp.eq.s32.totalorder %s12, 0
    %p163 = por %p161, %p162
    %p164 = scmp.ne.s32.totalorder %s153, %s156
    %p165 = scmp.eq.s32.totalorder %s17, 1
    %p166 = por %p164, %p165
    %p167 = scmp.ne.s32.totalorder %s156, %s157
    %p168 = scmp.eq.s32.totalorder %s17, 0
    %p169 = por %p167, %p168
    %p170 = scmp.ne.s32.totalorder %s156, %s157
    %p171 = scmp.eq.s32.totalorder %s18, 1
    %p172 = por %p170, %p171
    %p174 = scmp.ne.s32.totalorder %s157, %s173
    %p175 = scmp.eq.s32.totalorder %s18, 0
    %p176 = por %p174, %p175
    %p177 = scmp.le.s32.totalorder 1, %s12
    %p178 = scmp.lt.s32.totalorder %s12, 3
    %p179 = pnand %p177, %p178
    %p180 = pneg %p179
    // Predicated region
    $region9: #{geoclip_forward.3} parent=5 // pred_check
      _
    $region10: #{geoclip_forward.3} parent=5 // pred_check_branch
      %182 = sbr.rel (%p179) target = $region12
    $region11: #{geoclip_forward.3} parent=5 // pred_region
      %s183 = ssub.s32 %s12, 1
      // Predicated region
      $region13: #{geoclip_forward.3} parent=11 // pred_check
        %p184 = pneg %p33
      $region14: #{geoclip_forward.3} parent=11 // pred_check_branch
        %186 = sbr.rel (%p184) target = $region16
      $region15: #{geoclip_forward.3} parent=11 // pred_region
        _
      $region16: #{geoclip_forward.3} parent=11 // pred_fallthru
        _
      // Predicated region
      $region17: #{geoclip_forward.3} parent=11 // pred_check
        %p187 = pneg %p80
      $region18: #{geoclip_forward.3} parent=11 // pred_check_branch
        %189 = sbr.rel (%p187) target = $region20
      $region19: #{geoclip_forward.3} parent=11 // pred_region
        _
      $region20: #{geoclip_forward.3} parent=11 // pred_fallthru
        _
      // Predicated region
      $region21: #{geoclip_forward.3} parent=11 // pred_check
        %p190 = pneg %p101
      $region22: #{geoclip_forward.3} parent=11 // pred_check_branch
        %192 = sbr.rel (%p190) target = $region24
      $region23: #{geoclip_forward.3} parent=11 // pred_region
        _
      $region24: #{geoclip_forward.3} parent=11 // pred_fallthru
        _
      // Predicated region
      $region25: #{geoclip_forward.3} parent=11 // pred_check
        %p193 = pneg %p122
      $region26: #{geoclip_forward.3} parent=11 // pred_check_branch
        %195 = sbr.rel (%p193) target = $region28
      $region27: #{geoclip_forward.3} parent=11 // pred_region
        _
      $region28: #{geoclip_forward.3} parent=11 // pred_fallthru
        _
      // Predicated region
      $region29: #{geoclip_forward.3} parent=11 // pred_check
        %p196 = pneg %p143
      $region30: #{geoclip_forward.3} parent=11 // pred_check_branch
        %198 = sbr.rel (%p196) target = $region32
      $region31: #{geoclip_forward.3} parent=11 // pred_region
        _
      $region32: #{geoclip_forward.3} parent=11 // pred_fallthru
        _
    $region12: #{geoclip_forward.3} parent=5 // pred_fallthru
      _
    %p199 = scmp.lt.s32.totalorder %s12, 2
    // Predicated region
    $region33: #{geoclip_forward.3} parent=5 // pred_check
      %p200 = pneg %p199
    $region34: #{geoclip_forward.3} parent=5 // pred_check_branch
      %202 = sbr.rel (%p200) target = $region36
    $region35: #{geoclip_forward.3} parent=5 // pred_region
      // Predicated region
      $region37: #{geoclip_forward.3} parent=35 // pred_check
        %p203 = pneg %p53
      $region38: #{geoclip_forward.3} parent=35 // pred_check_branch
        %205 = sbr.rel (%p203) target = $region40
      $region39: #{geoclip_forward.3} parent=35 // pred_region
        %s206 = smul.u32 32, %s12
        %p207 = scmp.lt.s32.totalorder %s206, 63
        %s208 = scalar_select %p207, %s206, 63
        %s209 = smul.addr %s208, 8
        %s210 = scalar_lea.vmem %s1, %s209
        %s211 = smul.u32 32, %s12
      $region40: #{geoclip_forward.3} parent=35 // pred_fallthru
        _
    $region36: #{geoclip_forward.3} parent=5 // pred_fallthru
      _
    %p212 = scmp.le.s32.totalorder 1, %s12
    %p213 = scmp.lt.s32.totalorder %s12, 3
    %p214 = pnand %p212, %p213
    %p215 = pneg %p214
    // Predicated region
    $region41: #{geoclip_forward.3} parent=5 // pred_check
      _
    $region42: #{geoclip_forward.3} parent=5 // pred_check_branch
      %217 = sbr.rel (%p214) target = $region44
    $region43: #{geoclip_forward.3} parent=5 // pred_region
      %s218 = ssub.s32 %s12, 1
      %p219 = pneg %p33
      %p220 = pneg %p30
      %s221 = smul.u32 32, %s17
      %p222 = scmp.lt.s32.totalorder %s221, 63
      %s223 = scalar_select %p222, %s221, 63
      %s224 = smul.addr %s223, 8
      %s225 = scalar_lea.vmem %s1, %s224
      %p226 = pneg %p59
      %p227 = pneg %p56
      %p228 = pneg %p80
      %p229 = pneg %p77
      %p230 = pneg %p101
      %p231 = pneg %p98
      %p232 = pneg %p122
      %p233 = pneg %p119
      %p234 = pneg %p143
      %p235 = pneg %p140
      %p236 = pneg %p169
      %p237 = pneg %p166
      %s238 = smul.u32 2, %s17
      %p239 = scmp.lt.s32.totalorder %s238, 3
      %s240 = scalar_select %p239, %s238, 3
      %s241 = smul.addr %s240, 8
      %s242 = scalar_lea.vmem %s6, %s241
      %s243 = smul.u32 32, %s17
      %p244 = scmp.lt.s32.totalorder %s243, 63
      %s245 = scalar_select %p244, %s243, 63
      %s246 = smul.addr %s245, 8
      %s247 = scalar_lea.vmem %s1, %s246
      %s248 = smul.u32 32, %s17
      %s249 = smul.u32 2, %s17
      %p250 = scmp.lt.s32.totalorder %s249, 3
      %s251 = scalar_select %p250, %s249, 3
      %s252 = smul.addr %s251, 8
      %s253 = scalar_lea.vmem %s6, %s252
      %s254 = smul.u32 2, %s17
      %v255 = vld [vmem:[%s247] sm:$0xff]
      %v256 = vld [vmem:[%s247 + $0x8] sm:$0xff]
      %v257 = vld [vmem:[%s247 + $0x10] sm:$0xff]
      %v258 = vld [vmem:[%s247 + $0x18] sm:$0xff]
      %v259 = vld [vmem:[%s247 + $0x20] sm:$0xff]
      %v260 = vld [vmem:[%s247 + $0x28] sm:$0xff]
      %v261 = vld [vmem:[%s247 + $0x30] sm:$0xff]
      %v262 = vld [vmem:[%s247 + $0x38] sm:$0xff]
      %v263 = vld [vmem:[%s247 + $0x40] sm:$0xff]
      %v264 = vld [vmem:[%s247 + $0x48] sm:$0xff]
      %v265 = vld [vmem:[%s247 + $0x50] sm:$0xff]
      %v266 = vld [vmem:[%s247 + $0x58] sm:$0xff]
      %v267 = vld [vmem:[%s247 + $0x60] sm:$0xff]
      %v268 = vld [vmem:[%s247 + $0x68] sm:$0xff]
      %v269 = vld [vmem:[%s247 + $0x70] sm:$0xff]
      %v270 = vld [vmem:[%s247 + $0x78] sm:$0xff]
      %v271 = vld [vmem:[%s247 + $0x80] sm:$0xff]
      %v272 = vld [vmem:[%s247 + $0x88] sm:$0xff]
      %v273 = vld [vmem:[%s247 + $0x90] sm:$0xff]
      %v274 = vld [vmem:[%s247 + $0x98] sm:$0xff]
      %v275 = vld [vmem:[%s247 + $0xa0] sm:$0xff]
      %v276 = vld [vmem:[%s247 + $0xa8] sm:$0xff]
      %v277 = vld [vmem:[%s247 + $0xb0] sm:$0xff]
      %v278 = vld [vmem:[%s247 + $0xb8] sm:$0xff]
      %v279 = vld [vmem:[%s247 + $0xc0] sm:$0xff]
      %v280 = vld [vmem:[%s247 + $0xc8] sm:$0xff]
      %v281 = vld [vmem:[%s247 + $0xd0] sm:$0xff]
      %v282 = vld [vmem:[%s247 + $0xd8] sm:$0xff]
      %v283 = vld [vmem:[%s247 + $0xe0] sm:$0xff]
      %v284 = vld [vmem:[%s247 + $0xe8] sm:$0xff]
      %v285 = vld [vmem:[%s247 + $0xf0] sm:$0xff]
      %v286 = vld [vmem:[%s247 + $0xf8] sm:$0xff]
      %v287 = vld [vmem:[%s2] ss:$2 sm:$0x3]
      %289 = vset.pattern.permute.xlu0 0
      %290 = vperm.xlu0 %289, %v255
      %v291 = vpop.permute.xlu0 %290
      %294 = vset.pattern.permute.xlu0 0
      %295 = vperm.xlu0 %294, %v256
      %v296 = vpop.permute.xlu0 %295
      %299 = vset.pattern.permute.xlu0 0
      %300 = vperm.xlu0 %299, %v257
      %v301 = vpop.permute.xlu0 %300
      %304 = vset.pattern.permute.xlu0 0
      %305 = vperm.xlu0 %304, %v258
      %v306 = vpop.permute.xlu0 %305
      %309 = vset.pattern.permute.xlu0 0
      %310 = vperm.xlu0 %309, %v259
      %v311 = vpop.permute.xlu0 %310
      %314 = vset.pattern.permute.xlu0 0
      %315 = vperm.xlu0 %314, %v260
      %v316 = vpop.permute.xlu0 %315
      %319 = vset.pattern.permute.xlu0 0
      %320 = vperm.xlu0 %319, %v261
      %v321 = vpop.permute.xlu0 %320
      %324 = vset.pattern.permute.xlu0 0
      %325 = vperm.xlu0 %324, %v262
      %v326 = vpop.permute.xlu0 %325
      %329 = vset.pattern.permute.xlu0 0
      %330 = vperm.xlu0 %329, %v263
      %v331 = vpop.permute.xlu0 %330
      %334 = vset.pattern.permute.xlu0 0
      %335 = vperm.xlu0 %334, %v264
      %v336 = vpop.permute.xlu0 %335
      %339 = vset.pattern.permute.xlu0 0
      %340 = vperm.xlu0 %339, %v265
      %v341 = vpop.permute.xlu0 %340
      %344 = vset.pattern.permute.xlu0 0
      %345 = vperm.xlu0 %344, %v266
      %v346 = vpop.permute.xlu0 %345
      %349 = vset.pattern.permute.xlu0 0
      %350 = vperm.xlu0 %349, %v267
      %v351 = vpop.permute.xlu0 %350
      %354 = vset.pattern.permute.xlu0 0
      %355 = vperm.xlu0 %354, %v268
      %v356 = vpop.permute.xlu0 %355
      %359 = vset.pattern.permute.xlu0 0
      %360 = vperm.xlu0 %359, %v269
      %v361 = vpop.permute.xlu0 %360
      %364 = vset.pattern.permute.xlu0 0
      %365 = vperm.xlu0 %364, %v270
      %v366 = vpop.permute.xlu0 %365
      %369 = vset.pattern.permute.xlu0 0
      %370 = vperm.xlu0 %369, %v271
      %v371 = vpop.permute.xlu0 %370
      %374 = vset.pattern.permute.xlu0 0
      %375 = vperm.xlu0 %374, %v272
      %v376 = vpop.permute.xlu0 %375
      %379 = vset.pattern.permute.xlu0 0
      %380 = vperm.xlu0 %379, %v273
      %v381 = vpop.permute.xlu0 %380
      %384 = vset.pattern.permute.xlu0 0
      %385 = vperm.xlu0 %384, %v274
      %v386 = vpop.permute.xlu0 %385
      %389 = vset.pattern.permute.xlu0 0
      %390 = vperm.xlu0 %389, %v275
      %v391 = vpop.permute.xlu0 %390
      %394 = vset.pattern.permute.xlu0 0
      %395 = vperm.xlu0 %394, %v276
      %v396 = vpop.permute.xlu0 %395
      %399 = vset.pattern.permute.xlu0 0
      %400 = vperm.xlu0 %399, %v277
      %v401 = vpop.permute.xlu0 %400
      %404 = vset.pattern.permute.xlu0 0
      %405 = vperm.xlu0 %404, %v278
      %v406 = vpop.permute.xlu0 %405
      %409 = vset.pattern.permute.xlu0 0
      %410 = vperm.xlu0 %409, %v279
      %v411 = vpop.permute.xlu0 %410
      %414 = vset.pattern.permute.xlu0 0
      %415 = vperm.xlu0 %414, %v280
      %v416 = vpop.permute.xlu0 %415
      %419 = vset.pattern.permute.xlu0 0
      %420 = vperm.xlu0 %419, %v281
      %v421 = vpop.permute.xlu0 %420
      %424 = vset.pattern.permute.xlu0 0
      %425 = vperm.xlu0 %424, %v282
      %v426 = vpop.permute.xlu0 %425
      %429 = vset.pattern.permute.xlu0 0
      %430 = vperm.xlu0 %429, %v283
      %v431 = vpop.permute.xlu0 %430
      %434 = vset.pattern.permute.xlu0 0
      %435 = vperm.xlu0 %434, %v284
      %v436 = vpop.permute.xlu0 %435
      %439 = vset.pattern.permute.xlu0 0
      %440 = vperm.xlu0 %439, %v285
      %v441 = vpop.permute.xlu0 %440
      %444 = vset.pattern.permute.xlu0 0
      %445 = vperm.xlu0 %444, %v286
      %v446 = vpop.permute.xlu0 %445
      %v449 = vlaneseq
      %v450 = vshrl.u32 %v449, 7
      %v451 = vsub.s32 0, %v450
      %v452 = vrot.slane %v287, %v451
      %v453 = vlaneseq
      %v454 = vshrl.u32 %v453, 7
      %v455 = vsub.s32 1, %v454
      %v456 = vrot.slane %v287, %v455
      %v459 = vmul.f32 %v291, %v452
      %v460 = vmul.f32 %v291, %v456
      %v461 = vmul.f32 %v296, %v452
      %v462 = vmul.f32 %v296, %v456
      %v463 = vmul.f32 %v301, %v452
      %v464 = vmul.f32 %v301, %v456
      %v465 = vmul.f32 %v306, %v452
      %v466 = vmul.f32 %v306, %v456
      %v467 = vmul.f32 %v311, %v452
      %v468 = vmul.f32 %v311, %v456
      %v469 = vmul.f32 %v316, %v452
      %v470 = vmul.f32 %v316, %v456
      %v471 = vmul.f32 %v321, %v452
      %v472 = vmul.f32 %v321, %v456
      %v473 = vmul.f32 %v326, %v452
      %v474 = vmul.f32 %v326, %v456
      %v475 = vmul.f32 %v331, %v452
      %v476 = vmul.f32 %v331, %v456
      %v477 = vmul.f32 %v336, %v452
      %v478 = vmul.f32 %v336, %v456
      %v479 = vmul.f32 %v341, %v452
      %v480 = vmul.f32 %v341, %v456
      %v481 = vmul.f32 %v346, %v452
      %v482 = vmul.f32 %v346, %v456
      %v483 = vmul.f32 %v351, %v452
      %v484 = vmul.f32 %v351, %v456
      %v485 = vmul.f32 %v356, %v452
      %v486 = vmul.f32 %v356, %v456
      %v487 = vmul.f32 %v361, %v452
      %v488 = vmul.f32 %v361, %v456
      %v489 = vmul.f32 %v366, %v452
      %v490 = vmul.f32 %v366, %v456
      %v491 = vmul.f32 %v371, %v452
      %v492 = vmul.f32 %v371, %v456
      %v493 = vmul.f32 %v376, %v452
      %v494 = vmul.f32 %v376, %v456
      %v495 = vmul.f32 %v381, %v452
      %v496 = vmul.f32 %v381, %v456
      %v497 = vmul.f32 %v386, %v452
      %v498 = vmul.f32 %v386, %v456
      %v499 = vmul.f32 %v391, %v452
      %v500 = vmul.f32 %v391, %v456
      %v501 = vmul.f32 %v396, %v452
      %v502 = vmul.f32 %v396, %v456
      %v503 = vmul.f32 %v401, %v452
      %v504 = vmul.f32 %v401, %v456
      %v505 = vmul.f32 %v406, %v452
      %v506 = vmul.f32 %v406, %v456
      %v507 = vmul.f32 %v411, %v452
      %v508 = vmul.f32 %v411, %v456
      %v509 = vmul.f32 %v416, %v452
      %v510 = vmul.f32 %v416, %v456
      %v511 = vmul.f32 %v421, %v452
      %v512 = vmul.f32 %v421, %v456
      %v513 = vmul.f32 %v426, %v452
      %v514 = vmul.f32 %v426, %v456
      %v515 = vmul.f32 %v431, %v452
      %v516 = vmul.f32 %v431, %v456
      %v517 = vmul.f32 %v436, %v452
      %v518 = vmul.f32 %v436, %v456
      %v519 = vmul.f32 %v441, %v452
      %v520 = vmul.f32 %v441, %v456
      %v521 = vmul.f32 %v446, %v452
      %v522 = vmul.f32 %v446, %v456
      %s523 = scalar_lea.vmem %s2, 1
      %v524 = vld [vmem:[%s523] ss:$2 sm:$0x3]
      %525 = vset.pattern.permute.xlu0 1
      %526 = vperm.xlu0 %525, %v255
      %v527 = vpop.permute.xlu0 %526
      %529 = vset.pattern.permute.xlu0 1
      %530 = vperm.xlu0 %529, %v256
      %v531 = vpop.permute.xlu0 %530
      %533 = vset.pattern.permute.xlu0 1
      %534 = vperm.xlu0 %533, %v257
      %v535 = vpop.permute.xlu0 %534
      %537 = vset.pattern.permute.xlu0 1
      %538 = vperm.xlu0 %537, %v258
      %v539 = vpop.permute.xlu0 %538
      %541 = vset.pattern.permute.xlu0 1
      %542 = vperm.xlu0 %541, %v259
      %v543 = vpop.permute.xlu0 %542
      %545 = vset.pattern.permute.xlu0 1
      %546 = vperm.xlu0 %545, %v260
      %v547 = vpop.permute.xlu0 %546
      %549 = vset.pattern.permute.xlu0 1
      %550 = vperm.xlu0 %549, %v261
      %v551 = vpop.permute.xlu0 %550
      %553 = vset.pattern.permute.xlu0 1
      %554 = vperm.xlu0 %553, %v262
      %v555 = vpop.permute.xlu0 %554
      %557 = vset.pattern.permute.xlu0 1
      %558 = vperm.xlu0 %557, %v263
      %v559 = vpop.permute.xlu0 %558
      %561 = vset.pattern.permute.xlu0 1
      %562 = vperm.xlu0 %561, %v264
      %v563 = vpop.permute.xlu0 %562
      %565 = vset.pattern.permute.xlu0 1
      %566 = vperm.xlu0 %565, %v265
      %v567 = vpop.permute.xlu0 %566
      %569 = vset.pattern.permute.xlu0 1
      %570 = vperm.xlu0 %569, %v266
      %v571 = vpop.permute.xlu0 %570
      %573 = vset.pattern.permute.xlu0 1
      %574 = vperm.xlu0 %573, %v267
      %v575 = vpop.permute.xlu0 %574
      %577 = vset.pattern.permute.xlu0 1
      %578 = vperm.xlu0 %577, %v268
      %v579 = vpop.permute.xlu0 %578
      %581 = vset.pattern.permute.xlu0 1
      %582 = vperm.xlu0 %581, %v269
      %v583 = vpop.permute.xlu0 %582
      %585 = vset.pattern.permute.xlu0 1
      %586 = vperm.xlu0 %585, %v270
      %v587 = vpop.permute.xlu0 %586
      %589 = vset.pattern.permute.xlu0 1
      %590 = vperm.xlu0 %589, %v271
      %v591 = vpop.permute.xlu0 %590
      %593 = vset.pattern.permute.xlu0 1
      %594 = vperm.xlu0 %593, %v272
      %v595 = vpop.permute.xlu0 %594
      %597 = vset.pattern.permute.xlu0 1
      %598 = vperm.xlu0 %597, %v273
      %v599 = vpop.permute.xlu0 %598
      %601 = vset.pattern.permute.xlu0 1
      %602 = vperm.xlu0 %601, %v274
      %v603 = vpop.permute.xlu0 %602
      %605 = vset.pattern.permute.xlu0 1
      %606 = vperm.xlu0 %605, %v275
      %v607 = vpop.permute.xlu0 %606
      %609 = vset.pattern.permute.xlu0 1
      %610 = vperm.xlu0 %609, %v276
      %v611 = vpop.permute.xlu0 %610
      %613 = vset.pattern.permute.xlu0 1
      %614 = vperm.xlu0 %613, %v277
      %v615 = vpop.permute.xlu0 %614
      %617 = vset.pattern.permute.xlu0 1
      %618 = vperm.xlu0 %617, %v278
      %v619 = vpop.permute.xlu0 %618
      %621 = vset.pattern.permute.xlu0 1
      %622 = vperm.xlu0 %621, %v279
      %v623 = vpop.permute.xlu0 %622
      %625 = vset.pattern.permute.xlu0 1
      %626 = vperm.xlu0 %625, %v280
      %v627 = vpop.permute.xlu0 %626
      %629 = vset.pattern.permute.xlu0 1
      %630 = vperm.xlu0 %629, %v281
      %v631 = vpop.permute.xlu0 %630
      %633 = vset.pattern.permute.xlu0 1
      %634 = vperm.xlu0 %633, %v282
      %v635 = vpop.permute.xlu0 %634
      %637 = vset.pattern.permute.xlu0 1
      %638 = vperm.xlu0 %637, %v283
      %v639 = vpop.permute.xlu0 %638
      %641 = vset.pattern.permute.xlu0 1
      %642 = vperm.xlu0 %641, %v284
      %v643 = vpop.permute.xlu0 %642
      %645 = vset.pattern.permute.xlu0 1
      %646 = vperm.xlu0 %645, %v285
      %v647 = vpop.permute.xlu0 %646
      %649 = vset.pattern.permute.xlu0 1
      %650 = vperm.xlu0 %649, %v286
      %v651 = vpop.permute.xlu0 %650
      %v654 = vlaneseq
      %v655 = vshrl.u32 %v654, 7
      %v656 = vsub.s32 0, %v655
      %v657 = vrot.slane %v524, %v656
      %v658 = vlaneseq
      %v659 = vshrl.u32 %v658, 7
      %v660 = vsub.s32 1, %v659
      %v661 = vrot.slane %v524, %v660
      %v664 = vmul.f32 %v527, %v657
      %v665 = vmul.f32 %v527, %v661
      %v666 = vmul.f32 %v531, %v657
      %v667 = vmul.f32 %v531, %v661
      %v668 = vmul.f32 %v535, %v657
      %v669 = vmul.f32 %v535, %v661
      %v670 = vmul.f32 %v539, %v657
      %v671 = vmul.f32 %v539, %v661
      %v672 = vmul.f32 %v543, %v657
      %v673 = vmul.f32 %v543, %v661
      %v674 = vmul.f32 %v547, %v657
      %v675 = vmul.f32 %v547, %v661
      %v676 = vmul.f32 %v551, %v657
      %v677 = vmul.f32 %v551, %v661
      %v678 = vmul.f32 %v555, %v657
      %v679 = vmul.f32 %v555, %v661
      %v680 = vmul.f32 %v559, %v657
      %v681 = vmul.f32 %v559, %v661
      %v682 = vmul.f32 %v563, %v657
      %v683 = vmul.f32 %v563, %v661
      %v684 = vmul.f32 %v567, %v657
      %v685 = vmul.f32 %v567, %v661
      %v686 = vmul.f32 %v571, %v657
      %v687 = vmul.f32 %v571, %v661
      %v688 = vmul.f32 %v575, %v657
      %v689 = vmul.f32 %v575, %v661
      %v690 = vmul.f32 %v579, %v657
      %v691 = vmul.f32 %v579, %v661
      %v692 = vmul.f32 %v583, %v657
      %v693 = vmul.f32 %v583, %v661
      %v694 = vmul.f32 %v587, %v657
      %v695 = vmul.f32 %v587, %v661
      %v696 = vmul.f32 %v591, %v657
      %v697 = vmul.f32 %v591, %v661
      %v698 = vmul.f32 %v595, %v657
      %v699 = vmul.f32 %v595, %v661
      %v700 = vmul.f32 %v599, %v657
      %v701 = vmul.f32 %v599, %v661
      %v702 = vmul.f32 %v603, %v657
      %v703 = vmul.f32 %v603, %v661
      %v704 = vmul.f32 %v607, %v657
      %v705 = vmul.f32 %v607, %v661
      %v706 = vmul.f32 %v611, %v657
      %v707 = vmul.f32 %v611, %v661
      %v708 = vmul.f32 %v615, %v657
      %v709 = vmul.f32 %v615, %v661
      %v710 = vmul.f32 %v619, %v657
      %v711 = vmul.f32 %v619, %v661
      %v712 = vmul.f32 %v623, %v657
      %v713 = vmul.f32 %v623, %v661
      %v714 = vmul.f32 %v627, %v657
      %v715 = vmul.f32 %v627, %v661
      %v716 = vmul.f32 %v631, %v657
      %v717 = vmul.f32 %v631, %v661
      %v718 = vmul.f32 %v635, %v657
      %v719 = vmul.f32 %v635, %v661
      %v720 = vmul.f32 %v639, %v657
      %v721 = vmul.f32 %v639, %v661
      %v722 = vmul.f32 %v643, %v657
      %v723 = vmul.f32 %v643, %v661
      %v724 = vmul.f32 %v647, %v657
      %v725 = vmul.f32 %v647, %v661
      %v726 = vmul.f32 %v651, %v657
      %v727 = vmul.f32 %v651, %v661
      %v728 = vadd.f32 %v459, %v664
      %v729 = vadd.f32 %v460, %v665
      %v730 = vadd.f32 %v461, %v666
      %v731 = vadd.f32 %v462, %v667
      %v732 = vadd.f32 %v463, %v668
      %v733 = vadd.f32 %v464, %v669
      %v734 = vadd.f32 %v465, %v670
      %v735 = vadd.f32 %v466, %v671
      %v736 = vadd.f32 %v467, %v672
      %v737 = vadd.f32 %v468, %v673
      %v738 = vadd.f32 %v469, %v674
      %v739 = vadd.f32 %v470, %v675
      %v740 = vadd.f32 %v471, %v676
      %v741 = vadd.f32 %v472, %v677
      %v742 = vadd.f32 %v473, %v678
      %v743 = vadd.f32 %v474, %v679
      %v744 = vadd.f32 %v475, %v680
      %v745 = vadd.f32 %v476, %v681
      %v746 = vadd.f32 %v477, %v682
      %v747 = vadd.f32 %v478, %v683
      %v748 = vadd.f32 %v479, %v684
      %v749 = vadd.f32 %v480, %v685
      %v750 = vadd.f32 %v481, %v686
      %v751 = vadd.f32 %v482, %v687
      %v752 = vadd.f32 %v483, %v688
      %v753 = vadd.f32 %v484, %v689
      %v754 = vadd.f32 %v485, %v690
      %v755 = vadd.f32 %v486, %v691
      %v756 = vadd.f32 %v487, %v692
      %v757 = vadd.f32 %v488, %v693
      %v758 = vadd.f32 %v489, %v694
      %v759 = vadd.f32 %v490, %v695
      %v760 = vadd.f32 %v491, %v696
      %v761 = vadd.f32 %v492, %v697
      %v762 = vadd.f32 %v493, %v698
      %v763 = vadd.f32 %v494, %v699
      %v764 = vadd.f32 %v495, %v700
      %v765 = vadd.f32 %v496, %v701
      %v766 = vadd.f32 %v497, %v702
      %v767 = vadd.f32 %v498, %v703
      %v768 = vadd.f32 %v499, %v704
      %v769 = vadd.f32 %v500, %v705
      %v770 = vadd.f32 %v501, %v706
      %v771 = vadd.f32 %v502, %v707
      %v772 = vadd.f32 %v503, %v708
      %v773 = vadd.f32 %v504, %v709
      %v774 = vadd.f32 %v505, %v710
      %v775 = vadd.f32 %v506, %v711
      %v776 = vadd.f32 %v507, %v712
      %v777 = vadd.f32 %v508, %v713
      %v778 = vadd.f32 %v509, %v714
      %v779 = vadd.f32 %v510, %v715
      %v780 = vadd.f32 %v511, %v716
      %v781 = vadd.f32 %v512, %v717
      %v782 = vadd.f32 %v513, %v718
      %v783 = vadd.f32 %v514, %v719
      %v784 = vadd.f32 %v515, %v720
      %v785 = vadd.f32 %v516, %v721
      %v786 = vadd.f32 %v517, %v722
      %v787 = vadd.f32 %v518, %v723
      %v788 = vadd.f32 %v519, %v724
      %v789 = vadd.f32 %v520, %v725
      %v790 = vadd.f32 %v521, %v726
      %v791 = vadd.f32 %v522, %v727
      %v792 = vld [vmem:[%s3] sm:$0x3]
      %v794 = vlaneseq
      %v795 = vshrl.u32 %v794, 7
      %v796 = vsub.s32 0, %v795
      %v797 = vrot.slane %v792, %v796
      %v798 = vlaneseq
      %v799 = vshrl.u32 %v798, 7
      %v800 = vsub.s32 1, %v799
      %v801 = vrot.slane %v792, %v800
      %v804 = vadd.f32 %v728, %v797
      %v805 = vadd.f32 %v729, %v801
      %v806 = vadd.f32 %v730, %v797
      %v807 = vadd.f32 %v731, %v801
      %v808 = vadd.f32 %v732, %v797
      %v809 = vadd.f32 %v733, %v801
      %v810 = vadd.f32 %v734, %v797
      %v811 = vadd.f32 %v735, %v801
      %v812 = vadd.f32 %v736, %v797
      %v813 = vadd.f32 %v737, %v801
      %v814 = vadd.f32 %v738, %v797
      %v815 = vadd.f32 %v739, %v801
      %v816 = vadd.f32 %v740, %v797
      %v817 = vadd.f32 %v741, %v801
      %v818 = vadd.f32 %v742, %v797
      %v819 = vadd.f32 %v743, %v801
      %v820 = vadd.f32 %v744, %v797
      %v821 = vadd.f32 %v745, %v801
      %v822 = vadd.f32 %v746, %v797
      %v823 = vadd.f32 %v747, %v801
      %v824 = vadd.f32 %v748, %v797
      %v825 = vadd.f32 %v749, %v801
      %v826 = vadd.f32 %v750, %v797
      %v827 = vadd.f32 %v751, %v801
      %v828 = vadd.f32 %v752, %v797
      %v829 = vadd.f32 %v753, %v801
      %v830 = vadd.f32 %v754, %v797
      %v831 = vadd.f32 %v755, %v801
      %v832 = vadd.f32 %v756, %v797
      %v833 = vadd.f32 %v757, %v801
      %v834 = vadd.f32 %v758, %v797
      %v835 = vadd.f32 %v759, %v801
      %v836 = vadd.f32 %v760, %v797
      %v837 = vadd.f32 %v761, %v801
      %v838 = vadd.f32 %v762, %v797
      %v839 = vadd.f32 %v763, %v801
      %v840 = vadd.f32 %v764, %v797
      %v841 = vadd.f32 %v765, %v801
      %v842 = vadd.f32 %v766, %v797
      %v843 = vadd.f32 %v767, %v801
      %v844 = vadd.f32 %v768, %v797
      %v845 = vadd.f32 %v769, %v801
      %v846 = vadd.f32 %v770, %v797
      %v847 = vadd.f32 %v771, %v801
      %v848 = vadd.f32 %v772, %v797
      %v849 = vadd.f32 %v773, %v801
      %v850 = vadd.f32 %v774, %v797
      %v851 = vadd.f32 %v775, %v801
      %v852 = vadd.f32 %v776, %v797
      %v853 = vadd.f32 %v777, %v801
      %v854 = vadd.f32 %v778, %v797
      %v855 = vadd.f32 %v779, %v801
      %v856 = vadd.f32 %v780, %v797
      %v857 = vadd.f32 %v781, %v801
      %v858 = vadd.f32 %v782, %v797
      %v859 = vadd.f32 %v783, %v801
      %v860 = vadd.f32 %v784, %v797
      %v861 = vadd.f32 %v785, %v801
      %v862 = vadd.f32 %v786, %v797
      %v863 = vadd.f32 %v787, %v801
      %v864 = vadd.f32 %v788, %v797
      %v865 = vadd.f32 %v789, %v801
      %v866 = vadd.f32 %v790, %v797
      %v867 = vadd.f32 %v791, %v801
      %v868 = vmax.f32 %v804, 0.0
      %v869 = vmax.f32 %v805, 0.0
      %v870 = vmax.f32 %v806, 0.0
      %v871 = vmax.f32 %v807, 0.0
      %v872 = vmax.f32 %v808, 0.0
      %v873 = vmax.f32 %v809, 0.0
      %v874 = vmax.f32 %v810, 0.0
      %v875 = vmax.f32 %v811, 0.0
      %v876 = vmax.f32 %v812, 0.0
      %v877 = vmax.f32 %v813, 0.0
      %v878 = vmax.f32 %v814, 0.0
      %v879 = vmax.f32 %v815, 0.0
      %v880 = vmax.f32 %v816, 0.0
      %v881 = vmax.f32 %v817, 0.0
      %v882 = vmax.f32 %v818, 0.0
      %v883 = vmax.f32 %v819, 0.0
      %v884 = vmax.f32 %v820, 0.0
      %v885 = vmax.f32 %v821, 0.0
      %v886 = vmax.f32 %v822, 0.0
      %v887 = vmax.f32 %v823, 0.0
      %v888 = vmax.f32 %v824, 0.0
      %v889 = vmax.f32 %v825, 0.0
      %v890 = vmax.f32 %v826, 0.0
      %v891 = vmax.f32 %v827, 0.0
      %v892 = vmax.f32 %v828, 0.0
      %v893 = vmax.f32 %v829, 0.0
      %v894 = vmax.f32 %v830, 0.0
      %v895 = vmax.f32 %v831, 0.0
      %v896 = vmax.f32 %v832, 0.0
      %v897 = vmax.f32 %v833, 0.0
      %v898 = vmax.f32 %v834, 0.0
      %v899 = vmax.f32 %v835, 0.0
      %v900 = vmax.f32 %v836, 0.0
      %v901 = vmax.f32 %v837, 0.0
      %v902 = vmax.f32 %v838, 0.0
      %v903 = vmax.f32 %v839, 0.0
      %v904 = vmax.f32 %v840, 0.0
      %v905 = vmax.f32 %v841, 0.0
      %v906 = vmax.f32 %v842, 0.0
      %v907 = vmax.f32 %v843, 0.0
      %v908 = vmax.f32 %v844, 0.0
      %v909 = vmax.f32 %v845, 0.0
      %v910 = vmax.f32 %v846, 0.0
      %v911 = vmax.f32 %v847, 0.0
      %v912 = vmax.f32 %v848, 0.0
      %v913 = vmax.f32 %v849, 0.0
      %v914 = vmax.f32 %v850, 0.0
      %v915 = vmax.f32 %v851, 0.0
      %v916 = vmax.f32 %v852, 0.0
      %v917 = vmax.f32 %v853, 0.0
      %v918 = vmax.f32 %v854, 0.0
      %v919 = vmax.f32 %v855, 0.0
      %v920 = vmax.f32 %v856, 0.0
      %v921 = vmax.f32 %v857, 0.0
      %v922 = vmax.f32 %v858, 0.0
      %v923 = vmax.f32 %v859, 0.0
      %v924 = vmax.f32 %v860, 0.0
      %v925 = vmax.f32 %v861, 0.0
      %v926 = vmax.f32 %v862, 0.0
      %v927 = vmax.f32 %v863, 0.0
      %v928 = vmax.f32 %v864, 0.0
      %v929 = vmax.f32 %v865, 0.0
      %v930 = vmax.f32 %v866, 0.0
      %v931 = vmax.f32 %v867, 0.0
      %v932 = vpack.c.bf16 %v870, %v868
      %v933 = vpack.c.bf16 %v871, %v869
      %v934 = vpack.c.bf16 %v874, %v872
      %v935 = vpack.c.bf16 %v875, %v873
      %v936 = vpack.c.bf16 %v878, %v876
      %v937 = vpack.c.bf16 %v879, %v877
      %v938 = vpack.c.bf16 %v882, %v880
      %v939 = vpack.c.bf16 %v883, %v881
      %v940 = vpack.c.bf16 %v886, %v884
      %v941 = vpack.c.bf16 %v887, %v885
      %v942 = vpack.c.bf16 %v890, %v888
      %v943 = vpack.c.bf16 %v891, %v889
      %v944 = vpack.c.bf16 %v894, %v892
      %v945 = vpack.c.bf16 %v895, %v893
      %v946 = vpack.c.bf16 %v898, %v896
      %v947 = vpack.c.bf16 %v899, %v897
      %v948 = vpack.c.bf16 %v902, %v900
      %v949 = vpack.c.bf16 %v903, %v901
      %v950 = vpack.c.bf16 %v906, %v904
      %v951 = vpack.c.bf16 %v907, %v905
      %v952 = vpack.c.bf16 %v910, %v908
      %v953 = vpack.c.bf16 %v911, %v909
      %v954 = vpack.c.bf16 %v914, %v912
      %v955 = vpack.c.bf16 %v915, %v913
      %v956 = vpack.c.bf16 %v918, %v916
      %v957 = vpack.c.bf16 %v919, %v917
      %v958 = vpack.c.bf16 %v922, %v920
      %v959 = vpack.c.bf16 %v923, %v921
      %v960 = vpack.c.bf16 %v926, %v924
      %v961 = vpack.c.bf16 %v927, %v925
      %v962 = vpack.c.bf16 %v930, %v928
      %v963 = vpack.c.bf16 %v931, %v929
      %v964 = vld [vmem:[%s4] sm:$0xff]
      %v965 = vld [vmem:[%s4 + $0x8] sm:$0xff]
      %v966 = vld [vmem:[%s4 + $0x10] sm:$0xff]
      %v967 = vld [vmem:[%s4 + $0x18] sm:$0xff]
      %v968 = vld [vmem:[%s4 + $0x20] sm:$0xff]
      %v969 = vld [vmem:[%s4 + $0x28] sm:$0xff]
      %v970 = vld [vmem:[%s4 + $0x30] sm:$0xff]
      %v971 = vld [vmem:[%s4 + $0x38] sm:$0xff]
      %v972 = vld [vmem:[%s4 + $0x40] sm:$0xff]
      %v973 = vld [vmem:[%s4 + $0x48] sm:$0xff]
      %v974 = vld [vmem:[%s4 + $0x50] sm:$0xff]
      %v975 = vld [vmem:[%s4 + $0x58] sm:$0xff]
      %v976 = vld [vmem:[%s4 + $0x60] sm:$0xff]
      %v977 = vld [vmem:[%s4 + $0x68] sm:$0xff]
      %v978 = vld [vmem:[%s4 + $0x70] sm:$0xff]
      %v979 = vld [vmem:[%s4 + $0x78] sm:$0xff]
      %v980 = vld [vmem:[%s4 + $0x80] sm:$0xff]
      %v981 = vld [vmem:[%s4 + $0x88] sm:$0xff]
      %v982 = vld [vmem:[%s4 + $0x90] sm:$0xff]
      %v983 = vld [vmem:[%s4 + $0x98] sm:$0xff]
      %v984 = vld [vmem:[%s4 + $0xa0] sm:$0xff]
      %v985 = vld [vmem:[%s4 + $0xa8] sm:$0xff]
      %v986 = vld [vmem:[%s4 + $0xb0] sm:$0xff]
      %v987 = vld [vmem:[%s4 + $0xb8] sm:$0xff]
      %v988 = vld [vmem:[%s4 + $0xc0] sm:$0xff]
      %v989 = vld [vmem:[%s4 + $0xc8] sm:$0xff]
      %v990 = vld [vmem:[%s4 + $0xd0] sm:$0xff]
      %v991 = vld [vmem:[%s4 + $0xd8] sm:$0xff]
      %v992 = vld [vmem:[%s4 + $0xe0] sm:$0xff]
      %v993 = vld [vmem:[%s4 + $0xe8] sm:$0xff]
      %v994 = vld [vmem:[%s4 + $0xf0] sm:$0xff]
      %v995 = vld [vmem:[%s4 + $0xf8] sm:$0xff]
      %v996 = vld [vmem:[%s4 + $0x100] sm:$0xff]
      %v997 = vld [vmem:[%s4 + $0x108] sm:$0xff]
      %v998 = vld [vmem:[%s4 + $0x110] sm:$0xff]
      %v999 = vld [vmem:[%s4 + $0x118] sm:$0xff]
      %v1000 = vld [vmem:[%s4 + $0x120] sm:$0xff]
      %v1001 = vld [vmem:[%s4 + $0x128] sm:$0xff]
      %v1002 = vld [vmem:[%s4 + $0x130] sm:$0xff]
      %v1003 = vld [vmem:[%s4 + $0x138] sm:$0xff]
      %v1004 = vld [vmem:[%s4 + $0x140] sm:$0xff]
      %v1005 = vld [vmem:[%s4 + $0x148] sm:$0xff]
      %v1006 = vld [vmem:[%s4 + $0x150] sm:$0xff]
      %v1007 = vld [vmem:[%s4 + $0x158] sm:$0xff]
      %v1008 = vld [vmem:[%s4 + $0x160] sm:$0xff]
      %v1009 = vld [vmem:[%s4 + $0x168] sm:$0xff]
      %v1010 = vld [vmem:[%s4 + $0x170] sm:$0xff]
      %v1011 = vld [vmem:[%s4 + $0x178] sm:$0xff]
      %v1012 = vld [vmem:[%s4 + $0x180] sm:$0xff]
      %v1013 = vld [vmem:[%s4 + $0x188] sm:$0xff]
      %v1014 = vld [vmem:[%s4 + $0x190] sm:$0xff]
      %v1015 = vld [vmem:[%s4 + $0x198] sm:$0xff]
      %v1016 = vld [vmem:[%s4 + $0x1a0] sm:$0xff]
      %v1017 = vld [vmem:[%s4 + $0x1a8] sm:$0xff]
      %v1018 = vld [vmem:[%s4 + $0x1b0] sm:$0xff]
      %v1019 = vld [vmem:[%s4 + $0x1b8] sm:$0xff]
      %v1020 = vld [vmem:[%s4 + $0x1c0] sm:$0xff]
      %v1021 = vld [vmem:[%s4 + $0x1c8] sm:$0xff]
      %v1022 = vld [vmem:[%s4 + $0x1d0] sm:$0xff]
      %v1023 = vld [vmem:[%s4 + $0x1d8] sm:$0xff]
      %v1024 = vld [vmem:[%s4 + $0x1e0] sm:$0xff]
      %v1025 = vld [vmem:[%s4 + $0x1e8] sm:$0xff]
      %v1026 = vld [vmem:[%s4 + $0x1f0] sm:$0xff]
      %v1027 = vld [vmem:[%s4 + $0x1f8] sm:$0xff]
      %v1028 = vld [vmem:[%s5] sm:$0xf]
      %v1030 = vlaneseq
      %v1031 = vshrl.u32 %v1030, 7
      %v1032 = vsub.s32 0, %v1031
      %v1033 = vrot.slane %v1028, %v1032
      %v1034 = vlaneseq
      %v1035 = vshrl.u32 %v1034, 7
      %v1036 = vsub.s32 1, %v1035
      %v1037 = vrot.slane %v1028, %v1036
      %v1038 = vlaneseq
      %v1039 = vshrl.u32 %v1038, 7
      %v1040 = vsub.s32 2, %v1039
      %v1041 = vrot.slane %v1028, %v1040
      %v1042 = vlaneseq
      %v1043 = vshrl.u32 %v1042, 7
      %v1044 = vsub.s32 3, %v1043
      %v1045 = vrot.slane %v1028, %v1044
      %v1114 = vunpack.c.l.b16 %v964
      %v1115 = vunpack.c.h.b16 %v964
      %v1116 = vunpack.c.l.b16 %v965
      %v1117 = vunpack.c.h.b16 %v965
      %v1118 = vunpack.c.l.b16 %v966
      %v1119 = vunpack.c.h.b16 %v966
      %v1120 = vunpack.c.l.b16 %v967
      %v1121 = vunpack.c.h.b16 %v967
      %v1122 = vunpack.c.l.b16 %v968
      %v1123 = vunpack.c.h.b16 %v968
      %v1124 = vunpack.c.l.b16 %v969
      %v1125 = vunpack.c.h.b16 %v969
      %v1126 = vunpack.c.l.b16 %v970
      %v1127 = vunpack.c.h.b16 %v970
      %v1128 = vunpack.c.l.b16 %v971
      %v1129 = vunpack.c.h.b16 %v971
      %v1130 = vunpack.c.l.b16 %v972
      %v1131 = vunpack.c.h.b16 %v972
      %v1132 = vunpack.c.l.b16 %v973
      %v1133 = vunpack.c.h.b16 %v973
      %v1134 = vunpack.c.l.b16 %v974
      %v1135 = vunpack.c.h.b16 %v974
      %v1136 = vunpack.c.l.b16 %v975
      %v1137 = vunpack.c.h.b16 %v975
      %v1138 = vunpack.c.l.b16 %v976
      %v1139 = vunpack.c.h.b16 %v976
      %v1140 = vunpack.c.l.b16 %v977
      %v1141 = vunpack.c.h.b16 %v977
      %v1142 = vunpack.c.l.b16 %v978
      %v1143 = vunpack.c.h.b16 %v978
      %v1144 = vunpack.c.l.b16 %v979
      %v1145 = vunpack.c.h.b16 %v979
      %v1146 = vunpack.c.l.b16 %v980
      %v1147 = vunpack.c.h.b16 %v980
      %v1148 = vunpack.c.l.b16 %v981
      %v1149 = vunpack.c.h.b16 %v981
      %v1150 = vunpack.c.l.b16 %v982
      %v1151 = vunpack.c.h.b16 %v982
      %v1152 = vunpack.c.l.b16 %v983
      %v1153 = vunpack.c.h.b16 %v983
      %v1154 = vunpack.c.l.b16 %v984
      %v1155 = vunpack.c.h.b16 %v984
      %v1156 = vunpack.c.l.b16 %v985
      %v1157 = vunpack.c.h.b16 %v985
      %v1158 = vunpack.c.l.b16 %v986
      %v1159 = vunpack.c.h.b16 %v986
      %v1160 = vunpack.c.l.b16 %v987
      %v1161 = vunpack.c.h.b16 %v987
      %v1162 = vunpack.c.l.b16 %v988
      %v1163 = vunpack.c.h.b16 %v988
      %v1164 = vunpack.c.l.b16 %v989
      %v1165 = vunpack.c.h.b16 %v989
      %v1166 = vunpack.c.l.b16 %v990
      %v1167 = vunpack.c.h.b16 %v990
      %v1168 = vunpack.c.l.b16 %v991
      %v1169 = vunpack.c.h.b16 %v991
      %v1170 = vunpack.c.l.b16 %v992
      %v1171 = vunpack.c.h.b16 %v992
      %v1172 = vunpack.c.l.b16 %v993
      %v1173 = vunpack.c.h.b16 %v993
      %v1174 = vunpack.c.l.b16 %v994
      %v1175 = vunpack.c.h.b16 %v994
      %v1176 = vunpack.c.l.b16 %v995
      %v1177 = vunpack.c.h.b16 %v995
      %v1178 = vunpack.c.l.b16 %v996
      %v1179 = vunpack.c.h.b16 %v996
      %v1180 = vunpack.c.l.b16 %v997
      %v1181 = vunpack.c.h.b16 %v997
      %v1182 = vunpack.c.l.b16 %v998
      %v1183 = vunpack.c.h.b16 %v998
      %v1184 = vunpack.c.l.b16 %v999
      %v1185 = vunpack.c.h.b16 %v999
      %v1186 = vunpack.c.l.b16 %v1000
      %v1187 = vunpack.c.h.b16 %v1000
      %v1188 = vunpack.c.l.b16 %v1001
      %v1189 = vunpack.c.h.b16 %v1001
      %v1190 = vunpack.c.l.b16 %v1002
      %v1191 = vunpack.c.h.b16 %v1002
      %v1192 = vunpack.c.l.b16 %v1003
      %v1193 = vunpack.c.h.b16 %v1003
      %v1194 = vunpack.c.l.b16 %v1004
      %v1195 = vunpack.c.h.b16 %v1004
      %v1196 = vunpack.c.l.b16 %v1005
      %v1197 = vunpack.c.h.b16 %v1005
      %v1198 = vunpack.c.l.b16 %v1006
      %v1199 = vunpack.c.h.b16 %v1006
      %v1200 = vunpack.c.l.b16 %v1007
      %v1201 = vunpack.c.h.b16 %v1007
      %v1202 = vunpack.c.l.b16 %v1008
      %v1203 = vunpack.c.h.b16 %v1008
      %v1204 = vunpack.c.l.b16 %v1009
      %v1205 = vunpack.c.h.b16 %v1009
      %v1206 = vunpack.c.l.b16 %v1010
      %v1207 = vunpack.c.h.b16 %v1010
      %v1208 = vunpack.c.l.b16 %v1011
      %v1209 = vunpack.c.h.b16 %v1011
      %v1210 = vunpack.c.l.b16 %v1012
      %v1211 = vunpack.c.h.b16 %v1012
      %v1212 = vunpack.c.l.b16 %v1013
      %v1213 = vunpack.c.h.b16 %v1013
      %v1214 = vunpack.c.l.b16 %v1014
      %v1215 = vunpack.c.h.b16 %v1014
      %v1216 = vunpack.c.l.b16 %v1015
      %v1217 = vunpack.c.h.b16 %v1015
      %v1218 = vunpack.c.l.b16 %v1016
      %v1219 = vunpack.c.h.b16 %v1016
      %v1220 = vunpack.c.l.b16 %v1017
      %v1221 = vunpack.c.h.b16 %v1017
      %v1222 = vunpack.c.l.b16 %v1018
      %v1223 = vunpack.c.h.b16 %v1018
      %v1224 = vunpack.c.l.b16 %v1019
      %v1225 = vunpack.c.h.b16 %v1019
      %v1226 = vunpack.c.l.b16 %v1020
      %v1227 = vunpack.c.h.b16 %v1020
      %v1228 = vunpack.c.l.b16 %v1021
      %v1229 = vunpack.c.h.b16 %v1021
      %v1230 = vunpack.c.l.b16 %v1022
      %v1231 = vunpack.c.h.b16 %v1022
      %v1232 = vunpack.c.l.b16 %v1023
      %v1233 = vunpack.c.h.b16 %v1023
      %v1234 = vunpack.c.l.b16 %v1024
      %v1235 = vunpack.c.h.b16 %v1024
      %v1236 = vunpack.c.l.b16 %v1025
      %v1237 = vunpack.c.h.b16 %v1025
      %v1238 = vunpack.c.l.b16 %v1026
      %v1239 = vunpack.c.h.b16 %v1026
      %v1240 = vunpack.c.l.b16 %v1027
      %v1241 = vunpack.c.h.b16 %v1027
      %v1242 = vpack.c.b16 %v1118, %v1114
      %v1243 = vpack.c.b16 %v1119, %v1115
      %v1244 = vpack.c.b16 %v1120, %v1116
      %v1245 = vpack.c.b16 %v1121, %v1117
      %v1246 = vpack.c.b16 %v1126, %v1122
      %v1247 = vpack.c.b16 %v1127, %v1123
      %v1248 = vpack.c.b16 %v1128, %v1124
      %v1249 = vpack.c.b16 %v1129, %v1125
      %v1250 = vpack.c.b16 %v1134, %v1130
      %v1251 = vpack.c.b16 %v1135, %v1131
      %v1252 = vpack.c.b16 %v1136, %v1132
      %v1253 = vpack.c.b16 %v1137, %v1133
      %v1254 = vpack.c.b16 %v1142, %v1138
      %v1255 = vpack.c.b16 %v1143, %v1139
      %v1256 = vpack.c.b16 %v1144, %v1140
      %v1257 = vpack.c.b16 %v1145, %v1141
      %v1258 = vpack.c.b16 %v1150, %v1146
      %v1259 = vpack.c.b16 %v1151, %v1147
      %v1260 = vpack.c.b16 %v1152, %v1148
      %v1261 = vpack.c.b16 %v1153, %v1149
      %v1262 = vpack.c.b16 %v1158, %v1154
      %v1263 = vpack.c.b16 %v1159, %v1155
      %v1264 = vpack.c.b16 %v1160, %v1156
      %v1265 = vpack.c.b16 %v1161, %v1157
      %v1266 = vpack.c.b16 %v1166, %v1162
      %v1267 = vpack.c.b16 %v1167, %v1163
      %v1268 = vpack.c.b16 %v1168, %v1164
      %v1269 = vpack.c.b16 %v1169, %v1165
      %v1270 = vpack.c.b16 %v1174, %v1170
      %v1271 = vpack.c.b16 %v1175, %v1171
      %v1272 = vpack.c.b16 %v1176, %v1172
      %v1273 = vpack.c.b16 %v1177, %v1173
      %v1274 = vpack.c.b16 %v1182, %v1178
      %v1275 = vpack.c.b16 %v1183, %v1179
      %v1276 = vpack.c.b16 %v1184, %v1180
      %v1277 = vpack.c.b16 %v1185, %v1181
      %v1278 = vpack.c.b16 %v1190, %v1186
      %v1279 = vpack.c.b16 %v1191, %v1187
      %v1280 = vpack.c.b16 %v1192, %v1188
      %v1281 = vpack.c.b16 %v1193, %v1189
      %v1282 = vpack.c.b16 %v1198, %v1194
      %v1283 = vpack.c.b16 %v1199, %v1195
      %v1284 = vpack.c.b16 %v1200, %v1196
      %v1285 = vpack.c.b16 %v1201, %v1197
      %v1286 = vpack.c.b16 %v1206, %v1202
      %v1287 = vpack.c.b16 %v1207, %v1203
      %v1288 = vpack.c.b16 %v1208, %v1204
      %v1289 = vpack.c.b16 %v1209, %v1205
      %v1290 = vpack.c.b16 %v1214, %v1210
      %v1291 = vpack.c.b16 %v1215, %v1211
      %v1292 = vpack.c.b16 %v1216, %v1212
      %v1293 = vpack.c.b16 %v1217, %v1213
      %v1294 = vpack.c.b16 %v1222, %v1218
      %v1295 = vpack.c.b16 %v1223, %v1219
      %v1296 = vpack.c.b16 %v1224, %v1220
      %v1297 = vpack.c.b16 %v1225, %v1221
      %v1298 = vpack.c.b16 %v1230, %v1226
      %v1299 = vpack.c.b16 %v1231, %v1227
      %v1300 = vpack.c.b16 %v1232, %v1228
      %v1301 = vpack.c.b16 %v1233, %v1229
      %v1302 = vpack.c.b16 %v1238, %v1234
      %v1303 = vpack.c.b16 %v1239, %v1235
      %v1304 = vpack.c.b16 %v1240, %v1236
      %v1305 = vpack.c.b16 %v1241, %v1237
      %1370 = vmatprep.subr.bf16.mxu0 %v1271
      %1371 = vmatpush1.bf16.msra.mxu0 %v1270
      %1372 = vmatprep.subr.bf16.mxu0 %v1267
      %1373 = vmatpush1.bf16.msra.mxu0 %v1266
      %1374 = vmatprep.subr.bf16.mxu0 %v1263
      %1375 = vmatpush1.bf16.msra.mxu0 %v1262
      %1376 = vmatprep.subr.bf16.mxu0 %v1259
      %1377 = vmatpush1.bf16.msra.mxu0 %v1258
      %1378 = vmatprep.subr.bf16.mxu0 %v1255
      %1379 = vmatpush1.bf16.msra.mxu0 %v1254
      %1380 = vmatprep.subr.bf16.mxu0 %v1251
      %1381 = vmatpush1.bf16.msra.mxu0 %v1250
      %1382 = vmatprep.subr.bf16.mxu0 %v1247
      %1383 = vmatpush1.bf16.msra.mxu0 %v1246
      %1384 = vmatprep.subr.bf16.mxu0 %v1243
      %1385 = vmatpush1.bf16.msra.mxu0 %v1242
      %1386 = vmatprep.subr.bf16.mxu0 %v1303
      %1387 = vmatpush2.bf16.msra.mxu0 %v1302
      %1388 = vmatprep.subr.bf16.mxu0 %v1299
      %1389 = vmatpush2.bf16.msra.mxu0 %v1298
      %1390 = vmatprep.subr.bf16.mxu0 %v1295
      %1391 = vmatpush2.bf16.msra.mxu0 %v1294
      %1392 = vmatprep.subr.bf16.mxu0 %v1291
      %1393 = vmatpush2.bf16.msra.mxu0 %v1290
      %1394 = vmatprep.subr.bf16.mxu0 %v1287
      %1395 = vmatpush2.bf16.msra.mxu0 %v1286
      %1396 = vmatprep.subr.bf16.mxu0 %v1283
      %1397 = vmatpush2.bf16.msra.mxu0 %v1282
      %1398 = vmatprep.subr.bf16.mxu0 %v1279
      %1399 = vmatpush2.bf16.msra.mxu0 %v1278
      %1400 = vmatprep.subr.bf16.mxu0 %v1275
      %1401 = vmatpush2.bf16.msra.mxu0 %v1274
      %1402 = vmatprep.mubr.bf16.mxu0 %v933
      %1403 = vmatmul.mubr.bf16.gmra.mxu0 %v932
      %v1404 = vpop.f32.mrf.mxu0
      %v1405 = vadd.f32 %v1033, %v1404
      %v1406 = vpop.f32.mrf.mxu0
      %v1407 = vadd.f32 %v1037, %v1406
      %v1408 = vpop.f32.mrf.mxu0
      %v1409 = vadd.f32 %v1033, %v1408
      %v1410 = vpop.f32.mrf.mxu0
      %v1411 = vadd.f32 %v1037, %v1410
      %1412 = vmatprep.mubr.bf16.mxu0 %v935
      %1413 = vmatmul.mubr.bf16.gmra.mxu0 %v934
      %v1414 = vpop.f32.mrf.mxu0
      %v1415 = vadd.f32 %v1033, %v1414
      %v1416 = vpop.f32.mrf.mxu0
      %v1417 = vadd.f32 %v1037, %v1416
      %v1418 = vpop.f32.mrf.mxu0
      %v1419 = vadd.f32 %v1033, %v1418
      %v1420 = vpop.f32.mrf.mxu0
      %v1421 = vadd.f32 %v1037, %v1420
      %1422 = vmatprep.mubr.bf16.mxu0 %v937
      %1423 = vmatmul.mubr.bf16.gmra.mxu0 %v936
      %v1424 = vpop.f32.mrf.mxu0
      %v1425 = vadd.f32 %v1033, %v1424
      %v1426 = vpop.f32.mrf.mxu0
      %v1427 = vadd.f32 %v1037, %v1426
      %v1428 = vpop.f32.mrf.mxu0
      %v1429 = vadd.f32 %v1033, %v1428
      %v1430 = vpop.f32.mrf.mxu0
      %v1431 = vadd.f32 %v1037, %v1430
      %1432 = vmatprep.mubr.bf16.mxu0 %v939
      %1433 = vmatmul.mubr.bf16.gmra.mxu0 %v938
      %v1434 = vpop.f32.mrf.mxu0
      %v1435 = vadd.f32 %v1033, %v1434
      %v1436 = vpop.f32.mrf.mxu0
      %v1437 = vadd.f32 %v1037, %v1436
      %v1438 = vpop.f32.mrf.mxu0
      %v1439 = vadd.f32 %v1033, %v1438
      %v1440 = vpop.f32.mrf.mxu0
      %v1441 = vadd.f32 %v1037, %v1440
      %1442 = vmatprep.mubr.bf16.mxu0 %v941
      %1443 = vmatmul.mubr.bf16.gmra.mxu0 %v940
      %v1444 = vpop.f32.mrf.mxu0
      %v1445 = vadd.f32 %v1033, %v1444
      %v1446 = vpop.f32.mrf.mxu0
      %v1447 = vadd.f32 %v1037, %v1446
      %v1448 = vpop.f32.mrf.mxu0
      %v1449 = vadd.f32 %v1033, %v1448
      %v1450 = vpop.f32.mrf.mxu0
      %v1451 = vadd.f32 %v1037, %v1450
      %1452 = vmatprep.mubr.bf16.mxu0 %v943
      %1453 = vmatmul.mubr.bf16.gmra.mxu0 %v942
      %v1454 = vpop.f32.mrf.mxu0
      %v1455 = vadd.f32 %v1033, %v1454
      %v1456 = vpop.f32.mrf.mxu0
      %v1457 = vadd.f32 %v1037, %v1456
      %v1458 = vpop.f32.mrf.mxu0
      %v1459 = vadd.f32 %v1033, %v1458
      %v1460 = vpop.f32.mrf.mxu0
      %v1461 = vadd.f32 %v1037, %v1460
      %1462 = vmatprep.mubr.bf16.mxu0 %v945
      %1463 = vmatmul.mubr.bf16.gmra.mxu0 %v944
      %v1464 = vpop.f32.mrf.mxu0
      %v1465 = vadd.f32 %v1033, %v1464
      %v1466 = vpop.f32.mrf.mxu0
      %v1467 = vadd.f32 %v1037, %v1466
      %v1468 = vpop.f32.mrf.mxu0
      %v1469 = vadd.f32 %v1033, %v1468
      %v1470 = vpop.f32.mrf.mxu0
      %v1471 = vadd.f32 %v1037, %v1470
      %1472 = vmatprep.mubr.bf16.mxu0 %v947
      %1473 = vmatmul.mubr.bf16.gmra.mxu0 %v946
      %v1474 = vpop.f32.mrf.mxu0
      %v1475 = vadd.f32 %v1033, %v1474
      %v1476 = vpop.f32.mrf.mxu0
      %v1477 = vadd.f32 %v1037, %v1476
      %v1478 = vpop.f32.mrf.mxu0
      %v1479 = vadd.f32 %v1033, %v1478
      %v1480 = vpop.f32.mrf.mxu0
      %v1481 = vadd.f32 %v1037, %v1480
      %1482 = vmatprep.mubr.bf16.mxu0 %v949
      %1483 = vmatmul.mubr.bf16.gmra.mxu0 %v948
      %v1484 = vpop.f32.mrf.mxu0
      %v1485 = vadd.f32 %v1033, %v1484
      %v1486 = vpop.f32.mrf.mxu0
      %v1487 = vadd.f32 %v1037, %v1486
      %v1488 = vpop.f32.mrf.mxu0
      %v1489 = vadd.f32 %v1033, %v1488
      %v1490 = vpop.f32.mrf.mxu0
      %v1491 = vadd.f32 %v1037, %v1490
      %1492 = vmatprep.mubr.bf16.mxu0 %v951
      %1493 = vmatmul.mubr.bf16.gmra.mxu0 %v950
      %v1494 = vpop.f32.mrf.mxu0
      %v1495 = vadd.f32 %v1033, %v1494
      %v1496 = vpop.f32.mrf.mxu0
      %v1497 = vadd.f32 %v1037, %v1496
      %v1498 = vpop.f32.mrf.mxu0
      %v1499 = vadd.f32 %v1033, %v1498
      %v1500 = vpop.f32.mrf.mxu0
      %v1501 = vadd.f32 %v1037, %v1500
      %1502 = vmatprep.mubr.bf16.mxu0 %v953
      %1503 = vmatmul.mubr.bf16.gmra.mxu0 %v952
      %v1504 = vpop.f32.mrf.mxu0
      %v1505 = vadd.f32 %v1033, %v1504
      %v1506 = vpop.f32.mrf.mxu0
      %v1507 = vadd.f32 %v1037, %v1506
      %v1508 = vpop.f32.mrf.mxu0
      %v1509 = vadd.f32 %v1033, %v1508
      %v1510 = vpop.f32.mrf.mxu0
      %v1511 = vadd.f32 %v1037, %v1510
      %1512 = vmatprep.mubr.bf16.mxu0 %v955
      %1513 = vmatmul.mubr.bf16.gmra.mxu0 %v954
      %v1514 = vpop.f32.mrf.mxu0
      %v1515 = vadd.f32 %v1033, %v1514
      %v1516 = vpop.f32.mrf.mxu0
      %v1517 = vadd.f32 %v1037, %v1516
      %v1518 = vpop.f32.mrf.mxu0
      %v1519 = vadd.f32 %v1033, %v1518
      %v1520 = vpop.f32.mrf.mxu0
      %v1521 = vadd.f32 %v1037, %v1520
      %1522 = vmatprep.mubr.bf16.mxu0 %v957
      %1523 = vmatmul.mubr.bf16.gmra.mxu0 %v956
      %v1524 = vpop.f32.mrf.mxu0
      %v1525 = vadd.f32 %v1033, %v1524
      %v1526 = vpop.f32.mrf.mxu0
      %v1527 = vadd.f32 %v1037, %v1526
      %v1528 = vpop.f32.mrf.mxu0
      %v1529 = vadd.f32 %v1033, %v1528
      %v1530 = vpop.f32.mrf.mxu0
      %v1531 = vadd.f32 %v1037, %v1530
      %1532 = vmatprep.mubr.bf16.mxu0 %v959
      %1533 = vmatmul.mubr.bf16.gmra.mxu0 %v958
      %v1534 = vpop.f32.mrf.mxu0
      %v1535 = vadd.f32 %v1033, %v1534
      %v1536 = vpop.f32.mrf.mxu0
      %v1537 = vadd.f32 %v1037, %v1536
      %v1538 = vpop.f32.mrf.mxu0
      %v1539 = vadd.f32 %v1033, %v1538
      %v1540 = vpop.f32.mrf.mxu0
      %v1541 = vadd.f32 %v1037, %v1540
      %1542 = vmatprep.mubr.bf16.mxu0 %v961
      %1543 = vmatmul.mubr.bf16.gmra.mxu0 %v960
      %v1544 = vpop.f32.mrf.mxu0
      %v1545 = vadd.f32 %v1033, %v1544
      %v1546 = vpop.f32.mrf.mxu0
      %v1547 = vadd.f32 %v1037, %v1546
      %v1548 = vpop.f32.mrf.mxu0
      %v1549 = vadd.f32 %v1033, %v1548
      %v1550 = vpop.f32.mrf.mxu0
      %v1551 = vadd.f32 %v1037, %v1550
      %1552 = vmatprep.mubr.bf16.mxu0 %v963
      %1553 = vmatmul.mubr.bf16.gmra.mxu0 %v962
      %v1554 = vpop.f32.mrf.mxu0
      %v1555 = vadd.f32 %v1033, %v1554
      %v1556 = vpop.f32.mrf.mxu0
      %v1557 = vadd.f32 %v1037, %v1556
      %v1558 = vpop.f32.mrf.mxu0
      %v1559 = vadd.f32 %v1033, %v1558
      %v1560 = vpop.f32.mrf.mxu0
      %v1561 = vadd.f32 %v1037, %v1560
      %1562 = vdwg.mxu0
      %1563 = vmatprep.subr.bf16.mxu0 %v1273
      %1564 = vmatpush1.bf16.msra.mxu0 %v1272
      %1565 = vmatprep.subr.bf16.mxu0 %v1269
      %1566 = vmatpush1.bf16.msra.mxu0 %v1268
      %1567 = vmatprep.subr.bf16.mxu0 %v1265
      %1568 = vmatpush1.bf16.msra.mxu0 %v1264
      %1569 = vmatprep.subr.bf16.mxu0 %v1261
      %1570 = vmatpush1.bf16.msra.mxu0 %v1260
      %1571 = vmatprep.subr.bf16.mxu0 %v1257
      %1572 = vmatpush1.bf16.msra.mxu0 %v1256
      %1573 = vmatprep.subr.bf16.mxu0 %v1253
      %1574 = vmatpush1.bf16.msra.mxu0 %v1252
      %1575 = vmatprep.subr.bf16.mxu0 %v1249
      %1576 = vmatpush1.bf16.msra.mxu0 %v1248
      %1577 = vmatprep.subr.bf16.mxu0 %v1245
      %1578 = vmatpush1.bf16.msra.mxu0 %v1244
      %1579 = vmatprep.subr.bf16.mxu0 %v1305
      %1580 = vmatpush2.bf16.msra.mxu0 %v1304
      %1581 = vmatprep.subr.bf16.mxu0 %v1301
      %1582 = vmatpush2.bf16.msra.mxu0 %v1300
      %1583 = vmatprep.subr.bf16.mxu0 %v1297
      %1584 = vmatpush2.bf16.msra.mxu0 %v1296
      %1585 = vmatprep.subr.bf16.mxu0 %v1293
      %1586 = vmatpush2.bf16.msra.mxu0 %v1292
      %1587 = vmatprep.subr.bf16.mxu0 %v1289
      %1588 = vmatpush2.bf16.msra.mxu0 %v1288
      %1589 = vmatprep.subr.bf16.mxu0 %v1285
      %1590 = vmatpush2.bf16.msra.mxu0 %v1284
      %1591 = vmatprep.subr.bf16.mxu0 %v1281
      %1592 = vmatpush2.bf16.msra.mxu0 %v1280
      %1593 = vmatprep.subr.bf16.mxu0 %v1277
      %1594 = vmatpush2.bf16.msra.mxu0 %v1276
      %1595 = vmatprep.mubr.bf16.mxu0 %v933
      %1596 = vmatmul.mubr.bf16.gmra.mxu0 %v932
      %v1597 = vpop.f32.mrf.mxu0
      %v1598 = vadd.f32 %v1041, %v1597
      %v1599 = vpop.f32.mrf.mxu0
      %v1600 = vadd.f32 %v1045, %v1599
      %v1601 = vpop.f32.mrf.mxu0
      %v1602 = vadd.f32 %v1041, %v1601
      %v1603 = vpop.f32.mrf.mxu0
      %v1604 = vadd.f32 %v1045, %v1603
      %1605 = vmatprep.mubr.bf16.mxu0 %v935
      %1606 = vmatmul.mubr.bf16.gmra.mxu0 %v934
      %v1607 = vpop.f32.mrf.mxu0
      %v1608 = vadd.f32 %v1041, %v1607
      %v1609 = vpop.f32.mrf.mxu0
      %v1610 = vadd.f32 %v1045, %v1609
      %v1611 = vpop.f32.mrf.mxu0
      %v1612 = vadd.f32 %v1041, %v1611
      %v1613 = vpop.f32.mrf.mxu0
      %v1614 = vadd.f32 %v1045, %v1613
      %1615 = vmatprep.mubr.bf16.mxu0 %v937
      %1616 = vmatmul.mubr.bf16.gmra.mxu0 %v936
      %v1617 = vpop.f32.mrf.mxu0
      %v1618 = vadd.f32 %v1041, %v1617
      %v1619 = vpop.f32.mrf.mxu0
      %v1620 = vadd.f32 %v1045, %v1619
      %v1621 = vpop.f32.mrf.mxu0
      %v1622 = vadd.f32 %v1041, %v1621
      %v1623 = vpop.f32.mrf.mxu0
      %v1624 = vadd.f32 %v1045, %v1623
      %1625 = vmatprep.mubr.bf16.mxu0 %v939
      %1626 = vmatmul.mubr.bf16.gmra.mxu0 %v938
      %v1627 = vpop.f32.mrf.mxu0
      %v1628 = vadd.f32 %v1041, %v1627
      %v1629 = vpop.f32.mrf.mxu0
      %v1630 = vadd.f32 %v1045, %v1629
      %v1631 = vpop.f32.mrf.mxu0
      %v1632 = vadd.f32 %v1041, %v1631
      %v1633 = vpop.f32.mrf.mxu0
      %v1634 = vadd.f32 %v1045, %v1633
      %1635 = vmatprep.mubr.bf16.mxu0 %v941
      %1636 = vmatmul.mubr.bf16.gmra.mxu0 %v940
      %v1637 = vpop.f32.mrf.mxu0
      %v1638 = vadd.f32 %v1041, %v1637
      %v1639 = vpop.f32.mrf.mxu0
      %v1640 = vadd.f32 %v1045, %v1639
      %v1641 = vpop.f32.mrf.mxu0
      %v1642 = vadd.f32 %v1041, %v1641
      %v1643 = vpop.f32.mrf.mxu0
      %v1644 = vadd.f32 %v1045, %v1643
      %1645 = vmatprep.mubr.bf16.mxu0 %v943
      %1646 = vmatmul.mubr.bf16.gmra.mxu0 %v942
      %v1647 = vpop.f32.mrf.mxu0
      %v1648 = vadd.f32 %v1041, %v1647
      %v1649 = vpop.f32.mrf.mxu0
      %v1650 = vadd.f32 %v1045, %v1649
      %v1651 = vpop.f32.mrf.mxu0
      %v1652 = vadd.f32 %v1041, %v1651
      %v1653 = vpop.f32.mrf.mxu0
      %v1654 = vadd.f32 %v1045, %v1653
      %1655 = vmatprep.mubr.bf16.mxu0 %v945
      %1656 = vmatmul.mubr.bf16.gmra.mxu0 %v944
      %v1657 = vpop.f32.mrf.mxu0
      %v1658 = vadd.f32 %v1041, %v1657
      %v1659 = vpop.f32.mrf.mxu0
      %v1660 = vadd.f32 %v1045, %v1659
      %v1661 = vpop.f32.mrf.mxu0
      %v1662 = vadd.f32 %v1041, %v1661
      %v1663 = vpop.f32.mrf.mxu0
      %v1664 = vadd.f32 %v1045, %v1663
      %1665 = vmatprep.mubr.bf16.mxu0 %v947
      %1666 = vmatmul.mubr.bf16.gmra.mxu0 %v946
      %v1667 = vpop.f32.mrf.mxu0
      %v1668 = vadd.f32 %v1041, %v1667
      %v1669 = vpop.f32.mrf.mxu0
      %v1670 = vadd.f32 %v1045, %v1669
      %v1671 = vpop.f32.mrf.mxu0
      %v1672 = vadd.f32 %v1041, %v1671
      %v1673 = vpop.f32.mrf.mxu0
      %v1674 = vadd.f32 %v1045, %v1673
      %1675 = vmatprep.mubr.bf16.mxu0 %v949
      %1676 = vmatmul.mubr.bf16.gmra.mxu0 %v948
      %v1677 = vpop.f32.mrf.mxu0
      %v1678 = vadd.f32 %v1041, %v1677
      %v1679 = vpop.f32.mrf.mxu0
      %v1680 = vadd.f32 %v1045, %v1679
      %v1681 = vpop.f32.mrf.mxu0
      %v1682 = vadd.f32 %v1041, %v1681
      %v1683 = vpop.f32.mrf.mxu0
      %v1684 = vadd.f32 %v1045, %v1683
      %1685 = vmatprep.mubr.bf16.mxu0 %v951
      %1686 = vmatmul.mubr.bf16.gmra.mxu0 %v950
      %v1687 = vpop.f32.mrf.mxu0
      %v1688 = vadd.f32 %v1041, %v1687
      %v1689 = vpop.f32.mrf.mxu0
      %v1690 = vadd.f32 %v1045, %v1689
      %v1691 = vpop.f32.mrf.mxu0
      %v1692 = vadd.f32 %v1041, %v1691
      %v1693 = vpop.f32.mrf.mxu0
      %v1694 = vadd.f32 %v1045, %v1693
      %1695 = vmatprep.mubr.bf16.mxu0 %v953
      %1696 = vmatmul.mubr.bf16.gmra.mxu0 %v952
      %v1697 = vpop.f32.mrf.mxu0
      %v1698 = vadd.f32 %v1041, %v1697
      %v1699 = vpop.f32.mrf.mxu0
      %v1700 = vadd.f32 %v1045, %v1699
      %v1701 = vpop.f32.mrf.mxu0
      %v1702 = vadd.f32 %v1041, %v1701
      %v1703 = vpop.f32.mrf.mxu0
      %v1704 = vadd.f32 %v1045, %v1703
      %1705 = vmatprep.mubr.bf16.mxu0 %v955
      %1706 = vmatmul.mubr.bf16.gmra.mxu0 %v954
      %v1707 = vpop.f32.mrf.mxu0
      %v1708 = vadd.f32 %v1041, %v1707
      %v1709 = vpop.f32.mrf.mxu0
      %v1710 = vadd.f32 %v1045, %v1709
      %v1711 = vpop.f32.mrf.mxu0
      %v1712 = vadd.f32 %v1041, %v1711
      %v1713 = vpop.f32.mrf.mxu0
      %v1714 = vadd.f32 %v1045, %v1713
      %1715 = vmatprep.mubr.bf16.mxu0 %v957
      %1716 = vmatmul.mubr.bf16.gmra.mxu0 %v956
      %v1717 = vpop.f32.mrf.mxu0
      %v1718 = vadd.f32 %v1041, %v1717
      %v1719 = vpop.f32.mrf.mxu0
      %v1720 = vadd.f32 %v1045, %v1719
      %v1721 = vpop.f32.mrf.mxu0
      %v1722 = vadd.f32 %v1041, %v1721
      %v1723 = vpop.f32.mrf.mxu0
      %v1724 = vadd.f32 %v1045, %v1723
      %1725 = vmatprep.mubr.bf16.mxu0 %v959
      %1726 = vmatmul.mubr.bf16.gmra.mxu0 %v958
      %v1727 = vpop.f32.mrf.mxu0
      %v1728 = vadd.f32 %v1041, %v1727
      %v1729 = vpop.f32.mrf.mxu0
      %v1730 = vadd.f32 %v1045, %v1729
      %v1731 = vpop.f32.mrf.mxu0
      %v1732 = vadd.f32 %v1041, %v1731
      %v1733 = vpop.f32.mrf.mxu0
      %v1734 = vadd.f32 %v1045, %v1733
      %1735 = vmatprep.mubr.bf16.mxu0 %v961
      %1736 = vmatmul.mubr.bf16.gmra.mxu0 %v960
      %v1737 = vpop.f32.mrf.mxu0
      %v1738 = vadd.f32 %v1041, %v1737
      %v1739 = vpop.f32.mrf.mxu0
      %v1740 = vadd.f32 %v1045, %v1739
      %v1741 = vpop.f32.mrf.mxu0
      %v1742 = vadd.f32 %v1041, %v1741
      %v1743 = vpop.f32.mrf.mxu0
      %v1744 = vadd.f32 %v1045, %v1743
      %1745 = vmatprep.mubr.bf16.mxu0 %v963
      %1746 = vmatmul.mubr.bf16.gmra.mxu0 %v962
      %v1747 = vpop.f32.mrf.mxu0
      %v1748 = vadd.f32 %v1041, %v1747
      %v1749 = vpop.f32.mrf.mxu0
      %v1750 = vadd.f32 %v1045, %v1749
      %v1751 = vpop.f32.mrf.mxu0
      %v1752 = vadd.f32 %v1041, %v1751
      %v1753 = vpop.f32.mrf.mxu0
      %v1754 = vadd.f32 %v1045, %v1753
      %1755 = vdwg.mxu0
      %v1756 = vmul.f32 %v1405, %v1405
      %v1757 = vmul.f32 %v1407, %v1407
      %v1758 = vmul.f32 %v1598, %v1598
      %v1759 = vmul.f32 %v1600, %v1600
      %v1760 = vmul.f32 %v1409, %v1409
      %v1761 = vmul.f32 %v1411, %v1411
      %v1762 = vmul.f32 %v1602, %v1602
      %v1763 = vmul.f32 %v1604, %v1604
      %v1764 = vmul.f32 %v1415, %v1415
      %v1765 = vmul.f32 %v1417, %v1417
      %v1766 = vmul.f32 %v1608, %v1608
      %v1767 = vmul.f32 %v1610, %v1610
      %v1768 = vmul.f32 %v1419, %v1419
      %v1769 = vmul.f32 %v1421, %v1421
      %v1770 = vmul.f32 %v1612, %v1612
      %v1771 = vmul.f32 %v1614, %v1614
      %v1772 = vmul.f32 %v1425, %v1425
      %v1773 = vmul.f32 %v1427, %v1427
      %v1774 = vmul.f32 %v1618, %v1618
      %v1775 = vmul.f32 %v1620, %v1620
      %v1776 = vmul.f32 %v1429, %v1429
      %v1777 = vmul.f32 %v1431, %v1431
      %v1778 = vmul.f32 %v1622, %v1622
      %v1779 = vmul.f32 %v1624, %v1624
      %v1780 = vmul.f32 %v1435, %v1435
      %v1781 = vmul.f32 %v1437, %v1437
      %v1782 = vmul.f32 %v1628, %v1628
      %v1783 = vmul.f32 %v1630, %v1630
      %v1784 = vmul.f32 %v1439, %v1439
      %v1785 = vmul.f32 %v1441, %v1441
      %v1786 = vmul.f32 %v1632, %v1632
      %v1787 = vmul.f32 %v1634, %v1634
      %v1788 = vmul.f32 %v1445, %v1445
      %v1789 = vmul.f32 %v1447, %v1447
      %v1790 = vmul.f32 %v1638, %v1638
      %v1791 = vmul.f32 %v1640, %v1640
      %v1792 = vmul.f32 %v1449, %v1449
      %v1793 = vmul.f32 %v1451, %v1451
      %v1794 = vmul.f32 %v1642, %v1642
      %v1795 = vmul.f32 %v1644, %v1644
      %v1796 = vmul.f32 %v1455, %v1455
      %v1797 = vmul.f32 %v1457, %v1457
      %v1798 = vmul.f32 %v1648, %v1648
      %v1799 = vmul.f32 %v1650, %v1650
      %v1800 = vmul.f32 %v1459, %v1459
      %v1801 = vmul.f32 %v1461, %v1461
      %v1802 = vmul.f32 %v1652, %v1652
      %v1803 = vmul.f32 %v1654, %v1654
      %v1804 = vmul.f32 %v1465, %v1465
      %v1805 = vmul.f32 %v1467, %v1467
      %v1806 = vmul.f32 %v1658, %v1658
      %v1807 = vmul.f32 %v1660, %v1660
      %v1808 = vmul.f32 %v1469, %v1469
      %v1809 = vmul.f32 %v1471, %v1471
      %v1810 = vmul.f32 %v1662, %v1662
      %v1811 = vmul.f32 %v1664, %v1664
      %v1812 = vmul.f32 %v1475, %v1475
      %v1813 = vmul.f32 %v1477, %v1477
      %v1814 = vmul.f32 %v1668, %v1668
      %v1815 = vmul.f32 %v1670, %v1670
      %v1816 = vmul.f32 %v1479, %v1479
      %v1817 = vmul.f32 %v1481, %v1481
      %v1818 = vmul.f32 %v1672, %v1672
      %v1819 = vmul.f32 %v1674, %v1674
      %v1820 = vmul.f32 %v1485, %v1485
      %v1821 = vmul.f32 %v1487, %v1487
      %v1822 = vmul.f32 %v1678, %v1678
      %v1823 = vmul.f32 %v1680, %v1680
      %v1824 = vmul.f32 %v1489, %v1489
      %v1825 = vmul.f32 %v1491, %v1491
      %v1826 = vmul.f32 %v1682, %v1682
      %v1827 = vmul.f32 %v1684, %v1684
      %v1828 = vmul.f32 %v1495, %v1495
      %v1829 = vmul.f32 %v1497, %v1497
      %v1830 = vmul.f32 %v1688, %v1688
      %v1831 = vmul.f32 %v1690, %v1690
      %v1832 = vmul.f32 %v1499, %v1499
      %v1833 = vmul.f32 %v1501, %v1501
      %v1834 = vmul.f32 %v1692, %v1692
      %v1835 = vmul.f32 %v1694, %v1694
      %v1836 = vmul.f32 %v1505, %v1505
      %v1837 = vmul.f32 %v1507, %v1507
      %v1838 = vmul.f32 %v1698, %v1698
      %v1839 = vmul.f32 %v1700, %v1700
      %v1840 = vmul.f32 %v1509, %v1509
      %v1841 = vmul.f32 %v1511, %v1511
      %v1842 = vmul.f32 %v1702, %v1702
      %v1843 = vmul.f32 %v1704, %v1704
      %v1844 = vmul.f32 %v1515, %v1515
      %v1845 = vmul.f32 %v1517, %v1517
      %v1846 = vmul.f32 %v1708, %v1708
      %v1847 = vmul.f32 %v1710, %v1710
      %v1848 = vmul.f32 %v1519, %v1519
      %v1849 = vmul.f32 %v1521, %v1521
      %v1850 = vmul.f32 %v1712, %v1712
      %v1851 = vmul.f32 %v1714, %v1714
      %v1852 = vmul.f32 %v1525, %v1525
      %v1853 = vmul.f32 %v1527, %v1527
      %v1854 = vmul.f32 %v1718, %v1718
      %v1855 = vmul.f32 %v1720, %v1720
      %v1856 = vmul.f32 %v1529, %v1529
      %v1857 = vmul.f32 %v1531, %v1531
      %v1858 = vmul.f32 %v1722, %v1722
      %v1859 = vmul.f32 %v1724, %v1724
      %v1860 = vmul.f32 %v1535, %v1535
      %v1861 = vmul.f32 %v1537, %v1537
      %v1862 = vmul.f32 %v1728, %v1728
      %v1863 = vmul.f32 %v1730, %v1730
      %v1864 = vmul.f32 %v1539, %v1539
      %v1865 = vmul.f32 %v1541, %v1541
      %v1866 = vmul.f32 %v1732, %v1732
      %v1867 = vmul.f32 %v1734, %v1734
      %v1868 = vmul.f32 %v1545, %v1545
      %v1869 = vmul.f32 %v1547, %v1547
      %v1870 = vmul.f32 %v1738, %v1738
      %v1871 = vmul.f32 %v1740, %v1740
      %v1872 = vmul.f32 %v1549, %v1549
      %v1873 = vmul.f32 %v1551, %v1551
      %v1874 = vmul.f32 %v1742, %v1742
      %v1875 = vmul.f32 %v1744, %v1744
      %v1876 = vmul.f32 %v1555, %v1555
      %v1877 = vmul.f32 %v1557, %v1557
      %v1878 = vmul.f32 %v1748, %v1748
      %v1879 = vmul.f32 %v1750, %v1750
      %v1880 = vmul.f32 %v1559, %v1559
      %v1881 = vmul.f32 %v1561, %v1561
      %v1882 = vmul.f32 %v1752, %v1752
      %v1883 = vmul.f32 %v1754, %v1754
      %v1884 = vadd.f32 %v1756, %v1757
      %v1885 = vadd.f32 %v1884, %v1758
      %v1886 = vadd.f32 %v1885, %v1759
      %1887 = vadd.xlane.f32.xlu0 %v1886
      %v1888 = vpop.xlane.xlu0 %1887
      %v1889 = vadd.f32 %v1760, %v1761
      %v1890 = vadd.f32 %v1889, %v1762
      %v1891 = vadd.f32 %v1890, %v1763
      %1892 = vadd.xlane.f32.xlu0 %v1891
      %v1893 = vpop.xlane.xlu0 %1892
      %v1894 = vadd.f32 %v1764, %v1765
      %v1895 = vadd.f32 %v1894, %v1766
      %v1896 = vadd.f32 %v1895, %v1767
      %1897 = vadd.xlane.f32.xlu0 %v1896
      %v1898 = vpop.xlane.xlu0 %1897
      %v1899 = vadd.f32 %v1768, %v1769
      %v1900 = vadd.f32 %v1899, %v1770
      %v1901 = vadd.f32 %v1900, %v1771
      %1902 = vadd.xlane.f32.xlu0 %v1901
      %v1903 = vpop.xlane.xlu0 %1902
      %v1904 = vadd.f32 %v1772, %v1773
      %v1905 = vadd.f32 %v1904, %v1774
      %v1906 = vadd.f32 %v1905, %v1775
      %1907 = vadd.xlane.f32.xlu0 %v1906
      %v1908 = vpop.xlane.xlu0 %1907
      %v1909 = vadd.f32 %v1776, %v1777
      %v1910 = vadd.f32 %v1909, %v1778
      %v1911 = vadd.f32 %v1910, %v1779
      %1912 = vadd.xlane.f32.xlu0 %v1911
      %v1913 = vpop.xlane.xlu0 %1912
      %v1914 = vadd.f32 %v1780, %v1781
      %v1915 = vadd.f32 %v1914, %v1782
      %v1916 = vadd.f32 %v1915, %v1783
      %1917 = vadd.xlane.f32.xlu0 %v1916
      %v1918 = vpop.xlane.xlu0 %1917
      %v1919 = vadd.f32 %v1784, %v1785
      %v1920 = vadd.f32 %v1919, %v1786
      %v1921 = vadd.f32 %v1920, %v1787
      %1922 = vadd.xlane.f32.xlu0 %v1921
      %v1923 = vpop.xlane.xlu0 %1922
      %v1924 = vadd.f32 %v1788, %v1789
      %v1925 = vadd.f32 %v1924, %v1790
      %v1926 = vadd.f32 %v1925, %v1791
      %1927 = vadd.xlane.f32.xlu0 %v1926
      %v1928 = vpop.xlane.xlu0 %1927
      %v1929 = vadd.f32 %v1792, %v1793
      %v1930 = vadd.f32 %v1929, %v1794
      %v1931 = vadd.f32 %v1930, %v1795
      %1932 = vadd.xlane.f32.xlu0 %v1931
      %v1933 = vpop.xlane.xlu0 %1932
      %v1934 = vadd.f32 %v1796, %v1797
      %v1935 = vadd.f32 %v1934, %v1798
      %v1936 = vadd.f32 %v1935, %v1799
      %1937 = vadd.xlane.f32.xlu0 %v1936
      %v1938 = vpop.xlane.xlu0 %1937
      %v1939 = vadd.f32 %v1800, %v1801
      %v1940 = vadd.f32 %v1939, %v1802
      %v1941 = vadd.f32 %v1940, %v1803
      %1942 = vadd.xlane.f32.xlu0 %v1941
      %v1943 = vpop.xlane.xlu0 %1942
      %v1944 = vadd.f32 %v1804, %v1805
      %v1945 = vadd.f32 %v1944, %v1806
      %v1946 = vadd.f32 %v1945, %v1807
      %1947 = vadd.xlane.f32.xlu0 %v1946
      %v1948 = vpop.xlane.xlu0 %1947
      %v1949 = vadd.f32 %v1808, %v1809
      %v1950 = vadd.f32 %v1949, %v1810
      %v1951 = vadd.f32 %v1950, %v1811
      %1952 = vadd.xlane.f32.xlu0 %v1951
      %v1953 = vpop.xlane.xlu0 %1952
      %v1954 = vadd.f32 %v1812, %v1813
      %v1955 = vadd.f32 %v1954, %v1814
      %v1956 = vadd.f32 %v1955, %v1815
      %1957 = vadd.xlane.f32.xlu0 %v1956
      %v1958 = vpop.xlane.xlu0 %1957
      %v1959 = vadd.f32 %v1816, %v1817
      %v1960 = vadd.f32 %v1959, %v1818
      %v1961 = vadd.f32 %v1960, %v1819
      %1962 = vadd.xlane.f32.xlu0 %v1961
      %v1963 = vpop.xlane.xlu0 %1962
      %v1964 = vadd.f32 %v1820, %v1821
      %v1965 = vadd.f32 %v1964, %v1822
      %v1966 = vadd.f32 %v1965, %v1823
      %1967 = vadd.xlane.f32.xlu0 %v1966
      %v1968 = vpop.xlane.xlu0 %1967
      %v1969 = vadd.f32 %v1824, %v1825
      %v1970 = vadd.f32 %v1969, %v1826
      %v1971 = vadd.f32 %v1970, %v1827
      %1972 = vadd.xlane.f32.xlu0 %v1971
      %v1973 = vpop.xlane.xlu0 %1972
      %v1974 = vadd.f32 %v1828, %v1829
      %v1975 = vadd.f32 %v1974, %v1830
      %v1976 = vadd.f32 %v1975, %v1831
      %1977 = vadd.xlane.f32.xlu0 %v1976
      %v1978 = vpop.xlane.xlu0 %1977
      %v1979 = vadd.f32 %v1832, %v1833
      %v1980 = vadd.f32 %v1979, %v1834
      %v1981 = vadd.f32 %v1980, %v1835
      %1982 = vadd.xlane.f32.xlu0 %v1981
      %v1983 = vpop.xlane.xlu0 %1982
      %v1984 = vadd.f32 %v1836, %v1837
      %v1985 = vadd.f32 %v1984, %v1838
      %v1986 = vadd.f32 %v1985, %v1839
      %1987 = vadd.xlane.f32.xlu0 %v1986
      %v1988 = vpop.xlane.xlu0 %1987
      %v1989 = vadd.f32 %v1840, %v1841
      %v1990 = vadd.f32 %v1989, %v1842
      %v1991 = vadd.f32 %v1990, %v1843
      %1992 = vadd.xlane.f32.xlu0 %v1991
      %v1993 = vpop.xlane.xlu0 %1992
      %v1994 = vadd.f32 %v1844, %v1845
      %v1995 = vadd.f32 %v1994, %v1846
      %v1996 = vadd.f32 %v1995, %v1847
      %1997 = vadd.xlane.f32.xlu0 %v1996
      %v1998 = vpop.xlane.xlu0 %1997
      %v1999 = vadd.f32 %v1848, %v1849
      %v2000 = vadd.f32 %v1999, %v1850
      %v2001 = vadd.f32 %v2000, %v1851
      %2002 = vadd.xlane.f32.xlu0 %v2001
      %v2003 = vpop.xlane.xlu0 %2002
      %v2004 = vadd.f32 %v1852, %v1853
      %v2005 = vadd.f32 %v2004, %v1854
      %v2006 = vadd.f32 %v2005, %v1855
      %2007 = vadd.xlane.f32.xlu0 %v2006
      %v2008 = vpop.xlane.xlu0 %2007
      %v2009 = vadd.f32 %v1856, %v1857
      %v2010 = vadd.f32 %v2009, %v1858
      %v2011 = vadd.f32 %v2010, %v1859
      %2012 = vadd.xlane.f32.xlu0 %v2011
      %v2013 = vpop.xlane.xlu0 %2012
      %v2014 = vadd.f32 %v1860, %v1861
      %v2015 = vadd.f32 %v2014, %v1862
      %v2016 = vadd.f32 %v2015, %v1863
      %2017 = vadd.xlane.f32.xlu0 %v2016
      %v2018 = vpop.xlane.xlu0 %2017
      %v2019 = vadd.f32 %v1864, %v1865
      %v2020 = vadd.f32 %v2019, %v1866
      %v2021 = vadd.f32 %v2020, %v1867
      %2022 = vadd.xlane.f32.xlu0 %v2021
      %v2023 = vpop.xlane.xlu0 %2022
      %v2024 = vadd.f32 %v1868, %v1869
      %v2025 = vadd.f32 %v2024, %v1870
      %v2026 = vadd.f32 %v2025, %v1871
      %2027 = vadd.xlane.f32.xlu0 %v2026
      %v2028 = vpop.xlane.xlu0 %2027
      %v2029 = vadd.f32 %v1872, %v1873
      %v2030 = vadd.f32 %v2029, %v1874
      %v2031 = vadd.f32 %v2030, %v1875
      %2032 = vadd.xlane.f32.xlu0 %v2031
      %v2033 = vpop.xlane.xlu0 %2032
      %v2034 = vadd.f32 %v1876, %v1877
      %v2035 = vadd.f32 %v2034, %v1878
      %v2036 = vadd.f32 %v2035, %v1879
      %2037 = vadd.xlane.f32.xlu0 %v2036
      %v2038 = vpop.xlane.xlu0 %2037
      %v2039 = vadd.f32 %v1880, %v1881
      %v2040 = vadd.f32 %v2039, %v1882
      %v2041 = vadd.f32 %v2040, %v1883
      %2042 = vadd.xlane.f32.xlu0 %v2041
      %v2043 = vpop.xlane.xlu0 %2042
      %v2044 = vmax.f32 %v1888, 1e-24
      %v2045 = vmax.f32 %v1893, 1e-24
      %v2046 = vmax.f32 %v1898, 1e-24
      %v2047 = vmax.f32 %v1903, 1e-24
      %v2048 = vmax.f32 %v1908, 1e-24
      %v2049 = vmax.f32 %v1913, 1e-24
      %v2050 = vmax.f32 %v1918, 1e-24
      %v2051 = vmax.f32 %v1923, 1e-24
      %v2052 = vmax.f32 %v1928, 1e-24
      %v2053 = vmax.f32 %v1933, 1e-24
      %v2054 = vmax.f32 %v1938, 1e-24
      %v2055 = vmax.f32 %v1943, 1e-24
      %v2056 = vmax.f32 %v1948, 1e-24
      %v2057 = vmax.f32 %v1953, 1e-24
      %v2058 = vmax.f32 %v1958, 1e-24
      %v2059 = vmax.f32 %v1963, 1e-24
      %v2060 = vmax.f32 %v1968, 1e-24
      %v2061 = vmax.f32 %v1973, 1e-24
      %v2062 = vmax.f32 %v1978, 1e-24
      %v2063 = vmax.f32 %v1983, 1e-24
      %v2064 = vmax.f32 %v1988, 1e-24
      %v2065 = vmax.f32 %v1993, 1e-24
      %v2066 = vmax.f32 %v1998, 1e-24
      %v2067 = vmax.f32 %v2003, 1e-24
      %v2068 = vmax.f32 %v2008, 1e-24
      %v2069 = vmax.f32 %v2013, 1e-24
      %v2070 = vmax.f32 %v2018, 1e-24
      %v2071 = vmax.f32 %v2023, 1e-24
      %v2072 = vmax.f32 %v2028, 1e-24
      %v2073 = vmax.f32 %v2033, 1e-24
      %v2074 = vmax.f32 %v2038, 1e-24
      %v2075 = vmax.f32 %v2043, 1e-24
      %v2076 = vrsqrt.pop %v2044
      %v2077 = vrsqrt.pop %v2045
      %v2078 = vrsqrt.pop %v2046
      %v2079 = vrsqrt.pop %v2047
      %v2080 = vrsqrt.pop %v2048
      %v2081 = vrsqrt.pop %v2049
      %v2082 = vrsqrt.pop %v2050
      %v2083 = vrsqrt.pop %v2051
      %v2084 = vrsqrt.pop %v2052
      %v2085 = vrsqrt.pop %v2053
      %v2086 = vrsqrt.pop %v2054
      %v2087 = vrsqrt.pop %v2055
      %v2088 = vrsqrt.pop %v2056
      %v2089 = vrsqrt.pop %v2057
      %v2090 = vrsqrt.pop %v2058
      %v2091 = vrsqrt.pop %v2059
      %v2092 = vrsqrt.pop %v2060
      %v2093 = vrsqrt.pop %v2061
      %v2094 = vrsqrt.pop %v2062
      %v2095 = vrsqrt.pop %v2063
      %v2096 = vrsqrt.pop %v2064
      %v2097 = vrsqrt.pop %v2065
      %v2098 = vrsqrt.pop %v2066
      %v2099 = vrsqrt.pop %v2067
      %v2100 = vrsqrt.pop %v2068
      %v2101 = vrsqrt.pop %v2069
      %v2102 = vrsqrt.pop %v2070
      %v2103 = vrsqrt.pop %v2071
      %v2104 = vrsqrt.pop %v2072
      %v2105 = vrsqrt.pop %v2073
      %v2106 = vrsqrt.pop %v2074
      %v2107 = vrsqrt.pop %v2075
      %v2108 = vmul.f32 %v1405, %v2076
      %v2109 = vmul.f32 %v1407, %v2076
      %v2110 = vmul.f32 %v1598, %v2076
      %v2111 = vmul.f32 %v1600, %v2076
      %v2112 = vmul.f32 %v1409, %v2077
      %v2113 = vmul.f32 %v1411, %v2077
      %v2114 = vmul.f32 %v1602, %v2077
      %v2115 = vmul.f32 %v1604, %v2077
      %v2116 = vmul.f32 %v1415, %v2078
      %v2117 = vmul.f32 %v1417, %v2078
      %v2118 = vmul.f32 %v1608, %v2078
      %v2119 = vmul.f32 %v1610, %v2078
      %v2120 = vmul.f32 %v1419, %v2079
      %v2121 = vmul.f32 %v1421, %v2079
      %v2122 = vmul.f32 %v1612, %v2079
      %v2123 = vmul.f32 %v1614, %v2079
      %v2124 = vmul.f32 %v1425, %v2080
      %v2125 = vmul.f32 %v1427, %v2080
      %v2126 = vmul.f32 %v1618, %v2080
      %v2127 = vmul.f32 %v1620, %v2080
      %v2128 = vmul.f32 %v1429, %v2081
      %v2129 = vmul.f32 %v1431, %v2081
      %v2130 = vmul.f32 %v1622, %v2081
      %v2131 = vmul.f32 %v1624, %v2081
      %v2132 = vmul.f32 %v1435, %v2082
      %v2133 = vmul.f32 %v1437, %v2082
      %v2134 = vmul.f32 %v1628, %v2082
      %v2135 = vmul.f32 %v1630, %v2082
      %v2136 = vmul.f32 %v1439, %v2083
      %v2137 = vmul.f32 %v1441, %v2083
      %v2138 = vmul.f32 %v1632, %v2083
      %v2139 = vmul.f32 %v1634, %v2083
      %v2140 = vmul.f32 %v1445, %v2084
      %v2141 = vmul.f32 %v1447, %v2084
      %v2142 = vmul.f32 %v1638, %v2084
      %v2143 = vmul.f32 %v1640, %v2084
      %v2144 = vmul.f32 %v1449, %v2085
      %v2145 = vmul.f32 %v1451, %v2085
      %v2146 = vmul.f32 %v1642, %v2085
      %v2147 = vmul.f32 %v1644, %v2085
      %v2148 = vmul.f32 %v1455, %v2086
      %v2149 = vmul.f32 %v1457, %v2086
      %v2150 = vmul.f32 %v1648, %v2086
      %v2151 = vmul.f32 %v1650, %v2086
      %v2152 = vmul.f32 %v1459, %v2087
      %v2153 = vmul.f32 %v1461, %v2087
      %v2154 = vmul.f32 %v1652, %v2087
      %v2155 = vmul.f32 %v1654, %v2087
      %v2156 = vmul.f32 %v1465, %v2088
      %v2157 = vmul.f32 %v1467, %v2088
      %v2158 = vmul.f32 %v1658, %v2088
      %v2159 = vmul.f32 %v1660, %v2088
      %v2160 = vmul.f32 %v1469, %v2089
      %v2161 = vmul.f32 %v1471, %v2089
      %v2162 = vmul.f32 %v1662, %v2089
      %v2163 = vmul.f32 %v1664, %v2089
      %v2164 = vmul.f32 %v1475, %v2090
      %v2165 = vmul.f32 %v1477, %v2090
      %v2166 = vmul.f32 %v1668, %v2090
      %v2167 = vmul.f32 %v1670, %v2090
      %v2168 = vmul.f32 %v1479, %v2091
      %v2169 = vmul.f32 %v1481, %v2091
      %v2170 = vmul.f32 %v1672, %v2091
      %v2171 = vmul.f32 %v1674, %v2091
      %v2172 = vmul.f32 %v1485, %v2092
      %v2173 = vmul.f32 %v1487, %v2092
      %v2174 = vmul.f32 %v1678, %v2092
      %v2175 = vmul.f32 %v1680, %v2092
      %v2176 = vmul.f32 %v1489, %v2093
      %v2177 = vmul.f32 %v1491, %v2093
      %v2178 = vmul.f32 %v1682, %v2093
      %v2179 = vmul.f32 %v1684, %v2093
      %v2180 = vmul.f32 %v1495, %v2094
      %v2181 = vmul.f32 %v1497, %v2094
      %v2182 = vmul.f32 %v1688, %v2094
      %v2183 = vmul.f32 %v1690, %v2094
      %v2184 = vmul.f32 %v1499, %v2095
      %v2185 = vmul.f32 %v1501, %v2095
      %v2186 = vmul.f32 %v1692, %v2095
      %v2187 = vmul.f32 %v1694, %v2095
      %v2188 = vmul.f32 %v1505, %v2096
      %v2189 = vmul.f32 %v1507, %v2096
      %v2190 = vmul.f32 %v1698, %v2096
      %v2191 = vmul.f32 %v1700, %v2096
      %v2192 = vmul.f32 %v1509, %v2097
      %v2193 = vmul.f32 %v1511, %v2097
      %v2194 = vmul.f32 %v1702, %v2097
      %v2195 = vmul.f32 %v1704, %v2097
      %v2196 = vmul.f32 %v1515, %v2098
      %v2197 = vmul.f32 %v1517, %v2098
      %v2198 = vmul.f32 %v1708, %v2098
      %v2199 = vmul.f32 %v1710, %v2098
      %v2200 = vmul.f32 %v1519, %v2099
      %v2201 = vmul.f32 %v1521, %v2099
      %v2202 = vmul.f32 %v1712, %v2099
      %v2203 = vmul.f32 %v1714, %v2099
      %v2204 = vmul.f32 %v1525, %v2100
      %v2205 = vmul.f32 %v1527, %v2100
      %v2206 = vmul.f32 %v1718, %v2100
      %v2207 = vmul.f32 %v1720, %v2100
      %v2208 = vmul.f32 %v1529, %v2101
      %v2209 = vmul.f32 %v1531, %v2101
      %v2210 = vmul.f32 %v1722, %v2101
      %v2211 = vmul.f32 %v1724, %v2101
      %v2212 = vmul.f32 %v1535, %v2102
      %v2213 = vmul.f32 %v1537, %v2102
      %v2214 = vmul.f32 %v1728, %v2102
      %v2215 = vmul.f32 %v1730, %v2102
      %v2216 = vmul.f32 %v1539, %v2103
      %v2217 = vmul.f32 %v1541, %v2103
      %v2218 = vmul.f32 %v1732, %v2103
      %v2219 = vmul.f32 %v1734, %v2103
      %v2220 = vmul.f32 %v1545, %v2104
      %v2221 = vmul.f32 %v1547, %v2104
      %v2222 = vmul.f32 %v1738, %v2104
      %v2223 = vmul.f32 %v1740, %v2104
      %v2224 = vmul.f32 %v1549, %v2105
      %v2225 = vmul.f32 %v1551, %v2105
      %v2226 = vmul.f32 %v1742, %v2105
      %v2227 = vmul.f32 %v1744, %v2105
      %v2228 = vmul.f32 %v1555, %v2106
      %v2229 = vmul.f32 %v1557, %v2106
      %v2230 = vmul.f32 %v1748, %v2106
      %v2231 = vmul.f32 %v1750, %v2106
      %v2232 = vmul.f32 %v1559, %v2107
      %v2233 = vmul.f32 %v1561, %v2107
      %v2234 = vmul.f32 %v1752, %v2107
      %v2235 = vmul.f32 %v1754, %v2107
      %v2236 = vpack.c.bf16 %v2112, %v2108
      %v2237 = vpack.c.bf16 %v2113, %v2109
      %v2238 = vpack.c.bf16 %v2114, %v2110
      %v2239 = vpack.c.bf16 %v2115, %v2111
      %v2240 = vpack.c.bf16 %v2120, %v2116
      %v2241 = vpack.c.bf16 %v2121, %v2117
      %v2242 = vpack.c.bf16 %v2122, %v2118
      %v2243 = vpack.c.bf16 %v2123, %v2119
      %v2244 = vpack.c.bf16 %v2128, %v2124
      %v2245 = vpack.c.bf16 %v2129, %v2125
      %v2246 = vpack.c.bf16 %v2130, %v2126
      %v2247 = vpack.c.bf16 %v2131, %v2127
      %v2248 = vpack.c.bf16 %v2136, %v2132
      %v2249 = vpack.c.bf16 %v2137, %v2133
      %v2250 = vpack.c.bf16 %v2138, %v2134
      %v2251 = vpack.c.bf16 %v2139, %v2135
      %v2252 = vpack.c.bf16 %v2144, %v2140
      %v2253 = vpack.c.bf16 %v2145, %v2141
      %v2254 = vpack.c.bf16 %v2146, %v2142
      %v2255 = vpack.c.bf16 %v2147, %v2143
      %v2256 = vpack.c.bf16 %v2152, %v2148
      %v2257 = vpack.c.bf16 %v2153, %v2149
      %v2258 = vpack.c.bf16 %v2154, %v2150
      %v2259 = vpack.c.bf16 %v2155, %v2151
      %v2260 = vpack.c.bf16 %v2160, %v2156
      %v2261 = vpack.c.bf16 %v2161, %v2157
      %v2262 = vpack.c.bf16 %v2162, %v2158
      %v2263 = vpack.c.bf16 %v2163, %v2159
      %v2264 = vpack.c.bf16 %v2168, %v2164
      %v2265 = vpack.c.bf16 %v2169, %v2165
      %v2266 = vpack.c.bf16 %v2170, %v2166
      %v2267 = vpack.c.bf16 %v2171, %v2167
      %v2268 = vpack.c.bf16 %v2176, %v2172
      %v2269 = vpack.c.bf16 %v2177, %v2173
      %v2270 = vpack.c.bf16 %v2178, %v2174
      %v2271 = vpack.c.bf16 %v2179, %v2175
      %v2272 = vpack.c.bf16 %v2184, %v2180
      %v2273 = vpack.c.bf16 %v2185, %v2181
      %v2274 = vpack.c.bf16 %v2186, %v2182
      %v2275 = vpack.c.bf16 %v2187, %v2183
      %v2276 = vpack.c.bf16 %v2192, %v2188
      %v2277 = vpack.c.bf16 %v2193, %v2189
      %v2278 = vpack.c.bf16 %v2194, %v2190
      %v2279 = vpack.c.bf16 %v2195, %v2191
      %v2280 = vpack.c.bf16 %v2200, %v2196
      %v2281 = vpack.c.bf16 %v2201, %v2197
      %v2282 = vpack.c.bf16 %v2202, %v2198
      %v2283 = vpack.c.bf16 %v2203, %v2199
      %v2284 = vpack.c.bf16 %v2208, %v2204
      %v2285 = vpack.c.bf16 %v2209, %v2205
      %v2286 = vpack.c.bf16 %v2210, %v2206
      %v2287 = vpack.c.bf16 %v2211, %v2207
      %v2288 = vpack.c.bf16 %v2216, %v2212
      %v2289 = vpack.c.bf16 %v2217, %v2213
      %v2290 = vpack.c.bf16 %v2218, %v2214
      %v2291 = vpack.c.bf16 %v2219, %v2215
      %v2292 = vpack.c.bf16 %v2224, %v2220
      %v2293 = vpack.c.bf16 %v2225, %v2221
      %v2294 = vpack.c.bf16 %v2226, %v2222
      %v2295 = vpack.c.bf16 %v2227, %v2223
      %v2296 = vpack.c.bf16 %v2232, %v2228
      %v2297 = vpack.c.bf16 %v2233, %v2229
      %v2298 = vpack.c.bf16 %v2234, %v2230
      %v2299 = vpack.c.bf16 %v2235, %v2231
      %v2300 = vld [vmem:[%s0] sm:$0xff]
      %v2301 = vld [vmem:[%s0 + $0x8] sm:$0xff]
      %v2304 = vunpack.c.l.b16 %v2300
      %v2305 = vunpack.c.h.b16 %v2300
      %v2306 = vunpack.c.l.b16 %v2301
      %v2307 = vunpack.c.h.b16 %v2301
      %v2308 = vpack.c.b16 %v2304, %v2304
      %v2309 = vpack.c.b16 %v2305, %v2305
      %v2310 = vpack.c.b16 %v2306, %v2306
      %v2311 = vpack.c.b16 %v2307, %v2307
      %2316 = vmatprep.subr.bf16.mxu0 %v2265
      %2317 = vmatpush1.bf16.xpose.msra.mxu0 %v2264
      %2318 = vmatprep.subr.bf16.mxu0 %v2261
      %2319 = vmatpush1.bf16.xpose.msra.mxu0 %v2260
      %2320 = vmatprep.subr.bf16.mxu0 %v2257
      %2321 = vmatpush1.bf16.xpose.msra.mxu0 %v2256
      %2322 = vmatprep.subr.bf16.mxu0 %v2253
      %2323 = vmatpush1.bf16.xpose.msra.mxu0 %v2252
      %2324 = vmatprep.subr.bf16.mxu0 %v2249
      %2325 = vmatpush1.bf16.xpose.msra.mxu0 %v2248
      %2326 = vmatprep.subr.bf16.mxu0 %v2245
      %2327 = vmatpush1.bf16.xpose.msra.mxu0 %v2244
      %2328 = vmatprep.subr.bf16.mxu0 %v2241
      %2329 = vmatpush1.bf16.xpose.msra.mxu0 %v2240
      %2330 = vmatprep.subr.bf16.mxu0 %v2237
      %2331 = vmatpush1.bf16.xpose.msra.mxu0 %v2236
      %2332 = vmatprep.subr.bf16.mxu0 %v2297
      %2333 = vmatpush2.bf16.xpose.msra.mxu0 %v2296
      %2334 = vmatprep.subr.bf16.mxu0 %v2293
      %2335 = vmatpush2.bf16.xpose.msra.mxu0 %v2292
      %2336 = vmatprep.subr.bf16.mxu0 %v2289
      %2337 = vmatpush2.bf16.xpose.msra.mxu0 %v2288
      %2338 = vmatprep.subr.bf16.mxu0 %v2285
      %2339 = vmatpush2.bf16.xpose.msra.mxu0 %v2284
      %2340 = vmatprep.subr.bf16.mxu0 %v2281
      %2341 = vmatpush2.bf16.xpose.msra.mxu0 %v2280
      %2342 = vmatprep.subr.bf16.mxu0 %v2277
      %2343 = vmatpush2.bf16.xpose.msra.mxu0 %v2276
      %2344 = vmatprep.subr.bf16.mxu0 %v2273
      %2345 = vmatpush2.bf16.xpose.msra.mxu0 %v2272
      %2346 = vmatprep.subr.bf16.mxu0 %v2269
      %2347 = vmatpush2.bf16.xpose.msra.mxu0 %v2268
      %2348 = vmatprep.mubr.bf16.mxu0 %v2309
      %2349 = vmatmul.mubr.bf16.gmra.mxu0 %v2308
      %v2350 = vpop.f32.mrf.mxu0
      %v2351 = vadd.f32 0.0, %v2350
      %v2352 = vpop.f32.mrf.mxu0
      %v2353 = vadd.f32 0.0, %v2352
      %v2354 = vpop.f32.mrf.mxu0
      %v2355 = vpop.f32.mrf.mxu0
      %2356 = vdwg.mxu0
      %2357 = vmatprep.subr.bf16.mxu0 %v2267
      %2358 = vmatpush1.bf16.xpose.msra.mxu0 %v2266
      %2359 = vmatprep.subr.bf16.mxu0 %v2263
      %2360 = vmatpush1.bf16.xpose.msra.mxu0 %v2262
      %2361 = vmatprep.subr.bf16.mxu0 %v2259
      %2362 = vmatpush1.bf16.xpose.msra.mxu0 %v2258
      %2363 = vmatprep.subr.bf16.mxu0 %v2255
      %2364 = vmatpush1.bf16.xpose.msra.mxu0 %v2254
      %2365 = vmatprep.subr.bf16.mxu0 %v2251
      %2366 = vmatpush1.bf16.xpose.msra.mxu0 %v2250
      %2367 = vmatprep.subr.bf16.mxu0 %v2247
      %2368 = vmatpush1.bf16.xpose.msra.mxu0 %v2246
      %2369 = vmatprep.subr.bf16.mxu0 %v2243
      %2370 = vmatpush1.bf16.xpose.msra.mxu0 %v2242
      %2371 = vmatprep.subr.bf16.mxu0 %v2239
      %2372 = vmatpush1.bf16.xpose.msra.mxu0 %v2238
      %2373 = vmatprep.subr.bf16.mxu0 %v2299
      %2374 = vmatpush2.bf16.xpose.msra.mxu0 %v2298
      %2375 = vmatprep.subr.bf16.mxu0 %v2295
      %2376 = vmatpush2.bf16.xpose.msra.mxu0 %v2294
      %2377 = vmatprep.subr.bf16.mxu0 %v2291
      %2378 = vmatpush2.bf16.xpose.msra.mxu0 %v2290
      %2379 = vmatprep.subr.bf16.mxu0 %v2287
      %2380 = vmatpush2.bf16.xpose.msra.mxu0 %v2286
      %2381 = vmatprep.subr.bf16.mxu0 %v2283
      %2382 = vmatpush2.bf16.xpose.msra.mxu0 %v2282
      %2383 = vmatprep.subr.bf16.mxu0 %v2279
      %2384 = vmatpush2.bf16.xpose.msra.mxu0 %v2278
      %2385 = vmatprep.subr.bf16.mxu0 %v2275
      %2386 = vmatpush2.bf16.xpose.msra.mxu0 %v2274
      %2387 = vmatprep.subr.bf16.mxu0 %v2271
      %2388 = vmatpush2.bf16.xpose.msra.mxu0 %v2270
      %2389 = vmatprep.mubr.bf16.mxu0 %v2311
      %2390 = vmatmul.mubr.bf16.gmra.mxu0 %v2310
      %v2391 = vpop.f32.mrf.mxu0
      %v2392 = vadd.f32 %v2351, %v2391
      %v2393 = vpop.f32.mrf.mxu0
      %v2394 = vadd.f32 %v2353, %v2393
      %v2395 = vpop.f32.mrf.mxu0
      %v2396 = vpop.f32.mrf.mxu0
      %2397 = vdwg.mxu0
      %2398 = vst [vmem:[%s253] sm:$0xff] %v2392
      %2399 = vst [vmem:[%s253 + $0x8] sm:$0xff] %v2394
      %s2400 = smul.u32 2, %s17
      %p2401 = scmp.lt.s32.totalorder %s2400, 3
      %s2402 = scalar_select %p2401, %s2400, 3
      %s2403 = smul.addr %s2402, 8
      %s2404 = scalar_lea.vmem %s6, %s2403
      // Predicated region
      $region45: #{geoclip_forward.3} parent=43 // pred_check
        %p2405 = pneg %p166
      $region46: #{geoclip_forward.3} parent=43 // pred_check_branch
        %2407 = sbr.rel (%p2405) target = $region48
      $region47: #{geoclip_forward.3} parent=43 // pred_region
        %s2408 = smul.u32 2, %s17
      $region48: #{geoclip_forward.3} parent=43 // pred_fallthru
        _
    $region44: #{geoclip_forward.3} parent=5 // pred_fallthru
      _
    %p2409 = scmp.le.s32.totalorder 2, %s12
    // Predicated region
    $region49: #{geoclip_forward.3} parent=5 // pred_check
      %p2410 = pneg %p2409
    $region50: #{geoclip_forward.3} parent=5 // pred_check_branch
      %2412 = sbr.rel (%p2410) target = $region52
    $region51: #{geoclip_forward.3} parent=5 // pred_region
      %s2413 = ssub.s32 %s12, 2
      // Predicated region
      $region53: #{geoclip_forward.3} parent=51 // pred_check
        %p2414 = pneg %p172
      $region54: #{geoclip_forward.3} parent=51 // pred_check_branch
        %2416 = sbr.rel (%p2414) target = $region56
      $region55: #{geoclip_forward.3} parent=51 // pred_region
        %s2417 = smul.u32 2, %s18
        %p2418 = scmp.lt.s32.totalorder %s2417, 3
        %s2419 = scalar_select %p2418, %s2417, 3
        %s2420 = smul.addr %s2419, 8
        %s2421 = scalar_lea.vmem %s6, %s2420
      $region56: #{geoclip_forward.3} parent=51 // pred_fallthru
        _
    $region52: #{geoclip_forward.3} parent=5 // pred_fallthru
      _
  $region6: #{geoclip_forward.3} parent=0 // loop_footer
    %s16 = sadd.s32 1, %s12
  $region7: #{geoclip_forward.3} parent=0 // loop_footer_branch
    %11 = sbr.rel target = $region3
  $region8: #{geoclip_forward.3} parent=0 // loop_exit
    _

// kernel: geoclip_forward.2
$region0: #{geoclip_forward.2}
  #allocation0 [shape = 'u32[]', space=smem, size = 0x4, offset = 0x4, fixed_abs, tag = 'smem constant byte address 0x4 - core index']
  #allocation1 [shape = 'u32[144,128]{1,0:T(1,128)}', space=vmem, size = 0x12000, scoped, tag = 'internal scratch']
  #allocation2 [shape = 'f32[1,1]{1,0:T(1,128)S(6)}', space=smem, size = 0x200, scoped, tag = 'scoped memory for geoclip_forward.2']
  %s0 = inlined_call_operand.vmem [shape: bf16[8,768], index: 0, kind: input, shape index: {}]
  %s1 = inlined_call_operand.hbm [shape: bf16[768,768], index: 1, kind: input, shape index: {}]
  %s2 = inlined_call_operand.hbm [shape: f32[1,768], index: 2, kind: input, shape index: {}]
  %s3 = inlined_call_operand.hbm [shape: bf16[768,512], index: 3, kind: input, shape index: {}]
  %s4 = inlined_call_operand.hbm [shape: f32[1,512], index: 4, kind: input, shape index: {}]
  %s5 = inlined_call_operand.<no memory space> [shape: f32[1,1], index: 5, kind: input, shape index: {}]
  %s6 = inlined_call_operand.vmem [shape: bf16[8,512], index: 6, kind: output, shape index: {}]
  %s7 = sld [smem:[#allocation0]]
  $region50: #{geoclip_forward.2} parent=0
    _
  %s9 = ssub.s32 1, %s7
  %s10 = scalar_select 0, %s9, %s7
  %11 = sst [smem:[#allocation2]] %s5
  $region1: #{geoclip_forward.2} parent=0
    #allocation3 [shape = 'u8[1179648]{0}', space=vmem, size = 0x120000, scoped, tag = 'input window, operand 1, single buffered']
    #allocation4 [shape = 's32[1]{0}', space=sflag, size = 0x4, scoped, tag = 'scoped memory for geoclip_forward.2']
    #allocation5 [shape = 'u8[3072]{0}', space=vmem, size = 0xc00, scoped, tag = 'input window, operand 2, single buffered']
    #allocation6 [shape = 's32[1]{0}', space=sflag, size = 0x4, scoped, tag = 'scoped memory for geoclip_forward.2']
    #allocation7 [shape = 'u8[786432]{0}', space=vmem, size = 0xc0000, scoped, tag = 'input window, operand 3, single buffered']
    #allocation8 [shape = 'u8[2048]{0}', space=vmem, size = 0x800, scoped, tag = 'input window, operand 4, single buffered']
    #allocation9 [shape = 's32[1]{0}', space=sflag, size = 0x4, scoped, tag = 'scoped memory for geoclip_forward.2']
    %12 = vsyncpa [#allocation4], 0
    %13 = vsyncpa [#allocation6], 0
    %14 = vsyncpa [#allocation9], 0
    // Predicated region
    $region2: #{geoclip_forward.2} parent=1 // pred_check
      _
    $region3: #{geoclip_forward.2} parent=1 // pred_check_branch
      %16 = sbr.rel (0) target = $region5
    $region4: #{geoclip_forward.2} parent=1 // pred_region
      _
    $region5: #{geoclip_forward.2} parent=1 // pred_fallthru
      _
    // Predicated region
    $region6: #{geoclip_forward.2} parent=1 // pred_check
      _
    $region7: #{geoclip_forward.2} parent=1 // pred_check_branch
      %18 = sbr.rel (0) target = $region9
    $region8: #{geoclip_forward.2} parent=1 // pred_region
      %s20 = ssub.s32 36864, 36864
      %21 = vsyncadd [#allocation4], %s20
      %s22 = sshll.u32 [#allocation3], 4
      %s23 = int_to_ptr.vmem [resolvable:$true] %s22
      %28 = dma.hbm_to_vmem [thread:$0]  %s1, 36864, %s23, [#allocation4], 384, 384, 24
    $region9: #{geoclip_forward.2} parent=1 // pred_fallthru
      _
    // Predicated region
    $region10: #{geoclip_forward.2} parent=1 // pred_check
      _
    $region11: #{geoclip_forward.2} parent=1 // pred_check_branch
      %30 = sbr.rel (0) target = $region13
    $region12: #{geoclip_forward.2} parent=1 // pred_region
      %s32 = ssub.s32 96, 96
      %33 = vsyncadd [#allocation6], %s32
      %s35 = sshll.u32 [#allocation5], 4
      %s36 = int_to_ptr.vmem [resolvable:$true] %s35
      %38 = dma.hbm_to_vmem [thread:$0]  %s2, 96, %s36, [#allocation6]
    $region13: #{geoclip_forward.2} parent=1 // pred_fallthru
      _
    // Predicated region
    $region14: #{geoclip_forward.2} parent=1 // pred_check
      _
    $region15: #{geoclip_forward.2} parent=1 // pred_check_branch
      %40 = sbr.rel (0) target = $region17
    $region16: #{geoclip_forward.2} parent=1 // pred_region
      %s42 = ssub.s32 24576, 24576
      %43 = vsyncadd [#allocation6], %s42
      %s44 = sshll.u32 [#allocation7], 4
      %s45 = int_to_ptr.vmem [resolvable:$true] %s44
      %50 = dma.hbm_to_vmem [thread:$0]  %s3, 24576, %s45, [#allocation6], 256, 256, 16
    $region17: #{geoclip_forward.2} parent=1 // pred_fallthru
      _
    // Predicated region
    $region18: #{geoclip_forward.2} parent=1 // pred_check
      _
    $region19: #{geoclip_forward.2} parent=1 // pred_check_branch
      %52 = sbr.rel (0) target = $region21
    $region20: #{geoclip_forward.2} parent=1 // pred_region
      %s54 = ssub.s32 64, 64
      %55 = vsyncadd [#allocation9], %s54
      %s57 = sshll.u32 [#allocation8], 4
      %s58 = int_to_ptr.vmem [resolvable:$true] %s57
      %60 = dma.hbm_to_vmem [thread:$0]  %s4, 64, %s58, [#allocation9]
    $region21: #{geoclip_forward.2} parent=1 // pred_fallthru
      _
    // Predicated region
    $region22: #{geoclip_forward.2} parent=1 // pred_check
      _
    $region23: #{geoclip_forward.2} parent=1 // pred_check_branch
      %62 = sbr.rel (0) target = $region25
    $region24: #{geoclip_forward.2} parent=1 // pred_region
      _
    $region25: #{geoclip_forward.2} parent=1 // pred_fallthru
      _
    // Predicated region
    $region26: #{geoclip_forward.2} parent=1 // pred_check
      _
    $region27: #{geoclip_forward.2} parent=1 // pred_check_branch
      %64 = sbr.rel (0) target = $region29
    $region28: #{geoclip_forward.2} parent=1 // pred_region
      %65 = dma.done [#allocation4], 36864
    $region29: #{geoclip_forward.2} parent=1 // pred_fallthru
      _
    // Predicated region
    $region30: #{geoclip_forward.2} parent=1 // pred_check
      _
    $region31: #{geoclip_forward.2} parent=1 // pred_check_branch
      %67 = sbr.rel (0) target = $region33
    $region32: #{geoclip_forward.2} parent=1 // pred_region
      %68 = dma.done [#allocation6], 96
    $region33: #{geoclip_forward.2} parent=1 // pred_fallthru
      _
    // Predicated region
    $region34: #{geoclip_forward.2} parent=1 // pred_check
      _
    $region35: #{geoclip_forward.2} parent=1 // pred_check_branch
      %70 = sbr.rel (0) target = $region37
    $region36: #{geoclip_forward.2} parent=1 // pred_region
      %71 = dma.done [#allocation6], 24576
    $region37: #{geoclip_forward.2} parent=1 // pred_fallthru
      _
    // Predicated region
    $region38: #{geoclip_forward.2} parent=1 // pred_check
      _
    $region39: #{geoclip_forward.2} parent=1 // pred_check_branch
      %73 = sbr.rel (0) target = $region41
    $region40: #{geoclip_forward.2} parent=1 // pred_region
      %74 = dma.done [#allocation9], 64
    $region41: #{geoclip_forward.2} parent=1 // pred_fallthru
      _
    %v75 = vld [vmem:[%s0] sm:$0xff]
    %v76 = vld [vmem:[%s0 + $0x8] sm:$0xff]
    %v77 = vld [vmem:[%s0 + $0x10] sm:$0xff]
    %v78 = vld [vmem:[#allocation3] sm:$0xff]
    %v79 = vld [vmem:[#allocation3 + $0x8] sm:$0xff]
    %v80 = vld [vmem:[#allocation3 + $0x10] sm:$0xff]
    %v81 = vld [vmem:[#allocation3 + $0x18] sm:$0xff]
    %v82 = vld [vmem:[#allocation3 + $0x20] sm:$0xff]
    %v83 = vld [vmem:[#allocation3 + $0x28] sm:$0xff]
    %v84 = vld [vmem:[#allocation3 + $0x30] sm:$0xff]
    %v85 = vld [vmem:[#allocation3 + $0x38] sm:$0xff]
    %v86 = vld [vmem:[#allocation3 + $0x40] sm:$0xff]
    %v87 = vld [vmem:[#allocation3 + $0x48] sm:$0xff]
    %v88 = vld [vmem:[#allocation3 + $0x50] sm:$0xff]
    %v89 = vld [vmem:[#allocation3 + $0x58] sm:$0xff]
    %v90 = vld [vmem:[#allocation3 + $0x60] sm:$0xff]
    %v91 = vld [vmem:[#allocation3 + $0x68] sm:$0xff]
    %v92 = vld [vmem:[#allocation3 + $0x70] sm:$0xff]
    %v93 = vld [vmem:[#allocation3 + $0x78] sm:$0xff]
    %v94 = vld [vmem:[#allocation3 + $0x80] sm:$0xff]
    %v95 = vld [vmem:[#allocation3 + $0x88] sm:$0xff]
    %v96 = vld [vmem:[#allocation3 + $0x90] sm:$0xff]
    %v97 = vld [vmem:[#allocation3 + $0x98] sm:$0xff]
    %v98 = vld [vmem:[#allocation3 + $0xa0] sm:$0xff]
    %v99 = vld [vmem:[#allocation3 + $0xa8] sm:$0xff]
    %v100 = vld [vmem:[#allocation3 + $0xb0] sm:$0xff]
    %v101 = vld [vmem:[#allocation3 + $0xb8] sm:$0xff]
    %v102 = vld [vmem:[#allocation3 + $0xc0] sm:$0xff]
    %v103 = vld [vmem:[#allocation3 + $0xc8] sm:$0xff]
    %v104 = vld [vmem:[#allocation3 + $0xd0] sm:$0xff]
    %v105 = vld [vmem:[#allocation3 + $0xd8] sm:$0xff]
    %v106 = vld [vmem:[#allocation3 + $0xe0] sm:$0xff]
    %v107 = vld [vmem:[#allocation3 + $0xe8] sm:$0xff]
    %v108 = vld [vmem:[#allocation3 + $0xf0] sm:$0xff]
    %v109 = vld [vmem:[#allocation3 + $0xf8] sm:$0xff]
    %v110 = vld [vmem:[#allocation3 + $0x100] sm:$0xff]
    %v111 = vld [vmem:[#allocation3 + $0x108] sm:$0xff]
    %v112 = vld [vmem:[#allocation3 + $0x110] sm:$0xff]
    %v113 = vld [vmem:[#allocation3 + $0x118] sm:$0xff]
    %v114 = vld [vmem:[#allocation3 + $0x120] sm:$0xff]
    %v115 = vld [vmem:[#allocation3 + $0x128] sm:$0xff]
    %v116 = vld [vmem:[#allocation3 + $0x130] sm:$0xff]
    %v117 = vld [vmem:[#allocation3 + $0x138] sm:$0xff]
    %v118 = vld [vmem:[#allocation3 + $0x140] sm:$0xff]
    %v119 = vld [vmem:[#allocation3 + $0x148] sm:$0xff]
    %v120 = vld [vmem:[#allocation3 + $0x150] sm:$0xff]
    %v121 = vld [vmem:[#allocation3 + $0x158] sm:$0xff]
    %v122 = vld [vmem:[#allocation3 + $0x160] sm:$0xff]
    %v123 = vld [vmem:[#allocation3 + $0x168] sm:$0xff]
    %v124 = vld [vmem:[#allocation3 + $0x170] sm:$0xff]
    %v125 = vld [vmem:[#allocation3 + $0x178] sm:$0xff]
    %v126 = vld [vmem:[#allocation3 + $0x180] sm:$0xff]
    %v127 = vld [vmem:[#allocation3 + $0x188] sm:$0xff]
    %v128 = vld [vmem:[#allocation3 + $0x190] sm:$0xff]
    %v129 = vld [vmem:[#allocation3 + $0x198] sm:$0xff]
    %v130 = vld [vmem:[#allocation3 + $0x1a0] sm:$0xff]
    %v131 = vld [vmem:[#allocation3 + $0x1a8] sm:$0xff]
    %v132 = vld [vmem:[#allocation3 + $0x1b0] sm:$0xff]
    %v133 = vld [vmem:[#allocation3 + $0x1b8] sm:$0xff]
    %v134 = vld [vmem:[#allocation3 + $0x1c0] sm:$0xff]
    %v135 = vld [vmem:[#allocation3 + $0x1c8] sm:$0xff]
    %v136 = vld [vmem:[#allocation3 + $0x1d0] sm:$0xff]
    %v137 = vld [vmem:[#allocation3 + $0x1d8] sm:$0xff]
    %v138 = vld [vmem:[#allocation3 + $0x1e0] sm:$0xff]
    %v139 = vld [vmem:[#allocation3 + $0x1e8] sm:$0xff]
    %v140 = vld [vmem:[#allocation3 + $0x1f0] sm:$0xff]
    %v141 = vld [vmem:[#allocation3 + $0x1f8] sm:$0xff]
    %v142 = vld [vmem:[#allocation3 + $0x200] sm:$0xff]
    %v143 = vld [vmem:[#allocation3 + $0x208] sm:$0xff]
    %v144 = vld [vmem:[#allocation3 + $0x210] sm:$0xff]
    %v145 = vld [vmem:[#allocation3 + $0x218] sm:$0xff]
    %v146 = vld [vmem:[#allocation3 + $0x220] sm:$0xff]
    %v147 = vld [vmem:[#allocation3 + $0x228] sm:$0xff]
    %v148 = vld [vmem:[#allocation3 + $0x230] sm:$0xff]
    %v149 = vld [vmem:[#allocation3 + $0x238] sm:$0xff]
    %v150 = vld [vmem:[#allocation3 + $0x240] sm:$0xff]
    %v151 = vld [vmem:[#allocation3 + $0x248] sm:$0xff]
    %v152 = vld [vmem:[#allocation3 + $0x250] sm:$0xff]
    %v153 = vld [vmem:[#allocation3 + $0x258] sm:$0xff]
    %v154 = vld [vmem:[#allocation3 + $0x260] sm:$0xff]
    %v155 = vld [vmem:[#allocation3 + $0x268] sm:$0xff]
    %v156 = vld [vmem:[#allocation3 + $0x270] sm:$0xff]
    %v157 = vld [vmem:[#allocation3 + $0x278] sm:$0xff]
    %v158 = vld [vmem:[#allocation3 + $0x280] sm:$0xff]
    %v159 = vld [vmem:[#allocation3 + $0x288] sm:$0xff]
    %v160 = vld [vmem:[#allocation3 + $0x290] sm:$0xff]
    %v161 = vld [vmem:[#allocation3 + $0x298] sm:$0xff]
    %v162 = vld [vmem:[#allocation3 + $0x2a0] sm:$0xff]
    %v163 = vld [vmem:[#allocation3 + $0x2a8] sm:$0xff]
    %v164 = vld [vmem:[#allocation3 + $0x2b0] sm:$0xff]
    %v165 = vld [vmem:[#allocation3 + $0x2b8] sm:$0xff]
    %v166 = vld [vmem:[#allocation3 + $0x2c0] sm:$0xff]
    %v167 = vld [vmem:[#allocation3 + $0x2c8] sm:$0xff]
    %v168 = vld [vmem:[#allocation3 + $0x2d0] sm:$0xff]
    %v169 = vld [vmem:[#allocation3 + $0x2d8] sm:$0xff]
    %v170 = vld [vmem:[#allocation3 + $0x2e0] sm:$0xff]
    %v171 = vld [vmem:[#allocation3 + $0x2e8] sm:$0xff]
    %v172 = vld [vmem:[#allocation3 + $0x2f0] sm:$0xff]
    %v173 = vld [vmem:[#allocation3 + $0x2f8] sm:$0xff]
    %v174 = vld [vmem:[#allocation3 + $0x300] sm:$0xff]
    %v175 = vld [vmem:[#allocation3 + $0x308] sm:$0xff]
    %v176 = vld [vmem:[#allocation3 + $0x310] sm:$0xff]
    %v177 = vld [vmem:[#allocation3 + $0x318] sm:$0xff]
    %v178 = vld [vmem:[#allocation3 + $0x320] sm:$0xff]
    %v179 = vld [vmem:[#allocation3 + $0x328] sm:$0xff]
    %v180 = vld [vmem:[#allocation3 + $0x330] sm:$0xff]
    %v181 = vld [vmem:[#allocation3 + $0x338] sm:$0xff]
    %v182 = vld [vmem:[#allocation3 + $0x340] sm:$0xff]
    %v183 = vld [vmem:[#allocation3 + $0x348] sm:$0xff]
    %v184 = vld [vmem:[#allocation3 + $0x350] sm:$0xff]
    %v185 = vld [vmem:[#allocation3 + $0x358] sm:$0xff]
    %v186 = vld [vmem:[#allocation3 + $0x360] sm:$0xff]
    %v187 = vld [vmem:[#allocation3 + $0x368] sm:$0xff]
    %v188 = vld [vmem:[#allocation3 + $0x370] sm:$0xff]
    %v189 = vld [vmem:[#allocation3 + $0x378] sm:$0xff]
    %v190 = vld [vmem:[#allocation3 + $0x380] sm:$0xff]
    %v191 = vld [vmem:[#allocation3 + $0x388] sm:$0xff]
    %v192 = vld [vmem:[#allocation3 + $0x390] sm:$0xff]
    %v193 = vld [vmem:[#allocation3 + $0x398] sm:$0xff]
    %v194 = vld [vmem:[#allocation3 + $0x3a0] sm:$0xff]
    %v195 = vld [vmem:[#allocation3 + $0x3a8] sm:$0xff]
    %v196 = vld [vmem:[#allocation3 + $0x3b0] sm:$0xff]
    %v197 = vld [vmem:[#allocation3 + $0x3b8] sm:$0xff]
    %v198 = vld [vmem:[#allocation3 + $0x3c0] sm:$0xff]
    %v199 = vld [vmem:[#allocation3 + $0x3c8] sm:$0xff]
    %v200 = vld [vmem:[#allocation3 + $0x3d0] sm:$0xff]
    %v201 = vld [vmem:[#allocation3 + $0x3d8] sm:$0xff]
    %v202 = vld [vmem:[#allocation3 + $0x3e0] sm:$0xff]
    %v203 = vld [vmem:[#allocation3 + $0x3e8] sm:$0xff]
    %v204 = vld [vmem:[#allocation3 + $0x3f0] sm:$0xff]
    %v205 = vld [vmem:[#allocation3 + $0x3f8] sm:$0xff]
    %v206 = vld [vmem:[#allocation3 + $0x400] sm:$0xff]
    %v207 = vld [vmem:[#allocation3 + $0x408] sm:$0xff]
    %v208 = vld [vmem:[#allocation3 + $0x410] sm:$0xff]
    %v209 = vld [vmem:[#allocation3 + $0x418] sm:$0xff]
    %v210 = vld [vmem:[#allocation3 + $0x420] sm:$0xff]
    %v211 = vld [vmem:[#allocation3 + $0x428] sm:$0xff]
    %v212 = vld [vmem:[#allocation3 + $0x430] sm:$0xff]
    %v213 = vld [vmem:[#allocation3 + $0x438] sm:$0xff]
    %v214 = vld [vmem:[#allocation3 + $0x440] sm:$0xff]
    %v215 = vld [vmem:[#allocation3 + $0x448] sm:$0xff]
    %v216 = vld [vmem:[#allocation3 + $0x450] sm:$0xff]
    %v217 = vld [vmem:[#allocation3 + $0x458] sm:$0xff]
    %v218 = vld [vmem:[#allocation3 + $0x460] sm:$0xff]
    %v219 = vld [vmem:[#allocation3 + $0x468] sm:$0xff]
    %v220 = vld [vmem:[#allocation3 + $0x470] sm:$0xff]
    %v221 = vld [vmem:[#allocation3 + $0x478] sm:$0xff]
    %v222 = vld [vmem:[#allocation3 + $0x480] sm:$0xff]
    %v223 = vld [vmem:[#allocation3 + $0x488] sm:$0xff]
    %v224 = vld [vmem:[#allocation3 + $0x490] sm:$0xff]
    %v225 = vld [vmem:[#allocation3 + $0x498] sm:$0xff]
    %v226 = vld [vmem:[#allocation3 + $0x4a0] sm:$0xff]
    %v227 = vld [vmem:[#allocation3 + $0x4a8] sm:$0xff]
    %v228 = vld [vmem:[#allocation3 + $0x4b0] sm:$0xff]
    %v229 = vld [vmem:[#allocation3 + $0x4b8] sm:$0xff]
    %v230 = vld [vmem:[#allocation3 + $0x4c0] sm:$0xff]
    %v231 = vld [vmem:[#allocation3 + $0x4c8] sm:$0xff]
    %v232 = vld [vmem:[#allocation3 + $0x4d0] sm:$0xff]
    %v233 = vld [vmem:[#allocation3 + $0x4d8] sm:$0xff]
    %v234 = vld [vmem:[#allocation3 + $0x4e0] sm:$0xff]
    %v235 = vld [vmem:[#allocation3 + $0x4e8] sm:$0xff]
    %v236 = vld [vmem:[#allocation3 + $0x4f0] sm:$0xff]
    %v237 = vld [vmem:[#allocation3 + $0x4f8] sm:$0xff]
    %v238 = vld [vmem:[#allocation3 + $0x500] sm:$0xff]
    %v239 = vld [vmem:[#allocation3 + $0x508] sm:$0xff]
    %v240 = vld [vmem:[#allocation3 + $0x510] sm:$0xff]
    %v241 = vld [vmem:[#allocation3 + $0x518] sm:$0xff]
    %v242 = vld [vmem:[#allocation3 + $0x520] sm:$0xff]
    %v243 = vld [vmem:[#allocation3 + $0x528] sm:$0xff]
    %v244 = vld [vmem:[#allocation3 + $0x530] sm:$0xff]
    %v245 = vld [vmem:[#allocation3 + $0x538] sm:$0xff]
    %v246 = vld [vmem:[#allocation3 + $0x540] sm:$0xff]
    %v247 = vld [vmem:[#allocation3 + $0x548] sm:$0xff]
    %v248 = vld [vmem:[#allocation3 + $0x550] sm:$0xff]
    %v249 = vld [vmem:[#allocation3 + $0x558] sm:$0xff]
    %v250 = vld [vmem:[#allocation3 + $0x560] sm:$0xff]
    %v251 = vld [vmem:[#allocation3 + $0x568] sm:$0xff]
    %v252 = vld [vmem:[#allocation3 + $0x570] sm:$0xff]
    %v253 = vld [vmem:[#allocation3 + $0x578] sm:$0xff]
    %v254 = vld [vmem:[#allocation3 + $0x580] sm:$0xff]
    %v255 = vld [vmem:[#allocation3 + $0x588] sm:$0xff]
    %v256 = vld [vmem:[#allocation3 + $0x590] sm:$0xff]
    %v257 = vld [vmem:[#allocation3 + $0x598] sm:$0xff]
    %v258 = vld [vmem:[#allocation3 + $0x5a0] sm:$0xff]
    %v259 = vld [vmem:[#allocation3 + $0x5a8] sm:$0xff]
    %v260 = vld [vmem:[#allocation3 + $0x5b0] sm:$0xff]
    %v261 = vld [vmem:[#allocation3 + $0x5b8] sm:$0xff]
    %v262 = vld [vmem:[#allocation3 + $0x5c0] sm:$0xff]
    %v263 = vld [vmem:[#allocation3 + $0x5c8] sm:$0xff]
    %v264 = vld [vmem:[#allocation3 + $0x5d0] sm:$0xff]
    %v265 = vld [vmem:[#allocation3 + $0x5d8] sm:$0xff]
    %v266 = vld [vmem:[#allocation3 + $0x5e0] sm:$0xff]
    %v267 = vld [vmem:[#allocation3 + $0x5e8] sm:$0xff]
    %v268 = vld [vmem:[#allocation3 + $0x5f0] sm:$0xff]
    %v269 = vld [vmem:[#allocation3 + $0x5f8] sm:$0xff]
    %v270 = vld [vmem:[#allocation3 + $0x600] sm:$0xff]
    %v271 = vld [vmem:[#allocation3 + $0x608] sm:$0xff]
    %v272 = vld [vmem:[#allocation3 + $0x610] sm:$0xff]
    %v273 = vld [vmem:[#allocation3 + $0x618] sm:$0xff]
    %v274 = vld [vmem:[#allocation3 + $0x620] sm:$0xff]
    %v275 = vld [vmem:[#allocation3 + $0x628] sm:$0xff]
    %v276 = vld [vmem:[#allocation3 + $0x630] sm:$0xff]
    %v277 = vld [vmem:[#allocation3 + $0x638] sm:$0xff]
    %v278 = vld [vmem:[#allocation3 + $0x640] sm:$0xff]
    %v279 = vld [vmem:[#allocation3 + $0x648] sm:$0xff]
    %v280 = vld [vmem:[#allocation3 + $0x650] sm:$0xff]
    %v281 = vld [vmem:[#allocation3 + $0x658] sm:$0xff]
    %v282 = vld [vmem:[#allocation3 + $0x660] sm:$0xff]
    %v283 = vld [vmem:[#allocation3 + $0x668] sm:$0xff]
    %v284 = vld [vmem:[#allocation3 + $0x670] sm:$0xff]
    %v285 = vld [vmem:[#allocation3 + $0x678] sm:$0xff]
    %v286 = vld [vmem:[#allocation3 + $0x680] sm:$0xff]
    %v287 = vld [vmem:[#allocation3 + $0x688] sm:$0xff]
    %v288 = vld [vmem:[#allocation3 + $0x690] sm:$0xff]
    %v289 = vld [vmem:[#allocation3 + $0x698] sm:$0xff]
    %v290 = vld [vmem:[#allocation3 + $0x6a0] sm:$0xff]
    %v291 = vld [vmem:[#allocation3 + $0x6a8] sm:$0xff]
    %v292 = vld [vmem:[#allocation3 + $0x6b0] sm:$0xff]
    %v293 = vld [vmem:[#allocation3 + $0x6b8] sm:$0xff]
    %v294 = vld [vmem:[#allocation3 + $0x6c0] sm:$0xff]
    %v295 = vld [vmem:[#allocation3 + $0x6c8] sm:$0xff]
    %v296 = vld [vmem:[#allocation3 + $0x6d0] sm:$0xff]
    %v297 = vld [vmem:[#allocation3 + $0x6d8] sm:$0xff]
    %v298 = vld [vmem:[#allocation3 + $0x6e0] sm:$0xff]
    %v299 = vld [vmem:[#allocation3 + $0x6e8] sm:$0xff]
    %v300 = vld [vmem:[#allocation3 + $0x6f0] sm:$0xff]
    %v301 = vld [vmem:[#allocation3 + $0x6f8] sm:$0xff]
    %v302 = vld [vmem:[#allocation3 + $0x700] sm:$0xff]
    %v303 = vld [vmem:[#allocation3 + $0x708] sm:$0xff]
    %v304 = vld [vmem:[#allocation3 + $0x710] sm:$0xff]
    %v305 = vld [vmem:[#allocation3 + $0x718] sm:$0xff]
    %v306 = vld [vmem:[#allocation3 + $0x720] sm:$0xff]
    %v307 = vld [vmem:[#allocation3 + $0x728] sm:$0xff]
    %v308 = vld [vmem:[#allocation3 + $0x730] sm:$0xff]
    %v309 = vld [vmem:[#allocation3 + $0x738] sm:$0xff]
    %v310 = vld [vmem:[#allocation3 + $0x740] sm:$0xff]
    %v311 = vld [vmem:[#allocation3 + $0x748] sm:$0xff]
    %v312 = vld [vmem:[#allocation3 + $0x750] sm:$0xff]
    %v313 = vld [vmem:[#allocation3 + $0x758] sm:$0xff]
    %v314 = vld [vmem:[#allocation3 + $0x760] sm:$0xff]
    %v315 = vld [vmem:[#allocation3 + $0x768] sm:$0xff]
    %v316 = vld [vmem:[#allocation3 + $0x770] sm:$0xff]
    %v317 = vld [vmem:[#allocation3 + $0x778] sm:$0xff]
    %v318 = vld [vmem:[#allocation3 + $0x780] sm:$0xff]
    %v319 = vld [vmem:[#allocation3 + $0x788] sm:$0xff]
    %v320 = vld [vmem:[#allocation3 + $0x790] sm:$0xff]
    %v321 = vld [vmem:[#allocation3 + $0x798] sm:$0xff]
    %v322 = vld [vmem:[#allocation3 + $0x7a0] sm:$0xff]
    %v323 = vld [vmem:[#allocation3 + $0x7a8] sm:$0xff]
    %v324 = vld [vmem:[#allocation3 + $0x7b0] sm:$0xff]
    %v325 = vld [vmem:[#allocation3 + $0x7b8] sm:$0xff]
    %v326 = vld [vmem:[#allocation3 + $0x7c0] sm:$0xff]
    %v327 = vld [vmem:[#allocation3 + $0x7c8] sm:$0xff]
    %v328 = vld [vmem:[#allocation3 + $0x7d0] sm:$0xff]
    %v329 = vld [vmem:[#allocation3 + $0x7d8] sm:$0xff]
    %v330 = vld [vmem:[#allocation3 + $0x7e0] sm:$0xff]
    %v331 = vld [vmem:[#allocation3 + $0x7e8] sm:$0xff]
    %v332 = vld [vmem:[#allocation3 + $0x7f0] sm:$0xff]
    %v333 = vld [vmem:[#allocation3 + $0x7f8] sm:$0xff]
    %v334 = vld [vmem:[#allocation3 + $0x800] sm:$0xff]
    %v335 = vld [vmem:[#allocation3 + $0x808] sm:$0xff]
    %v336 = vld [vmem:[#allocation3 + $0x810] sm:$0xff]
    %v337 = vld [vmem:[#allocation3 + $0x818] sm:$0xff]
    %v338 = vld [vmem:[#allocation3 + $0x820] sm:$0xff]
    %v339 = vld [vmem:[#allocation3 + $0x828] sm:$0xff]
    %v340 = vld [vmem:[#allocation3 + $0x830] sm:$0xff]
    %v341 = vld [vmem:[#allocation3 + $0x838] sm:$0xff]
    %v342 = vld [vmem:[#allocation3 + $0x840] sm:$0xff]
    %v343 = vld [vmem:[#allocation3 + $0x848] sm:$0xff]
    %v344 = vld [vmem:[#allocation3 + $0x850] sm:$0xff]
    %v345 = vld [vmem:[#allocation3 + $0x858] sm:$0xff]
    %v346 = vld [vmem:[#allocation3 + $0x860] sm:$0xff]
    %v347 = vld [vmem:[#allocation3 + $0x868] sm:$0xff]
    %v348 = vld [vmem:[#allocation3 + $0x870] sm:$0xff]
    %v349 = vld [vmem:[#allocation3 + $0x878] sm:$0xff]
    %v350 = vld [vmem:[#allocation3 + $0x880] sm:$0xff]
    %v351 = vld [vmem:[#allocation3 + $0x888] sm:$0xff]
    %v352 = vld [vmem:[#allocation3 + $0x890] sm:$0xff]
    %v353 = vld [vmem:[#allocation3 + $0x898] sm:$0xff]
    %v354 = vld [vmem:[#allocation3 + $0x8a0] sm:$0xff]
    %v355 = vld [vmem:[#allocation3 + $0x8a8] sm:$0xff]
    %v356 = vld [vmem:[#allocation3 + $0x8b0] sm:$0xff]
    %v357 = vld [vmem:[#allocation3 + $0x8b8] sm:$0xff]
    %v358 = vld [vmem:[#allocation3 + $0x8c0] sm:$0xff]
    %v359 = vld [vmem:[#allocation3 + $0x8c8] sm:$0xff]
    %v360 = vld [vmem:[#allocation3 + $0x8d0] sm:$0xff]
    %v361 = vld [vmem:[#allocation3 + $0x8d8] sm:$0xff]
    %v362 = vld [vmem:[#allocation3 + $0x8e0] sm:$0xff]
    %v363 = vld [vmem:[#allocation3 + $0x8e8] sm:$0xff]
    %v364 = vld [vmem:[#allocation3 + $0x8f0] sm:$0xff]
    %v365 = vld [vmem:[#allocation3 + $0x8f8] sm:$0xff]
    %v366 = vld [vmem:[#allocation5] sm:$0x3f]
    %v368 = vlaneseq
    %v369 = vshrl.u32 %v368, 7
    %v370 = vsub.s32 0, %v369
    %v371 = vrot.slane %v366, %v370
    %v372 = vlaneseq
    %v373 = vshrl.u32 %v372, 7
    %v374 = vsub.s32 1, %v373
    %v375 = vrot.slane %v366, %v374
    %v376 = vlaneseq
    %v377 = vshrl.u32 %v376, 7
    %v378 = vsub.s32 2, %v377
    %v379 = vrot.slane %v366, %v378
    %v380 = vlaneseq
    %v381 = vshrl.u32 %v380, 7
    %v382 = vsub.s32 3, %v381
    %v383 = vrot.slane %v366, %v382
    %v384 = vlaneseq
    %v385 = vshrl.u32 %v384, 7
    %v386 = vsub.s32 4, %v385
    %v387 = vrot.slane %v366, %v386
    %v388 = vlaneseq
    %v389 = vshrl.u32 %v388, 7
    %v390 = vsub.s32 5, %v389
    %v391 = vrot.slane %v366, %v390
    %v401 = vunpack.c.l.b16 %v75
    %v402 = vunpack.c.h.b16 %v75
    %v403 = vunpack.c.l.b16 %v76
    %v404 = vunpack.c.h.b16 %v76
    %v405 = vunpack.c.l.b16 %v77
    %v406 = vunpack.c.h.b16 %v77
    %v407 = vpack.c.b16 %v401, %v401
    %v408 = vpack.c.b16 %v402, %v402
    %v409 = vpack.c.b16 %v403, %v403
    %v410 = vpack.c.b16 %v404, %v404
    %v411 = vpack.c.b16 %v405, %v405
    %v412 = vpack.c.b16 %v406, %v406
    %v707 = vunpack.c.l.b16 %v78
    %v708 = vunpack.c.h.b16 %v78
    %v709 = vunpack.c.l.b16 %v79
    %v710 = vunpack.c.h.b16 %v79
    %v711 = vunpack.c.l.b16 %v80
    %v712 = vunpack.c.h.b16 %v80
    %v713 = vunpack.c.l.b16 %v81
    %v714 = vunpack.c.h.b16 %v81
    %v715 = vunpack.c.l.b16 %v82
    %v716 = vunpack.c.h.b16 %v82
    %v717 = vunpack.c.l.b16 %v83
    %v718 = vunpack.c.h.b16 %v83
    %v719 = vunpack.c.l.b16 %v84
    %v720 = vunpack.c.h.b16 %v84
    %v721 = vunpack.c.l.b16 %v85
    %v722 = vunpack.c.h.b16 %v85
    %v723 = vunpack.c.l.b16 %v86
    %v724 = vunpack.c.h.b16 %v86
    %v725 = vunpack.c.l.b16 %v87
    %v726 = vunpack.c.h.b16 %v87
    %v727 = vunpack.c.l.b16 %v88
    %v728 = vunpack.c.h.b16 %v88
    %v729 = vunpack.c.l.b16 %v89
    %v730 = vunpack.c.h.b16 %v89
    %v731 = vunpack.c.l.b16 %v90
    %v732 = vunpack.c.h.b16 %v90
    %v733 = vunpack.c.l.b16 %v91
    %v734 = vunpack.c.h.b16 %v91
    %v735 = vunpack.c.l.b16 %v92
    %v736 = vunpack.c.h.b16 %v92
    %v737 = vunpack.c.l.b16 %v93
    %v738 = vunpack.c.h.b16 %v93
    %v739 = vunpack.c.l.b16 %v94
    %v740 = vunpack.c.h.b16 %v94
    %v741 = vunpack.c.l.b16 %v95
    %v742 = vunpack.c.h.b16 %v95
    %v743 = vunpack.c.l.b16 %v96
    %v744 = vunpack.c.h.b16 %v96
    %v745 = vunpack.c.l.b16 %v97
    %v746 = vunpack.c.h.b16 %v97
    %v747 = vunpack.c.l.b16 %v98
    %v748 = vunpack.c.h.b16 %v98
    %v749 = vunpack.c.l.b16 %v99
    %v750 = vunpack.c.h.b16 %v99
    %v751 = vunpack.c.l.b16 %v100
    %v752 = vunpack.c.h.b16 %v100
    %v753 = vunpack.c.l.b16 %v101
    %v754 = vunpack.c.h.b16 %v101
    %v755 = vunpack.c.l.b16 %v102
    %v756 = vunpack.c.h.b16 %v102
    %v757 = vunpack.c.l.b16 %v103
    %v758 = vunpack.c.h.b16 %v103
    %v759 = vunpack.c.l.b16 %v104
    %v760 = vunpack.c.h.b16 %v104
    %v761 = vunpack.c.l.b16 %v105
    %v762 = vunpack.c.h.b16 %v105
    %v763 = vunpack.c.l.b16 %v106
    %v764 = vunpack.c.h.b16 %v106
    %v765 = vunpack.c.l.b16 %v107
    %v766 = vunpack.c.h.b16 %v107
    %v767 = vunpack.c.l.b16 %v108
    %v768 = vunpack.c.h.b16 %v108
    %v769 = vunpack.c.l.b16 %v109
    %v770 = vunpack.c.h.b16 %v109
    %v771 = vunpack.c.l.b16 %v110
    %v772 = vunpack.c.h.b16 %v110
    %v773 = vunpack.c.l.b16 %v111
    %v774 = vunpack.c.h.b16 %v111
    %v775 = vunpack.c.l.b16 %v112
    %v776 = vunpack.c.h.b16 %v112
    %v777 = vunpack.c.l.b16 %v113
    %v778 = vunpack.c.h.b16 %v113
    %v779 = vunpack.c.l.b16 %v114
    %v780 = vunpack.c.h.b16 %v114
    %v781 = vunpack.c.l.b16 %v115
    %v782 = vunpack.c.h.b16 %v115
    %v783 = vunpack.c.l.b16 %v116
    %v784 = vunpack.c.h.b16 %v116
    %v785 = vunpack.c.l.b16 %v117
    %v786 = vunpack.c.h.b16 %v117
    %v787 = vunpack.c.l.b16 %v118
    %v788 = vunpack.c.h.b16 %v118
    %v789 = vunpack.c.l.b16 %v119
    %v790 = vunpack.c.h.b16 %v119
    %v791 = vunpack.c.l.b16 %v120
    %v792 = vunpack.c.h.b16 %v120
    %v793 = vunpack.c.l.b16 %v121
    %v794 = vunpack.c.h.b16 %v121
    %v795 = vunpack.c.l.b16 %v122
    %v796 = vunpack.c.h.b16 %v122
    %v797 = vunpack.c.l.b16 %v123
    %v798 = vunpack.c.h.b16 %v123
    %v799 = vunpack.c.l.b16 %v124
    %v800 = vunpack.c.h.b16 %v124
    %v801 = vunpack.c.l.b16 %v125
    %v802 = vunpack.c.h.b16 %v125
    %v803 = vunpack.c.l.b16 %v126
    %v804 = vunpack.c.h.b16 %v126
    %v805 = vunpack.c.l.b16 %v127
    %v806 = vunpack.c.h.b16 %v127
    %v807 = vunpack.c.l.b16 %v128
    %v808 = vunpack.c.h.b16 %v128
    %v809 = vunpack.c.l.b16 %v129
    %v810 = vunpack.c.h.b16 %v129
    %v811 = vunpack.c.l.b16 %v130
    %v812 = vunpack.c.h.b16 %v130
    %v813 = vunpack.c.l.b16 %v131
    %v814 = vunpack.c.h.b16 %v131
    %v815 = vunpack.c.l.b16 %v132
    %v816 = vunpack.c.h.b16 %v132
    %v817 = vunpack.c.l.b16 %v133
    %v818 = vunpack.c.h.b16 %v133
    %v819 = vunpack.c.l.b16 %v134
    %v820 = vunpack.c.h.b16 %v134
    %v821 = vunpack.c.l.b16 %v135
    %v822 = vunpack.c.h.b16 %v135
    %v823 = vunpack.c.l.b16 %v136
    %v824 = vunpack.c.h.b16 %v136
    %v825 = vunpack.c.l.b16 %v137
    %v826 = vunpack.c.h.b16 %v137
    %v827 = vunpack.c.l.b16 %v138
    %v828 = vunpack.c.h.b16 %v138
    %v829 = vunpack.c.l.b16 %v139
    %v830 = vunpack.c.h.b16 %v139
    %v831 = vunpack.c.l.b16 %v140
    %v832 = vunpack.c.h.b16 %v140
    %v833 = vunpack.c.l.b16 %v141
    %v834 = vunpack.c.h.b16 %v141
    %v835 = vunpack.c.l.b16 %v142
    %v836 = vunpack.c.h.b16 %v142
    %v837 = vunpack.c.l.b16 %v143
    %v838 = vunpack.c.h.b16 %v143
    %v839 = vunpack.c.l.b16 %v144
    %v840 = vunpack.c.h.b16 %v144
    %v841 = vunpack.c.l.b16 %v145
    %v842 = vunpack.c.h.b16 %v145
    %v843 = vunpack.c.l.b16 %v146
    %v844 = vunpack.c.h.b16 %v146
    %v845 = vunpack.c.l.b16 %v147
    %v846 = vunpack.c.h.b16 %v147
    %v847 = vunpack.c.l.b16 %v148
    %v848 = vunpack.c.h.b16 %v148
    %v849 = vunpack.c.l.b16 %v149
    %v850 = vunpack.c.h.b16 %v149
    %v851 = vunpack.c.l.b16 %v150
    %v852 = vunpack.c.h.b16 %v150
    %v853 = vunpack.c.l.b16 %v151
    %v854 = vunpack.c.h.b16 %v151
    %v855 = vunpack.c.l.b16 %v152
    %v856 = vunpack.c.h.b16 %v152
    %v857 = vunpack.c.l.b16 %v153
    %v858 = vunpack.c.h.b16 %v153
    %v859 = vunpack.c.l.b16 %v154
    %v860 = vunpack.c.h.b16 %v154
    %v861 = vunpack.c.l.b16 %v155
    %v862 = vunpack.c.h.b16 %v155
    %v863 = vunpack.c.l.b16 %v156
    %v864 = vunpack.c.h.b16 %v156
    %v865 = vunpack.c.l.b16 %v157
    %v866 = vunpack.c.h.b16 %v157
    %v867 = vunpack.c.l.b16 %v158
    %v868 = vunpack.c.h.b16 %v158
    %v869 = vunpack.c.l.b16 %v159
    %v870 = vunpack.c.h.b16 %v159
    %v871 = vunpack.c.l.b16 %v160
    %v872 = vunpack.c.h.b16 %v160
    %v873 = vunpack.c.l.b16 %v161
    %v874 = vunpack.c.h.b16 %v161
    %v875 = vunpack.c.l.b16 %v162
    %v876 = vunpack.c.h.b16 %v162
    %v877 = vunpack.c.l.b16 %v163
    %v878 = vunpack.c.h.b16 %v163
    %v879 = vunpack.c.l.b16 %v164
    %v880 = vunpack.c.h.b16 %v164
    %v881 = vunpack.c.l.b16 %v165
    %v882 = vunpack.c.h.b16 %v165
    %v883 = vunpack.c.l.b16 %v166
    %v884 = vunpack.c.h.b16 %v166
    %v885 = vunpack.c.l.b16 %v167
    %v886 = vunpack.c.h.b16 %v167
    %v887 = vunpack.c.l.b16 %v168
    %v888 = vunpack.c.h.b16 %v168
    %v889 = vunpack.c.l.b16 %v169
    %v890 = vunpack.c.h.b16 %v169
    %v891 = vunpack.c.l.b16 %v170
    %v892 = vunpack.c.h.b16 %v170
    %v893 = vunpack.c.l.b16 %v171
    %v894 = vunpack.c.h.b16 %v171
    %v895 = vunpack.c.l.b16 %v172
    %v896 = vunpack.c.h.b16 %v172
    %v897 = vunpack.c.l.b16 %v173
    %v898 = vunpack.c.h.b16 %v173
    %v899 = vunpack.c.l.b16 %v174
    %v900 = vunpack.c.h.b16 %v174
    %v901 = vunpack.c.l.b16 %v175
    %v902 = vunpack.c.h.b16 %v175
    %v903 = vunpack.c.l.b16 %v176
    %v904 = vunpack.c.h.b16 %v176
    %v905 = vunpack.c.l.b16 %v177
    %v906 = vunpack.c.h.b16 %v177
    %v907 = vunpack.c.l.b16 %v178
    %v908 = vunpack.c.h.b16 %v178
    %v909 = vunpack.c.l.b16 %v179
    %v910 = vunpack.c.h.b16 %v179
    %v911 = vunpack.c.l.b16 %v180
    %v912 = vunpack.c.h.b16 %v180
    %v913 = vunpack.c.l.b16 %v181
    %v914 = vunpack.c.h.b16 %v181
    %v915 = vunpack.c.l.b16 %v182
    %v916 = vunpack.c.h.b16 %v182
    %v917 = vunpack.c.l.b16 %v183
    %v918 = vunpack.c.h.b16 %v183
    %v919 = vunpack.c.l.b16 %v184
    %v920 = vunpack.c.h.b16 %v184
    %v921 = vunpack.c.l.b16 %v185
    %v922 = vunpack.c.h.b16 %v185
    %v923 = vunpack.c.l.b16 %v186
    %v924 = vunpack.c.h.b16 %v186
    %v925 = vunpack.c.l.b16 %v187
    %v926 = vunpack.c.h.b16 %v187
    %v927 = vunpack.c.l.b16 %v188
    %v928 = vunpack.c.h.b16 %v188
    %v929 = vunpack.c.l.b16 %v189
    %v930 = vunpack.c.h.b16 %v189
    %v931 = vunpack.c.l.b16 %v190
    %v932 = vunpack.c.h.b16 %v190
    %v933 = vunpack.c.l.b16 %v191
    %v934 = vunpack.c.h.b16 %v191
    %v935 = vunpack.c.l.b16 %v192
    %v936 = vunpack.c.h.b16 %v192
    %v937 = vunpack.c.l.b16 %v193
    %v938 = vunpack.c.h.b16 %v193
    %v939 = vunpack.c.l.b16 %v194
    %v940 = vunpack.c.h.b16 %v194
    %v941 = vunpack.c.l.b16 %v195
    %v942 = vunpack.c.h.b16 %v195
    %v943 = vunpack.c.l.b16 %v196
    %v944 = vunpack.c.h.b16 %v196
    %v945 = vunpack.c.l.b16 %v197
    %v946 = vunpack.c.h.b16 %v197
    %v947 = vunpack.c.l.b16 %v198
    %v948 = vunpack.c.h.b16 %v198
    %v949 = vunpack.c.l.b16 %v199
    %v950 = vunpack.c.h.b16 %v199
    %v951 = vunpack.c.l.b16 %v200
    %v952 = vunpack.c.h.b16 %v200
    %v953 = vunpack.c.l.b16 %v201
    %v954 = vunpack.c.h.b16 %v201
    %v955 = vunpack.c.l.b16 %v202
    %v956 = vunpack.c.h.b16 %v202
    %v957 = vunpack.c.l.b16 %v203
    %v958 = vunpack.c.h.b16 %v203
    %v959 = vunpack.c.l.b16 %v204
    %v960 = vunpack.c.h.b16 %v204
    %v961 = vunpack.c.l.b16 %v205
    %v962 = vunpack.c.h.b16 %v205
    %v963 = vunpack.c.l.b16 %v206
    %v964 = vunpack.c.h.b16 %v206
    %v965 = vunpack.c.l.b16 %v207
    %v966 = vunpack.c.h.b16 %v207
    %v967 = vunpack.c.l.b16 %v208
    %v968 = vunpack.c.h.b16 %v208
    %v969 = vunpack.c.l.b16 %v209
    %v970 = vunpack.c.h.b16 %v209
    %v971 = vunpack.c.l.b16 %v210
    %v972 = vunpack.c.h.b16 %v210
    %v973 = vunpack.c.l.b16 %v211
    %v974 = vunpack.c.h.b16 %v211
    %v975 = vunpack.c.l.b16 %v212
    %v976 = vunpack.c.h.b16 %v212
    %v977 = vunpack.c.l.b16 %v213
    %v978 = vunpack.c.h.b16 %v213
    %v979 = vunpack.c.l.b16 %v214
    %v980 = vunpack.c.h.b16 %v214
    %v981 = vunpack.c.l.b16 %v215
    %v982 = vunpack.c.h.b16 %v215
    %v983 = vunpack.c.l.b16 %v216
    %v984 = vunpack.c.h.b16 %v216
    %v985 = vunpack.c.l.b16 %v217
    %v986 = vunpack.c.h.b16 %v217
    %v987 = vunpack.c.l.b16 %v218
    %v988 = vunpack.c.h.b16 %v218
    %v989 = vunpack.c.l.b16 %v219
    %v990 = vunpack.c.h.b16 %v219
    %v991 = vunpack.c.l.b16 %v220
    %v992 = vunpack.c.h.b16 %v220
    %v993 = vunpack.c.l.b16 %v221
    %v994 = vunpack.c.h.b16 %v221
    %v995 = vunpack.c.l.b16 %v222
    %v996 = vunpack.c.h.b16 %v222
    %v997 = vunpack.c.l.b16 %v223
    %v998 = vunpack.c.h.b16 %v223
    %v999 = vunpack.c.l.b16 %v224
    %v1000 = vunpack.c.h.b16 %v224
    %v1001 = vunpack.c.l.b16 %v225
    %v1002 = vunpack.c.h.b16 %v225
    %v1003 = vunpack.c.l.b16 %v226
    %v1004 = vunpack.c.h.b16 %v226
    %v1005 = vunpack.c.l.b16 %v227
    %v1006 = vunpack.c.h.b16 %v227
    %v1007 = vunpack.c.l.b16 %v228
    %v1008 = vunpack.c.h.b16 %v228
    %v1009 = vunpack.c.l.b16 %v229
    %v1010 = vunpack.c.h.b16 %v229
    %v1011 = vunpack.c.l.b16 %v230
    %v1012 = vunpack.c.h.b16 %v230
    %v1013 = vunpack.c.l.b16 %v231
    %v1014 = vunpack.c.h.b16 %v231
    %v1015 = vunpack.c.l.b16 %v232
    %v1016 = vunpack.c.h.b16 %v232
    %v1017 = vunpack.c.l.b16 %v233
    %v1018 = vunpack.c.h.b16 %v233
    %v1019 = vunpack.c.l.b16 %v234
    %v1020 = vunpack.c.h.b16 %v234
    %v1021 = vunpack.c.l.b16 %v235
    %v1022 = vunpack.c.h.b16 %v235
    %v1023 = vunpack.c.l.b16 %v236
    %v1024 = vunpack.c.h.b16 %v236
    %v1025 = vunpack.c.l.b16 %v237
    %v1026 = vunpack.c.h.b16 %v237
    %v1027 = vunpack.c.l.b16 %v238
    %v1028 = vunpack.c.h.b16 %v238
    %v1029 = vunpack.c.l.b16 %v239
    %v1030 = vunpack.c.h.b16 %v239
    %v1031 = vunpack.c.l.b16 %v240
    %v1032 = vunpack.c.h.b16 %v240
    %v1033 = vunpack.c.l.b16 %v241
    %v1034 = vunpack.c.h.b16 %v241
    %v1035 = vunpack.c.l.b16 %v242
    %v1036 = vunpack.c.h.b16 %v242
    %v1037 = vunpack.c.l.b16 %v243
    %v1038 = vunpack.c.h.b16 %v243
    %v1039 = vunpack.c.l.b16 %v244
    %v1040 = vunpack.c.h.b16 %v244
    %v1041 = vunpack.c.l.b16 %v245
    %v1042 = vunpack.c.h.b16 %v245
    %v1043 = vunpack.c.l.b16 %v246
    %v1044 = vunpack.c.h.b16 %v246
    %v1045 = vunpack.c.l.b16 %v247
    %v1046 = vunpack.c.h.b16 %v247
    %v1047 = vunpack.c.l.b16 %v248
    %v1048 = vunpack.c.h.b16 %v248
    %v1049 = vunpack.c.l.b16 %v249
    %v1050 = vunpack.c.h.b16 %v249
    %v1051 = vunpack.c.l.b16 %v250
    %v1052 = vunpack.c.h.b16 %v250
    %v1053 = vunpack.c.l.b16 %v251
    %v1054 = vunpack.c.h.b16 %v251
    %v1055 = vunpack.c.l.b16 %v252
    %v1056 = vunpack.c.h.b16 %v252
    %v1057 = vunpack.c.l.b16 %v253
    %v1058 = vunpack.c.h.b16 %v253
    %v1059 = vunpack.c.l.b16 %v254
    %v1060 = vunpack.c.h.b16 %v254
    %v1061 = vunpack.c.l.b16 %v255
    %v1062 = vunpack.c.h.b16 %v255
    %v1063 = vunpack.c.l.b16 %v256
    %v1064 = vunpack.c.h.b16 %v256
    %v1065 = vunpack.c.l.b16 %v257
    %v1066 = vunpack.c.h.b16 %v257
    %v1067 = vunpack.c.l.b16 %v258
    %v1068 = vunpack.c.h.b16 %v258
    %v1069 = vunpack.c.l.b16 %v259
    %v1070 = vunpack.c.h.b16 %v259
    %v1071 = vunpack.c.l.b16 %v260
    %v1072 = vunpack.c.h.b16 %v260
    %v1073 = vunpack.c.l.b16 %v261
    %v1074 = vunpack.c.h.b16 %v261
    %v1075 = vunpack.c.l.b16 %v262
    %v1076 = vunpack.c.h.b16 %v262
    %v1077 = vunpack.c.l.b16 %v263
    %v1078 = vunpack.c.h.b16 %v263
    %v1079 = vunpack.c.l.b16 %v264
    %v1080 = vunpack.c.h.b16 %v264
    %v1081 = vunpack.c.l.b16 %v265
    %v1082 = vunpack.c.h.b16 %v265
    %v1083 = vunpack.c.l.b16 %v266
    %v1084 = vunpack.c.h.b16 %v266
    %v1085 = vunpack.c.l.b16 %v267
    %v1086 = vunpack.c.h.b16 %v267
    %v1087 = vunpack.c.l.b16 %v268
    %v1088 = vunpack.c.h.b16 %v268
    %v1089 = vunpack.c.l.b16 %v269
    %v1090 = vunpack.c.h.b16 %v269
    %v1091 = vunpack.c.l.b16 %v270
    %v1092 = vunpack.c.h.b16 %v270
    %v1093 = vunpack.c.l.b16 %v271
    %v1094 = vunpack.c.h.b16 %v271
    %v1095 = vunpack.c.l.b16 %v272
    %v1096 = vunpack.c.h.b16 %v272
    %v1097 = vunpack.c.l.b16 %v273
    %v1098 = vunpack.c.h.b16 %v273
    %v1099 = vunpack.c.l.b16 %v274
    %v1100 = vunpack.c.h.b16 %v274
    %v1101 = vunpack.c.l.b16 %v275
    %v1102 = vunpack.c.h.b16 %v275
    %v1103 = vunpack.c.l.b16 %v276
    %v1104 = vunpack.c.h.b16 %v276
    %v1105 = vunpack.c.l.b16 %v277
    %v1106 = vunpack.c.h.b16 %v277
    %v1107 = vunpack.c.l.b16 %v278
    %v1108 = vunpack.c.h.b16 %v278
    %v1109 = vunpack.c.l.b16 %v279
    %v1110 = vunpack.c.h.b16 %v279
    %v1111 = vunpack.c.l.b16 %v280
    %v1112 = vunpack.c.h.b16 %v280
    %v1113 = vunpack.c.l.b16 %v281
    %v1114 = vunpack.c.h.b16 %v281
    %v1115 = vunpack.c.l.b16 %v282
    %v1116 = vunpack.c.h.b16 %v282
    %v1117 = vunpack.c.l.b16 %v283
    %v1118 = vunpack.c.h.b16 %v283
    %v1119 = vunpack.c.l.b16 %v284
    %v1120 = vunpack.c.h.b16 %v284
    %v1121 = vunpack.c.l.b16 %v285
    %v1122 = vunpack.c.h.b16 %v285
    %v1123 = vunpack.c.l.b16 %v286
    %v1124 = vunpack.c.h.b16 %v286
    %v1125 = vunpack.c.l.b16 %v287
    %v1126 = vunpack.c.h.b16 %v287
    %v1127 = vunpack.c.l.b16 %v288
    %v1128 = vunpack.c.h.b16 %v288
    %v1129 = vunpack.c.l.b16 %v289
    %v1130 = vunpack.c.h.b16 %v289
    %v1131 = vunpack.c.l.b16 %v290
    %v1132 = vunpack.c.h.b16 %v290
    %v1133 = vunpack.c.l.b16 %v291
    %v1134 = vunpack.c.h.b16 %v291
    %v1135 = vunpack.c.l.b16 %v292
    %v1136 = vunpack.c.h.b16 %v292
    %v1137 = vunpack.c.l.b16 %v293
    %v1138 = vunpack.c.h.b16 %v293
    %v1139 = vunpack.c.l.b16 %v294
    %v1140 = vunpack.c.h.b16 %v294
    %v1141 = vunpack.c.l.b16 %v295
    %v1142 = vunpack.c.h.b16 %v295
    %v1143 = vunpack.c.l.b16 %v296
    %v1144 = vunpack.c.h.b16 %v296
    %v1145 = vunpack.c.l.b16 %v297
    %v1146 = vunpack.c.h.b16 %v297
    %v1147 = vunpack.c.l.b16 %v298
    %v1148 = vunpack.c.h.b16 %v298
    %v1149 = vunpack.c.l.b16 %v299
    %v1150 = vunpack.c.h.b16 %v299
    %v1151 = vunpack.c.l.b16 %v300
    %v1152 = vunpack.c.h.b16 %v300
    %v1153 = vunpack.c.l.b16 %v301
    %v1154 = vunpack.c.h.b16 %v301
    %v1155 = vunpack.c.l.b16 %v302
    %v1156 = vunpack.c.h.b16 %v302
    %v1157 = vunpack.c.l.b16 %v303
    %v1158 = vunpack.c.h.b16 %v303
    %v1159 = vunpack.c.l.b16 %v304
    %v1160 = vunpack.c.h.b16 %v304
    %v1161 = vunpack.c.l.b16 %v305
    %v1162 = vunpack.c.h.b16 %v305
    %v1163 = vunpack.c.l.b16 %v306
    %v1164 = vunpack.c.h.b16 %v306
    %v1165 = vunpack.c.l.b16 %v307
    %v1166 = vunpack.c.h.b16 %v307
    %v1167 = vunpack.c.l.b16 %v308
    %v1168 = vunpack.c.h.b16 %v308
    %v1169 = vunpack.c.l.b16 %v309
    %v1170 = vunpack.c.h.b16 %v309
    %v1171 = vunpack.c.l.b16 %v310
    %v1172 = vunpack.c.h.b16 %v310
    %v1173 = vunpack.c.l.b16 %v311
    %v1174 = vunpack.c.h.b16 %v311
    %v1175 = vunpack.c.l.b16 %v312
    %v1176 = vunpack.c.h.b16 %v312
    %v1177 = vunpack.c.l.b16 %v313
    %v1178 = vunpack.c.h.b16 %v313
    %v1179 = vunpack.c.l.b16 %v314
    %v1180 = vunpack.c.h.b16 %v314
    %v1181 = vunpack.c.l.b16 %v315
    %v1182 = vunpack.c.h.b16 %v315
    %v1183 = vunpack.c.l.b16 %v316
    %v1184 = vunpack.c.h.b16 %v316
    %v1185 = vunpack.c.l.b16 %v317
    %v1186 = vunpack.c.h.b16 %v317
    %v1187 = vunpack.c.l.b16 %v318
    %v1188 = vunpack.c.h.b16 %v318
    %v1189 = vunpack.c.l.b16 %v319
    %v1190 = vunpack.c.h.b16 %v319
    %v1191 = vunpack.c.l.b16 %v320
    %v1192 = vunpack.c.h.b16 %v320
    %v1193 = vunpack.c.l.b16 %v321
    %v1194 = vunpack.c.h.b16 %v321
    %v1195 = vunpack.c.l.b16 %v322
    %v1196 = vunpack.c.h.b16 %v322
    %v1197 = vunpack.c.l.b16 %v323
    %v1198 = vunpack.c.h.b16 %v323
    %v1199 = vunpack.c.l.b16 %v324
    %v1200 = vunpack.c.h.b16 %v324
    %v1201 = vunpack.c.l.b16 %v325
    %v1202 = vunpack.c.h.b16 %v325
    %v1203 = vunpack.c.l.b16 %v326
    %v1204 = vunpack.c.h.b16 %v326
    %v1205 = vunpack.c.l.b16 %v327
    %v1206 = vunpack.c.h.b16 %v327
    %v1207 = vunpack.c.l.b16 %v328
    %v1208 = vunpack.c.h.b16 %v328
    %v1209 = vunpack.c.l.b16 %v329
    %v1210 = vunpack.c.h.b16 %v329
    %v1211 = vunpack.c.l.b16 %v330
    %v1212 = vunpack.c.h.b16 %v330
    %v1213 = vunpack.c.l.b16 %v331
    %v1214 = vunpack.c.h.b16 %v331
    %v1215 = vunpack.c.l.b16 %v332
    %v1216 = vunpack.c.h.b16 %v332
    %v1217 = vunpack.c.l.b16 %v333
    %v1218 = vunpack.c.h.b16 %v333
    %v1219 = vunpack.c.l.b16 %v334
    %v1220 = vunpack.c.h.b16 %v334
    %v1221 = vunpack.c.l.b16 %v335
    %v1222 = vunpack.c.h.b16 %v335
    %v1223 = vunpack.c.l.b16 %v336
    %v1224 = vunpack.c.h.b16 %v336
    %v1225 = vunpack.c.l.b16 %v337
    %v1226 = vunpack.c.h.b16 %v337
    %v1227 = vunpack.c.l.b16 %v338
    %v1228 = vunpack.c.h.b16 %v338
    %v1229 = vunpack.c.l.b16 %v339
    %v1230 = vunpack.c.h.b16 %v339
    %v1231 = vunpack.c.l.b16 %v340
    %v1232 = vunpack.c.h.b16 %v340
    %v1233 = vunpack.c.l.b16 %v341
    %v1234 = vunpack.c.h.b16 %v341
    %v1235 = vunpack.c.l.b16 %v342
    %v1236 = vunpack.c.h.b16 %v342
    %v1237 = vunpack.c.l.b16 %v343
    %v1238 = vunpack.c.h.b16 %v343
    %v1239 = vunpack.c.l.b16 %v344
    %v1240 = vunpack.c.h.b16 %v344
    %v1241 = vunpack.c.l.b16 %v345
    %v1242 = vunpack.c.h.b16 %v345
    %v1243 = vunpack.c.l.b16 %v346
    %v1244 = vunpack.c.h.b16 %v346
    %v1245 = vunpack.c.l.b16 %v347
    %v1246 = vunpack.c.h.b16 %v347
    %v1247 = vunpack.c.l.b16 %v348
    %v1248 = vunpack.c.h.b16 %v348
    %v1249 = vunpack.c.l.b16 %v349
    %v1250 = vunpack.c.h.b16 %v349
    %v1251 = vunpack.c.l.b16 %v350
    %v1252 = vunpack.c.h.b16 %v350
    %v1253 = vunpack.c.l.b16 %v351
    %v1254 = vunpack.c.h.b16 %v351
    %v1255 = vunpack.c.l.b16 %v352
    %v1256 = vunpack.c.h.b16 %v352
    %v1257 = vunpack.c.l.b16 %v353
    %v1258 = vunpack.c.h.b16 %v353
    %v1259 = vunpack.c.l.b16 %v354
    %v1260 = vunpack.c.h.b16 %v354
    %v1261 = vunpack.c.l.b16 %v355
    %v1262 = vunpack.c.h.b16 %v355
    %v1263 = vunpack.c.l.b16 %v356
    %v1264 = vunpack.c.h.b16 %v356
    %v1265 = vunpack.c.l.b16 %v357
    %v1266 = vunpack.c.h.b16 %v357
    %v1267 = vunpack.c.l.b16 %v358
    %v1268 = vunpack.c.h.b16 %v358
    %v1269 = vunpack.c.l.b16 %v359
    %v1270 = vunpack.c.h.b16 %v359
    %v1271 = vunpack.c.l.b16 %v360
    %v1272 = vunpack.c.h.b16 %v360
    %v1273 = vunpack.c.l.b16 %v361
    %v1274 = vunpack.c.h.b16 %v361
    %v1275 = vunpack.c.l.b16 %v362
    %v1276 = vunpack.c.h.b16 %v362
    %v1277 = vunpack.c.l.b16 %v363
    %v1278 = vunpack.c.h.b16 %v363
    %v1279 = vunpack.c.l.b16 %v364
    %v1280 = vunpack.c.h.b16 %v364
    %v1281 = vunpack.c.l.b16 %v365
    %v1282 = vunpack.c.h.b16 %v365
    %v1283 = vpack.c.b16 %v713, %v707
    %v1284 = vpack.c.b16 %v714, %v708
    %v1285 = vpack.c.b16 %v715, %v709
    %v1286 = vpack.c.b16 %v716, %v710
    %v1287 = vpack.c.b16 %v717, %v711
    %v1288 = vpack.c.b16 %v718, %v712
    %v1289 = vpack.c.b16 %v725, %v719
    %v1290 = vpack.c.b16 %v726, %v720
    %v1291 = vpack.c.b16 %v727, %v721
    %v1292 = vpack.c.b16 %v728, %v722
    %v1293 = vpack.c.b16 %v729, %v723
    %v1294 = vpack.c.b16 %v730, %v724
    %v1295 = vpack.c.b16 %v737, %v731
    %v1296 = vpack.c.b16 %v738, %v732
    %v1297 = vpack.c.b16 %v739, %v733
    %v1298 = vpack.c.b16 %v740, %v734
    %v1299 = vpack.c.b16 %v741, %v735
    %v1300 = vpack.c.b16 %v742, %v736
    %v1301 = vpack.c.b16 %v749, %v743
    %v1302 = vpack.c.b16 %v750, %v744
    %v1303 = vpack.c.b16 %v751, %v745
    %v1304 = vpack.c.b16 %v752, %v746
    %v1305 = vpack.c.b16 %v753, %v747
    %v1306 = vpack.c.b16 %v754, %v748
    %v1307 = vpack.c.b16 %v761, %v755
    %v1308 = vpack.c.b16 %v762, %v756
    %v1309 = vpack.c.b16 %v763, %v757
    %v1310 = vpack.c.b16 %v764, %v758
    %v1311 = vpack.c.b16 %v765, %v759
    %v1312 = vpack.c.b16 %v766, %v760
    %v1313 = vpack.c.b16 %v773, %v767
    %v1314 = vpack.c.b16 %v774, %v768
    %v1315 = vpack.c.b16 %v775, %v769
    %v1316 = vpack.c.b16 %v776, %v770
    %v1317 = vpack.c.b16 %v777, %v771
    %v1318 = vpack.c.b16 %v778, %v772
    %v1319 = vpack.c.b16 %v785, %v779
    %v1320 = vpack.c.b16 %v786, %v780
    %v1321 = vpack.c.b16 %v787, %v781
    %v1322 = vpack.c.b16 %v788, %v782
    %v1323 = vpack.c.b16 %v789, %v783
    %v1324 = vpack.c.b16 %v790, %v784
    %v1325 = vpack.c.b16 %v797, %v791
    %v1326 = vpack.c.b16 %v798, %v792
    %v1327 = vpack.c.b16 %v799, %v793
    %v1328 = vpack.c.b16 %v800, %v794
    %v1329 = vpack.c.b16 %v801, %v795
    %v1330 = vpack.c.b16 %v802, %v796
    %v1331 = vpack.c.b16 %v809, %v803
    %v1332 = vpack.c.b16 %v810, %v804
    %v1333 = vpack.c.b16 %v811, %v805
    %v1334 = vpack.c.b16 %v812, %v806
    %v1335 = vpack.c.b16 %v813, %v807
    %v1336 = vpack.c.b16 %v814, %v808
    %v1337 = vpack.c.b16 %v821, %v815
    %v1338 = vpack.c.b16 %v822, %v816
    %v1339 = vpack.c.b16 %v823, %v817
    %v1340 = vpack.c.b16 %v824, %v818
    %v1341 = vpack.c.b16 %v825, %v819
    %v1342 = vpack.c.b16 %v826, %v820
    %v1343 = vpack.c.b16 %v833, %v827
    %v1344 = vpack.c.b16 %v834, %v828
    %v1345 = vpack.c.b16 %v835, %v829
    %v1346 = vpack.c.b16 %v836, %v830
    %v1347 = vpack.c.b16 %v837, %v831
    %v1348 = vpack.c.b16 %v838, %v832
    %v1349 = vpack.c.b16 %v845, %v839
    %v1350 = vpack.c.b16 %v846, %v840
    %v1351 = vpack.c.b16 %v847, %v841
    %v1352 = vpack.c.b16 %v848, %v842
    %v1353 = vpack.c.b16 %v849, %v843
    %v1354 = vpack.c.b16 %v850, %v844
    %v1355 = vpack.c.b16 %v857, %v851
    %v1356 = vpack.c.b16 %v858, %v852
    %v1357 = vpack.c.b16 %v859, %v853
    %v1358 = vpack.c.b16 %v860, %v854
    %v1359 = vpack.c.b16 %v861, %v855
    %v1360 = vpack.c.b16 %v862, %v856
    %v1361 = vpack.c.b16 %v869, %v863
    %v1362 = vpack.c.b16 %v870, %v864
    %v1363 = vpack.c.b16 %v871, %v865
    %v1364 = vpack.c.b16 %v872, %v866
    %v1365 = vpack.c.b16 %v873, %v867
    %v1366 = vpack.c.b16 %v874, %v868
    %v1367 = vpack.c.b16 %v881, %v875
    %v1368 = vpack.c.b16 %v882, %v876
    %v1369 = vpack.c.b16 %v883, %v877
    %v1370 = vpack.c.b16 %v884, %v878
    %v1371 = vpack.c.b16 %v885, %v879
    %v1372 = vpack.c.b16 %v886, %v880
    %v1373 = vpack.c.b16 %v893, %v887
    %v1374 = vpack.c.b16 %v894, %v888
    %v1375 = vpack.c.b16 %v895, %v889
    %v1376 = vpack.c.b16 %v896, %v890
    %v1377 = vpack.c.b16 %v897, %v891
    %v1378 = vpack.c.b16 %v898, %v892
    %v1379 = vpack.c.b16 %v905, %v899
    %v1380 = vpack.c.b16 %v906, %v900
    %v1381 = vpack.c.b16 %v907, %v901
    %v1382 = vpack.c.b16 %v908, %v902
    %v1383 = vpack.c.b16 %v909, %v903
    %v1384 = vpack.c.b16 %v910, %v904
    %v1385 = vpack.c.b16 %v917, %v911
    %v1386 = vpack.c.b16 %v918, %v912
    %v1387 = vpack.c.b16 %v919, %v913
    %v1388 = vpack.c.b16 %v920, %v914
    %v1389 = vpack.c.b16 %v921, %v915
    %v1390 = vpack.c.b16 %v922, %v916
    %v1391 = vpack.c.b16 %v929, %v923
    %v1392 = vpack.c.b16 %v930, %v924
    %v1393 = vpack.c.b16 %v931, %v925
    %v1394 = vpack.c.b16 %v932, %v926
    %v1395 = vpack.c.b16 %v933, %v927
    %v1396 = vpack.c.b16 %v934, %v928
    %v1397 = vpack.c.b16 %v941, %v935
    %v1398 = vpack.c.b16 %v942, %v936
    %v1399 = vpack.c.b16 %v943, %v937
    %v1400 = vpack.c.b16 %v944, %v938
    %v1401 = vpack.c.b16 %v945, %v939
    %v1402 = vpack.c.b16 %v946, %v940
    %v1403 = vpack.c.b16 %v953, %v947
    %v1404 = vpack.c.b16 %v954, %v948
    %v1405 = vpack.c.b16 %v955, %v949
    %v1406 = vpack.c.b16 %v956, %v950
    %v1407 = vpack.c.b16 %v957, %v951
    %v1408 = vpack.c.b16 %v958, %v952
    %v1409 = vpack.c.b16 %v965, %v959
    %v1410 = vpack.c.b16 %v966, %v960
    %v1411 = vpack.c.b16 %v967, %v961
    %v1412 = vpack.c.b16 %v968, %v962
    %v1413 = vpack.c.b16 %v969, %v963
    %v1414 = vpack.c.b16 %v970, %v964
    %v1415 = vpack.c.b16 %v977, %v971
    %v1416 = vpack.c.b16 %v978, %v972
    %v1417 = vpack.c.b16 %v979, %v973
    %v1418 = vpack.c.b16 %v980, %v974
    %v1419 = vpack.c.b16 %v981, %v975
    %v1420 = vpack.c.b16 %v982, %v976
    %v1421 = vpack.c.b16 %v989, %v983
    %v1422 = vpack.c.b16 %v990, %v984
    %v1423 = vpack.c.b16 %v991, %v985
    %v1424 = vpack.c.b16 %v992, %v986
    %v1425 = vpack.c.b16 %v993, %v987
    %v1426 = vpack.c.b16 %v994, %v988
    %v1427 = vpack.c.b16 %v1001, %v995
    %v1428 = vpack.c.b16 %v1002, %v996
    %v1429 = vpack.c.b16 %v1003, %v997
    %v1430 = vpack.c.b16 %v1004, %v998
    %v1431 = vpack.c.b16 %v1005, %v999
    %v1432 = vpack.c.b16 %v1006, %v1000
    %v1433 = vpack.c.b16 %v1013, %v1007
    %v1434 = vpack.c.b16 %v1014, %v1008
    %v1435 = vpack.c.b16 %v1015, %v1009
    %v1436 = vpack.c.b16 %v1016, %v1010
    %v1437 = vpack.c.b16 %v1017, %v1011
    %v1438 = vpack.c.b16 %v1018, %v1012
    %v1439 = vpack.c.b16 %v1025, %v1019
    %v1440 = vpack.c.b16 %v1026, %v1020
    %v1441 = vpack.c.b16 %v1027, %v1021
    %v1442 = vpack.c.b16 %v1028, %v1022
    %v1443 = vpack.c.b16 %v1029, %v1023
    %v1444 = vpack.c.b16 %v1030, %v1024
    %v1445 = vpack.c.b16 %v1037, %v1031
    %v1446 = vpack.c.b16 %v1038, %v1032
    %v1447 = vpack.c.b16 %v1039, %v1033
    %v1448 = vpack.c.b16 %v1040, %v1034
    %v1449 = vpack.c.b16 %v1041, %v1035
    %v1450 = vpack.c.b16 %v1042, %v1036
    %v1451 = vpack.c.b16 %v1049, %v1043
    %v1452 = vpack.c.b16 %v1050, %v1044
    %v1453 = vpack.c.b16 %v1051, %v1045
    %v1454 = vpack.c.b16 %v1052, %v1046
    %v1455 = vpack.c.b16 %v1053, %v1047
    %v1456 = vpack.c.b16 %v1054, %v1048
    %v1457 = vpack.c.b16 %v1061, %v1055
    %v1458 = vpack.c.b16 %v1062, %v1056
    %v1459 = vpack.c.b16 %v1063, %v1057
    %v1460 = vpack.c.b16 %v1064, %v1058
    %v1461 = vpack.c.b16 %v1065, %v1059
    %v1462 = vpack.c.b16 %v1066, %v1060
    %v1463 = vpack.c.b16 %v1073, %v1067
    %v1464 = vpack.c.b16 %v1074, %v1068
    %v1465 = vpack.c.b16 %v1075, %v1069
    %v1466 = vpack.c.b16 %v1076, %v1070
    %v1467 = vpack.c.b16 %v1077, %v1071
    %v1468 = vpack.c.b16 %v1078, %v1072
    %v1469 = vpack.c.b16 %v1085, %v1079
    %v1470 = vpack.c.b16 %v1086, %v1080
    %v1471 = vpack.c.b16 %v1087, %v1081
    %v1472 = vpack.c.b16 %v1088, %v1082
    %v1473 = vpack.c.b16 %v1089, %v1083
    %v1474 = vpack.c.b16 %v1090, %v1084
    %v1475 = vpack.c.b16 %v1097, %v1091
    %v1476 = vpack.c.b16 %v1098, %v1092
    %v1477 = vpack.c.b16 %v1099, %v1093
    %v1478 = vpack.c.b16 %v1100, %v1094
    %v1479 = vpack.c.b16 %v1101, %v1095
    %v1480 = vpack.c.b16 %v1102, %v1096
    %v1481 = vpack.c.b16 %v1109, %v1103
    %v1482 = vpack.c.b16 %v1110, %v1104
    %v1483 = vpack.c.b16 %v1111, %v1105
    %v1484 = vpack.c.b16 %v1112, %v1106
    %v1485 = vpack.c.b16 %v1113, %v1107
    %v1486 = vpack.c.b16 %v1114, %v1108
    %v1487 = vpack.c.b16 %v1121, %v1115
    %v1488 = vpack.c.b16 %v1122, %v1116
    %v1489 = vpack.c.b16 %v1123, %v1117
    %v1490 = vpack.c.b16 %v1124, %v1118
    %v1491 = vpack.c.b16 %v1125, %v1119
    %v1492 = vpack.c.b16 %v1126, %v1120
    %v1493 = vpack.c.b16 %v1133, %v1127
    %v1494 = vpack.c.b16 %v1134, %v1128
    %v1495 = vpack.c.b16 %v1135, %v1129
    %v1496 = vpack.c.b16 %v1136, %v1130
    %v1497 = vpack.c.b16 %v1137, %v1131
    %v1498 = vpack.c.b16 %v1138, %v1132
    %v1499 = vpack.c.b16 %v1145, %v1139
    %v1500 = vpack.c.b16 %v1146, %v1140
    %v1501 = vpack.c.b16 %v1147, %v1141
    %v1502 = vpack.c.b16 %v1148, %v1142
    %v1503 = vpack.c.b16 %v1149, %v1143
    %v1504 = vpack.c.b16 %v1150, %v1144
    %v1505 = vpack.c.b16 %v1157, %v1151
    %v1506 = vpack.c.b16 %v1158, %v1152
    %v1507 = vpack.c.b16 %v1159, %v1153
    %v1508 = vpack.c.b16 %v1160, %v1154
    %v1509 = vpack.c.b16 %v1161, %v1155
    %v1510 = vpack.c.b16 %v1162, %v1156
    %v1511 = vpack.c.b16 %v1169, %v1163
    %v1512 = vpack.c.b16 %v1170, %v1164
    %v1513 = vpack.c.b16 %v1171, %v1165
    %v1514 = vpack.c.b16 %v1172, %v1166
    %v1515 = vpack.c.b16 %v1173, %v1167
    %v1516 = vpack.c.b16 %v1174, %v1168
    %v1517 = vpack.c.b16 %v1181, %v1175
    %v1518 = vpack.c.b16 %v1182, %v1176
    %v1519 = vpack.c.b16 %v1183, %v1177
    %v1520 = vpack.c.b16 %v1184, %v1178
    %v1521 = vpack.c.b16 %v1185, %v1179
    %v1522 = vpack.c.b16 %v1186, %v1180
    %v1523 = vpack.c.b16 %v1193, %v1187
    %v1524 = vpack.c.b16 %v1194, %v1188
    %v1525 = vpack.c.b16 %v1195, %v1189
    %v1526 = vpack.c.b16 %v1196, %v1190
    %v1527 = vpack.c.b16 %v1197, %v1191
    %v1528 = vpack.c.b16 %v1198, %v1192
    %v1529 = vpack.c.b16 %v1205, %v1199
    %v1530 = vpack.c.b16 %v1206, %v1200
    %v1531 = vpack.c.b16 %v1207, %v1201
    %v1532 = vpack.c.b16 %v1208, %v1202
    %v1533 = vpack.c.b16 %v1209, %v1203
    %v1534 = vpack.c.b16 %v1210, %v1204
    %v1535 = vpack.c.b16 %v1217, %v1211
    %v1536 = vpack.c.b16 %v1218, %v1212
    %v1537 = vpack.c.b16 %v1219, %v1213
    %v1538 = vpack.c.b16 %v1220, %v1214
    %v1539 = vpack.c.b16 %v1221, %v1215
    %v1540 = vpack.c.b16 %v1222, %v1216
    %v1541 = vpack.c.b16 %v1229, %v1223
    %v1542 = vpack.c.b16 %v1230, %v1224
    %v1543 = vpack.c.b16 %v1231, %v1225
    %v1544 = vpack.c.b16 %v1232, %v1226
    %v1545 = vpack.c.b16 %v1233, %v1227
    %v1546 = vpack.c.b16 %v1234, %v1228
    %v1547 = vpack.c.b16 %v1241, %v1235
    %v1548 = vpack.c.b16 %v1242, %v1236
    %v1549 = vpack.c.b16 %v1243, %v1237
    %v1550 = vpack.c.b16 %v1244, %v1238
    %v1551 = vpack.c.b16 %v1245, %v1239
    %v1552 = vpack.c.b16 %v1246, %v1240
    %v1553 = vpack.c.b16 %v1253, %v1247
    %v1554 = vpack.c.b16 %v1254, %v1248
    %v1555 = vpack.c.b16 %v1255, %v1249
    %v1556 = vpack.c.b16 %v1256, %v1250
    %v1557 = vpack.c.b16 %v1257, %v1251
    %v1558 = vpack.c.b16 %v1258, %v1252
    %v1559 = vpack.c.b16 %v1265, %v1259
    %v1560 = vpack.c.b16 %v1266, %v1260
    %v1561 = vpack.c.b16 %v1267, %v1261
    %v1562 = vpack.c.b16 %v1268, %v1262
    %v1563 = vpack.c.b16 %v1269, %v1263
    %v1564 = vpack.c.b16 %v1270, %v1264
    %v1565 = vpack.c.b16 %v1277, %v1271
    %v1566 = vpack.c.b16 %v1278, %v1272
    %v1567 = vpack.c.b16 %v1279, %v1273
    %v1568 = vpack.c.b16 %v1280, %v1274
    %v1569 = vpack.c.b16 %v1281, %v1275
    %v1570 = vpack.c.b16 %v1282, %v1276
    %1859 = vmatprep.subr.bf16.mxu0 %v1326
    %1860 = vmatpush1.bf16.msra.mxu0 %v1325
    %1861 = vmatprep.subr.bf16.mxu0 %v1320
    %1862 = vmatpush1.bf16.msra.mxu0 %v1319
    %1863 = vmatprep.subr.bf16.mxu0 %v1314
    %1864 = vmatpush1.bf16.msra.mxu0 %v1313
    %1865 = vmatprep.subr.bf16.mxu0 %v1308
    %1866 = vmatpush1.bf16.msra.mxu0 %v1307
    %1867 = vmatprep.subr.bf16.mxu0 %v1302
    %1868 = vmatpush1.bf16.msra.mxu0 %v1301
    %1869 = vmatprep.subr.bf16.mxu0 %v1296
    %1870 = vmatpush1.bf16.msra.mxu0 %v1295
    %1871 = vmatprep.subr.bf16.mxu0 %v1290
    %1872 = vmatpush1.bf16.msra.mxu0 %v1289
    %1873 = vmatprep.subr.bf16.mxu0 %v1284
    %1874 = vmatpush1.bf16.msra.mxu0 %v1283
    %1875 = vmatprep.subr.bf16.mxu0 %v1374
    %1876 = vmatpush2.bf16.msra.mxu0 %v1373
    %1877 = vmatprep.subr.bf16.mxu0 %v1368
    %1878 = vmatpush2.bf16.msra.mxu0 %v1367
    %1879 = vmatprep.subr.bf16.mxu0 %v1362
    %1880 = vmatpush2.bf16.msra.mxu0 %v1361
    %1881 = vmatprep.subr.bf16.mxu0 %v1356
    %1882 = vmatpush2.bf16.msra.mxu0 %v1355
    %1883 = vmatprep.subr.bf16.mxu0 %v1350
    %1884 = vmatpush2.bf16.msra.mxu0 %v1349
    %1885 = vmatprep.subr.bf16.mxu0 %v1344
    %1886 = vmatpush2.bf16.msra.mxu0 %v1343
    %1887 = vmatprep.subr.bf16.mxu0 %v1338
    %1888 = vmatpush2.bf16.msra.mxu0 %v1337
    %1889 = vmatprep.subr.bf16.mxu0 %v1332
    %1890 = vmatpush2.bf16.msra.mxu0 %v1331
    %1891 = vmatprep.mubr.bf16.mxu0 %v408
    %1892 = vmatmul.mubr.bf16.gmra.mxu0 %v407
    %v1893 = vpop.f32.mrf.mxu0
    %v1894 = vadd.f32 %v371, %v1893
    %v1895 = vpop.f32.mrf.mxu0
    %v1896 = vadd.f32 %v375, %v1895
    %v1897 = vpop.f32.mrf.mxu0
    %v1898 = vpop.f32.mrf.mxu0
    %1899 = vdwg.mxu0
    %1900 = vmatprep.subr.bf16.mxu0 %v1422
    %1901 = vmatpush1.bf16.msra.mxu0 %v1421
    %1902 = vmatprep.subr.bf16.mxu0 %v1416
    %1903 = vmatpush1.bf16.msra.mxu0 %v1415
    %1904 = vmatprep.subr.bf16.mxu0 %v1410
    %1905 = vmatpush1.bf16.msra.mxu0 %v1409
    %1906 = vmatprep.subr.bf16.mxu0 %v1404
    %1907 = vmatpush1.bf16.msra.mxu0 %v1403
    %1908 = vmatprep.subr.bf16.mxu0 %v1398
    %1909 = vmatpush1.bf16.msra.mxu0 %v1397
    %1910 = vmatprep.subr.bf16.mxu0 %v1392
    %1911 = vmatpush1.bf16.msra.mxu0 %v1391
    %1912 = vmatprep.subr.bf16.mxu0 %v1386
    %1913 = vmatpush1.bf16.msra.mxu0 %v1385
    %1914 = vmatprep.subr.bf16.mxu0 %v1380
    %1915 = vmatpush1.bf16.msra.mxu0 %v1379
    %1916 = vmatprep.subr.bf16.mxu0 %v1470
    %1917 = vmatpush2.bf16.msra.mxu0 %v1469
    %1918 = vmatprep.subr.bf16.mxu0 %v1464
    %1919 = vmatpush2.bf16.msra.mxu0 %v1463
    %1920 = vmatprep.subr.bf16.mxu0 %v1458
    %1921 = vmatpush2.bf16.msra.mxu0 %v1457
    %1922 = vmatprep.subr.bf16.mxu0 %v1452
    %1923 = vmatpush2.bf16.msra.mxu0 %v1451
    %1924 = vmatprep.subr.bf16.mxu0 %v1446
    %1925 = vmatpush2.bf16.msra.mxu0 %v1445
    %1926 = vmatprep.subr.bf16.mxu0 %v1440
    %1927 = vmatpush2.bf16.msra.mxu0 %v1439
    %1928 = vmatprep.subr.bf16.mxu0 %v1434
    %1929 = vmatpush2.bf16.msra.mxu0 %v1433
    %1930 = vmatprep.subr.bf16.mxu0 %v1428
    %1931 = vmatpush2.bf16.msra.mxu0 %v1427
    %1932 = vmatprep.mubr.bf16.mxu0 %v410
    %1933 = vmatmul.mubr.bf16.gmra.mxu0 %v409
    %v1934 = vpop.f32.mrf.mxu0
    %v1935 = vadd.f32 %v1894, %v1934
    %v1936 = vpop.f32.mrf.mxu0
    %v1937 = vadd.f32 %v1896, %v1936
    %v1938 = vpop.f32.mrf.mxu0
    %v1939 = vpop.f32.mrf.mxu0
    %1940 = vdwg.mxu0
    %1941 = vmatprep.subr.bf16.mxu0 %v1518
    %1942 = vmatpush1.bf16.msra.mxu0 %v1517
    %1943 = vmatprep.subr.bf16.mxu0 %v1512
    %1944 = vmatpush1.bf16.msra.mxu0 %v1511
    %1945 = vmatprep.subr.bf16.mxu0 %v1506
    %1946 = vmatpush1.bf16.msra.mxu0 %v1505
    %1947 = vmatprep.subr.bf16.mxu0 %v1500
    %1948 = vmatpush1.bf16.msra.mxu0 %v1499
    %1949 = vmatprep.subr.bf16.mxu0 %v1494
    %1950 = vmatpush1.bf16.msra.mxu0 %v1493
    %1951 = vmatprep.subr.bf16.mxu0 %v1488
    %1952 = vmatpush1.bf16.msra.mxu0 %v1487
    %1953 = vmatprep.subr.bf16.mxu0 %v1482
    %1954 = vmatpush1.bf16.msra.mxu0 %v1481
    %1955 = vmatprep.subr.bf16.mxu0 %v1476
    %1956 = vmatpush1.bf16.msra.mxu0 %v1475
    %1957 = vmatprep.subr.bf16.mxu0 %v1566
    %1958 = vmatpush2.bf16.msra.mxu0 %v1565
    %1959 = vmatprep.subr.bf16.mxu0 %v1560
    %1960 = vmatpush2.bf16.msra.mxu0 %v1559
    %1961 = vmatprep.subr.bf16.mxu0 %v1554
    %1962 = vmatpush2.bf16.msra.mxu0 %v1553
    %1963 = vmatprep.subr.bf16.mxu0 %v1548
    %1964 = vmatpush2.bf16.msra.mxu0 %v1547
    %1965 = vmatprep.subr.bf16.mxu0 %v1542
    %1966 = vmatpush2.bf16.msra.mxu0 %v1541
    %1967 = vmatprep.subr.bf16.mxu0 %v1536
    %1968 = vmatpush2.bf16.msra.mxu0 %v1535
    %1969 = vmatprep.subr.bf16.mxu0 %v1530
    %1970 = vmatpush2.bf16.msra.mxu0 %v1529
    %1971 = vmatprep.subr.bf16.mxu0 %v1524
    %1972 = vmatpush2.bf16.msra.mxu0 %v1523
    %1973 = vmatprep.mubr.bf16.mxu0 %v412
    %1974 = vmatmul.mubr.bf16.gmra.mxu0 %v411
    %v1975 = vpop.f32.mrf.mxu0
    %v1976 = vadd.f32 %v1935, %v1975
    %v1977 = vpop.f32.mrf.mxu0
    %v1978 = vadd.f32 %v1937, %v1977
    %v1979 = vpop.f32.mrf.mxu0
    %v1980 = vpop.f32.mrf.mxu0
    %1981 = vdwg.mxu0
    %1982 = vmatprep.subr.bf16.mxu0 %v1328
    %1983 = vmatpush1.bf16.msra.mxu0 %v1327
    %1984 = vmatprep.subr.bf16.mxu0 %v1322
    %1985 = vmatpush1.bf16.msra.mxu0 %v1321
    %1986 = vmatprep.subr.bf16.mxu0 %v1316
    %1987 = vmatpush1.bf16.msra.mxu0 %v1315
    %1988 = vmatprep.subr.bf16.mxu0 %v1310
    %1989 = vmatpush1.bf16.msra.mxu0 %v1309
    %1990 = vmatprep.subr.bf16.mxu0 %v1304
    %1991 = vmatpush1.bf16.msra.mxu0 %v1303
    %1992 = vmatprep.subr.bf16.mxu0 %v1298
    %1993 = vmatpush1.bf16.msra.mxu0 %v1297
    %1994 = vmatprep.subr.bf16.mxu0 %v1292
    %1995 = vmatpush1.bf16.msra.mxu0 %v1291
    %1996 = vmatprep.subr.bf16.mxu0 %v1286
    %1997 = vmatpush1.bf16.msra.mxu0 %v1285
    %1998 = vmatprep.subr.bf16.mxu0 %v1376
    %1999 = vmatpush2.bf16.msra.mxu0 %v1375
    %2000 = vmatprep.subr.bf16.mxu0 %v1370
    %2001 = vmatpush2.bf16.msra.mxu0 %v1369
    %2002 = vmatprep.subr.bf16.mxu0 %v1364
    %2003 = vmatpush2.bf16.msra.mxu0 %v1363
    %2004 = vmatprep.subr.bf16.mxu0 %v1358
    %2005 = vmatpush2.bf16.msra.mxu0 %v1357
    %2006 = vmatprep.subr.bf16.mxu0 %v1352
    %2007 = vmatpush2.bf16.msra.mxu0 %v1351
    %2008 = vmatprep.subr.bf16.mxu0 %v1346
    %2009 = vmatpush2.bf16.msra.mxu0 %v1345
    %2010 = vmatprep.subr.bf16.mxu0 %v1340
    %2011 = vmatpush2.bf16.msra.mxu0 %v1339
    %2012 = vmatprep.subr.bf16.mxu0 %v1334
    %2013 = vmatpush2.bf16.msra.mxu0 %v1333
    %2014 = vmatprep.mubr.bf16.mxu0 %v408
    %2015 = vmatmul.mubr.bf16.gmra.mxu0 %v407
    %v2016 = vpop.f32.mrf.mxu0
    %v2017 = vadd.f32 %v379, %v2016
    %v2018 = vpop.f32.mrf.mxu0
    %v2019 = vadd.f32 %v383, %v2018
    %v2020 = vpop.f32.mrf.mxu0
    %v2021 = vpop.f32.mrf.mxu0
    %2022 = vdwg.mxu0
    %2023 = vmatprep.subr.bf16.mxu0 %v1424
    %2024 = vmatpush1.bf16.msra.mxu0 %v1423
    %2025 = vmatprep.subr.bf16.mxu0 %v1418
    %2026 = vmatpush1.bf16.msra.mxu0 %v1417
    %2027 = vmatprep.subr.bf16.mxu0 %v1412
    %2028 = vmatpush1.bf16.msra.mxu0 %v1411
    %2029 = vmatprep.subr.bf16.mxu0 %v1406
    %2030 = vmatpush1.bf16.msra.mxu0 %v1405
    %2031 = vmatprep.subr.bf16.mxu0 %v1400
    %2032 = vmatpush1.bf16.msra.mxu0 %v1399
    %2033 = vmatprep.subr.bf16.mxu0 %v1394
    %2034 = vmatpush1.bf16.msra.mxu0 %v1393
    %2035 = vmatprep.subr.bf16.mxu0 %v1388
    %2036 = vmatpush1.bf16.msra.mxu0 %v1387
    %2037 = vmatprep.subr.bf16.mxu0 %v1382
    %2038 = vmatpush1.bf16.msra.mxu0 %v1381
    %2039 = vmatprep.subr.bf16.mxu0 %v1472
    %2040 = vmatpush2.bf16.msra.mxu0 %v1471
    %2041 = vmatprep.subr.bf16.mxu0 %v1466
    %2042 = vmatpush2.bf16.msra.mxu0 %v1465
    %2043 = vmatprep.subr.bf16.mxu0 %v1460
    %2044 = vmatpush2.bf16.msra.mxu0 %v1459
    %2045 = vmatprep.subr.bf16.mxu0 %v1454
    %2046 = vmatpush2.bf16.msra.mxu0 %v1453
    %2047 = vmatprep.subr.bf16.mxu0 %v1448
    %2048 = vmatpush2.bf16.msra.mxu0 %v1447
    %2049 = vmatprep.subr.bf16.mxu0 %v1442
    %2050 = vmatpush2.bf16.msra.mxu0 %v1441
    %2051 = vmatprep.subr.bf16.mxu0 %v1436
    %2052 = vmatpush2.bf16.msra.mxu0 %v1435
    %2053 = vmatprep.subr.bf16.mxu0 %v1430
    %2054 = vmatpush2.bf16.msra.mxu0 %v1429
    %2055 = vmatprep.mubr.bf16.mxu0 %v410
    %2056 = vmatmul.mubr.bf16.gmra.mxu0 %v409
    %v2057 = vpop.f32.mrf.mxu0
    %v2058 = vadd.f32 %v2017, %v2057
    %v2059 = vpop.f32.mrf.mxu0
    %v2060 = vadd.f32 %v2019, %v2059
    %v2061 = vpop.f32.mrf.mxu0
    %v2062 = vpop.f32.mrf.mxu0
    %2063 = vdwg.mxu0
    %2064 = vmatprep.subr.bf16.mxu0 %v1520
    %2065 = vmatpush1.bf16.msra.mxu0 %v1519
    %2066 = vmatprep.subr.bf16.mxu0 %v1514
    %2067 = vmatpush1.bf16.msra.mxu0 %v1513
    %2068 = vmatprep.subr.bf16.mxu0 %v1508
    %2069 = vmatpush1.bf16.msra.mxu0 %v1507
    %2070 = vmatprep.subr.bf16.mxu0 %v1502
    %2071 = vmatpush1.bf16.msra.mxu0 %v1501
    %2072 = vmatprep.subr.bf16.mxu0 %v1496
    %2073 = vmatpush1.bf16.msra.mxu0 %v1495
    %2074 = vmatprep.subr.bf16.mxu0 %v1490
    %2075 = vmatpush1.bf16.msra.mxu0 %v1489
    %2076 = vmatprep.subr.bf16.mxu0 %v1484
    %2077 = vmatpush1.bf16.msra.mxu0 %v1483
    %2078 = vmatprep.subr.bf16.mxu0 %v1478
    %2079 = vmatpush1.bf16.msra.mxu0 %v1477
    %2080 = vmatprep.subr.bf16.mxu0 %v1568
    %2081 = vmatpush2.bf16.msra.mxu0 %v1567
    %2082 = vmatprep.subr.bf16.mxu0 %v1562
    %2083 = vmatpush2.bf16.msra.mxu0 %v1561
    %2084 = vmatprep.subr.bf16.mxu0 %v1556
    %2085 = vmatpush2.bf16.msra.mxu0 %v1555
    %2086 = vmatprep.subr.bf16.mxu0 %v1550
    %2087 = vmatpush2.bf16.msra.mxu0 %v1549
    %2088 = vmatprep.subr.bf16.mxu0 %v1544
    %2089 = vmatpush2.bf16.msra.mxu0 %v1543
    %2090 = vmatprep.subr.bf16.mxu0 %v1538
    %2091 = vmatpush2.bf16.msra.mxu0 %v1537
    %2092 = vmatprep.subr.bf16.mxu0 %v1532
    %2093 = vmatpush2.bf16.msra.mxu0 %v1531
    %2094 = vmatprep.subr.bf16.mxu0 %v1526
    %2095 = vmatpush2.bf16.msra.mxu0 %v1525
    %2096 = vmatprep.mubr.bf16.mxu0 %v412
    %2097 = vmatmul.mubr.bf16.gmra.mxu0 %v411
    %v2098 = vpop.f32.mrf.mxu0
    %v2099 = vadd.f32 %v2058, %v2098
    %v2100 = vpop.f32.mrf.mxu0
    %v2101 = vadd.f32 %v2060, %v2100
    %v2102 = vpop.f32.mrf.mxu0
    %v2103 = vpop.f32.mrf.mxu0
    %2104 = vdwg.mxu0
    %2105 = vmatprep.subr.bf16.mxu0 %v1330
    %2106 = vmatpush1.bf16.msra.mxu0 %v1329
    %2107 = vmatprep.subr.bf16.mxu0 %v1324
    %2108 = vmatpush1.bf16.msra.mxu0 %v1323
    %2109 = vmatprep.subr.bf16.mxu0 %v1318
    %2110 = vmatpush1.bf16.msra.mxu0 %v1317
    %2111 = vmatprep.subr.bf16.mxu0 %v1312
    %2112 = vmatpush1.bf16.msra.mxu0 %v1311
    %2113 = vmatprep.subr.bf16.mxu0 %v1306
    %2114 = vmatpush1.bf16.msra.mxu0 %v1305
    %2115 = vmatprep.subr.bf16.mxu0 %v1300
    %2116 = vmatpush1.bf16.msra.mxu0 %v1299
    %2117 = vmatprep.subr.bf16.mxu0 %v1294
    %2118 = vmatpush1.bf16.msra.mxu0 %v1293
    %2119 = vmatprep.subr.bf16.mxu0 %v1288
    %2120 = vmatpush1.bf16.msra.mxu0 %v1287
    %2121 = vmatprep.subr.bf16.mxu0 %v1378
    %2122 = vmatpush2.bf16.msra.mxu0 %v1377
    %2123 = vmatprep.subr.bf16.mxu0 %v1372
    %2124 = vmatpush2.bf16.msra.mxu0 %v1371
    %2125 = vmatprep.subr.bf16.mxu0 %v1366
    %2126 = vmatpush2.bf16.msra.mxu0 %v1365
    %2127 = vmatprep.subr.bf16.mxu0 %v1360
    %2128 = vmatpush2.bf16.msra.mxu0 %v1359
    %2129 = vmatprep.subr.bf16.mxu0 %v1354
    %2130 = vmatpush2.bf16.msra.mxu0 %v1353
    %2131 = vmatprep.subr.bf16.mxu0 %v1348
    %2132 = vmatpush2.bf16.msra.mxu0 %v1347
    %2133 = vmatprep.subr.bf16.mxu0 %v1342
    %2134 = vmatpush2.bf16.msra.mxu0 %v1341
    %2135 = vmatprep.subr.bf16.mxu0 %v1336
    %2136 = vmatpush2.bf16.msra.mxu0 %v1335
    %2137 = vmatprep.mubr.bf16.mxu0 %v408
    %2138 = vmatmul.mubr.bf16.gmra.mxu0 %v407
    %v2139 = vpop.f32.mrf.mxu0
    %v2140 = vadd.f32 %v387, %v2139
    %v2141 = vpop.f32.mrf.mxu0
    %v2142 = vadd.f32 %v391, %v2141
    %v2143 = vpop.f32.mrf.mxu0
    %v2144 = vpop.f32.mrf.mxu0
    %2145 = vdwg.mxu0
    %2146 = vmatprep.subr.bf16.mxu0 %v1426
    %2147 = vmatpush1.bf16.msra.mxu0 %v1425
    %2148 = vmatprep.subr.bf16.mxu0 %v1420
    %2149 = vmatpush1.bf16.msra.mxu0 %v1419
    %2150 = vmatprep.subr.bf16.mxu0 %v1414
    %2151 = vmatpush1.bf16.msra.mxu0 %v1413
    %2152 = vmatprep.subr.bf16.mxu0 %v1408
    %2153 = vmatpush1.bf16.msra.mxu0 %v1407
    %2154 = vmatprep.subr.bf16.mxu0 %v1402
    %2155 = vmatpush1.bf16.msra.mxu0 %v1401
    %2156 = vmatprep.subr.bf16.mxu0 %v1396
    %2157 = vmatpush1.bf16.msra.mxu0 %v1395
    %2158 = vmatprep.subr.bf16.mxu0 %v1390
    %2159 = vmatpush1.bf16.msra.mxu0 %v1389
    %2160 = vmatprep.subr.bf16.mxu0 %v1384
    %2161 = vmatpush1.bf16.msra.mxu0 %v1383
    %2162 = vmatprep.subr.bf16.mxu0 %v1474
    %2163 = vmatpush2.bf16.msra.mxu0 %v1473
    %2164 = vmatprep.subr.bf16.mxu0 %v1468
    %2165 = vmatpush2.bf16.msra.mxu0 %v1467
    %2166 = vmatprep.subr.bf16.mxu0 %v1462
    %2167 = vmatpush2.bf16.msra.mxu0 %v1461
    %2168 = vmatprep.subr.bf16.mxu0 %v1456
    %2169 = vmatpush2.bf16.msra.mxu0 %v1455
    %2170 = vmatprep.subr.bf16.mxu0 %v1450
    %2171 = vmatpush2.bf16.msra.mxu0 %v1449
    %2172 = vmatprep.subr.bf16.mxu0 %v1444
    %2173 = vmatpush2.bf16.msra.mxu0 %v1443
    %2174 = vmatprep.subr.bf16.mxu0 %v1438
    %2175 = vmatpush2.bf16.msra.mxu0 %v1437
    %2176 = vmatprep.subr.bf16.mxu0 %v1432
    %2177 = vmatpush2.bf16.msra.mxu0 %v1431
    %2178 = vmatprep.mubr.bf16.mxu0 %v410
    %2179 = vmatmul.mubr.bf16.gmra.mxu0 %v409
    %v2180 = vpop.f32.mrf.mxu0
    %v2181 = vadd.f32 %v2140, %v2180
    %v2182 = vpop.f32.mrf.mxu0
    %v2183 = vadd.f32 %v2142, %v2182
    %v2184 = vpop.f32.mrf.mxu0
    %v2185 = vpop.f32.mrf.mxu0
    %2186 = vdwg.mxu0
    %2187 = vmatprep.subr.bf16.mxu0 %v1522
    %2188 = vmatpush1.bf16.msra.mxu0 %v1521
    %2189 = vmatprep.subr.bf16.mxu0 %v1516
    %2190 = vmatpush1.bf16.msra.mxu0 %v1515
    %2191 = vmatprep.subr.bf16.mxu0 %v1510
    %2192 = vmatpush1.bf16.msra.mxu0 %v1509
    %2193 = vmatprep.subr.bf16.mxu0 %v1504
    %2194 = vmatpush1.bf16.msra.mxu0 %v1503
    %2195 = vmatprep.subr.bf16.mxu0 %v1498
    %2196 = vmatpush1.bf16.msra.mxu0 %v1497
    %2197 = vmatprep.subr.bf16.mxu0 %v1492
    %2198 = vmatpush1.bf16.msra.mxu0 %v1491
    %2199 = vmatprep.subr.bf16.mxu0 %v1486
    %2200 = vmatpush1.bf16.msra.mxu0 %v1485
    %2201 = vmatprep.subr.bf16.mxu0 %v1480
    %2202 = vmatpush1.bf16.msra.mxu0 %v1479
    %2203 = vmatprep.subr.bf16.mxu0 %v1570
    %2204 = vmatpush2.bf16.msra.mxu0 %v1569
    %2205 = vmatprep.subr.bf16.mxu0 %v1564
    %2206 = vmatpush2.bf16.msra.mxu0 %v1563
    %2207 = vmatprep.subr.bf16.mxu0 %v1558
    %2208 = vmatpush2.bf16.msra.mxu0 %v1557
    %2209 = vmatprep.subr.bf16.mxu0 %v1552
    %2210 = vmatpush2.bf16.msra.mxu0 %v1551
    %2211 = vmatprep.subr.bf16.mxu0 %v1546
    %2212 = vmatpush2.bf16.msra.mxu0 %v1545
    %2213 = vmatprep.subr.bf16.mxu0 %v1540
    %2214 = vmatpush2.bf16.msra.mxu0 %v1539
    %2215 = vmatprep.subr.bf16.mxu0 %v1534
    %2216 = vmatpush2.bf16.msra.mxu0 %v1533
    %2217 = vmatprep.subr.bf16.mxu0 %v1528
    %2218 = vmatpush2.bf16.msra.mxu0 %v1527
    %2219 = vmatprep.mubr.bf16.mxu0 %v412
    %2220 = vmatmul.mubr.bf16.gmra.mxu0 %v411
    %v2221 = vpop.f32.mrf.mxu0
    %v2222 = vadd.f32 %v2181, %v2221
    %v2223 = vpop.f32.mrf.mxu0
    %v2224 = vadd.f32 %v2183, %v2223
    %v2225 = vpop.f32.mrf.mxu0
    %v2226 = vpop.f32.mrf.mxu0
    %2227 = vdwg.mxu0
    %v2228 = vmax.f32 %v1976, 0.0
    %v2229 = vmax.f32 %v1978, 0.0
    %v2230 = vmax.f32 %v2099, 0.0
    %v2231 = vmax.f32 %v2101, 0.0
    %v2232 = vmax.f32 %v2222, 0.0
    %v2233 = vmax.f32 %v2224, 0.0
    %v2234 = vpack.c.bf16 %v2228, %v2228
    %v2235 = vpack.c.bf16 %v2229, %v2229
    %v2236 = vpack.c.bf16 %v2230, %v2230
    %v2237 = vpack.c.bf16 %v2231, %v2231
    %v2238 = vpack.c.bf16 %v2232, %v2232
    %v2239 = vpack.c.bf16 %v2233, %v2233
    %v2240 = vld [vmem:[#allocation7] sm:$0xff]
    %v2241 = vld [vmem:[#allocation7 + $0x8] sm:$0xff]
    %v2242 = vld [vmem:[#allocation7 + $0x10] sm:$0xff]
    %v2243 = vld [vmem:[#allocation7 + $0x18] sm:$0xff]
    %v2244 = vld [vmem:[#allocation7 + $0x20] sm:$0xff]
    %v2245 = vld [vmem:[#allocation7 + $0x28] sm:$0xff]
    %v2246 = vld [vmem:[#allocation7 + $0x30] sm:$0xff]
    %v2247 = vld [vmem:[#allocation7 + $0x38] sm:$0xff]
    %v2248 = vld [vmem:[#allocation7 + $0x40] sm:$0xff]
    %v2249 = vld [vmem:[#allocation7 + $0x48] sm:$0xff]
    %v2250 = vld [vmem:[#allocation7 + $0x50] sm:$0xff]
    %v2251 = vld [vmem:[#allocation7 + $0x58] sm:$0xff]
    %v2252 = vld [vmem:[#allocation7 + $0x60] sm:$0xff]
    %v2253 = vld [vmem:[#allocation7 + $0x68] sm:$0xff]
    %v2254 = vld [vmem:[#allocation7 + $0x70] sm:$0xff]
    %v2255 = vld [vmem:[#allocation7 + $0x78] sm:$0xff]
    %v2256 = vld [vmem:[#allocation7 + $0x80] sm:$0xff]
    %v2257 = vld [vmem:[#allocation7 + $0x88] sm:$0xff]
    %v2258 = vld [vmem:[#allocation7 + $0x90] sm:$0xff]
    %v2259 = vld [vmem:[#allocation7 + $0x98] sm:$0xff]
    %v2260 = vld [vmem:[#allocation7 + $0xa0] sm:$0xff]
    %v2261 = vld [vmem:[#allocation7 + $0xa8] sm:$0xff]
    %v2262 = vld [vmem:[#allocation7 + $0xb0] sm:$0xff]
    %v2263 = vld [vmem:[#allocation7 + $0xb8] sm:$0xff]
    %v2264 = vld [vmem:[#allocation7 + $0xc0] sm:$0xff]
    %v2265 = vld [vmem:[#allocation7 + $0xc8] sm:$0xff]
    %v2266 = vld [vmem:[#allocation7 + $0xd0] sm:$0xff]
    %v2267 = vld [vmem:[#allocation7 + $0xd8] sm:$0xff]
    %v2268 = vld [vmem:[#allocation7 + $0xe0] sm:$0xff]
    %v2269 = vld [vmem:[#allocation7 + $0xe8] sm:$0xff]
    %v2270 = vld [vmem:[#allocation7 + $0xf0] sm:$0xff]
    %v2271 = vld [vmem:[#allocation7 + $0xf8] sm:$0xff]
    %v2272 = vld [vmem:[#allocation7 + $0x100] sm:$0xff]
    %v2273 = vld [vmem:[#allocation7 + $0x108] sm:$0xff]
    %v2274 = vld [vmem:[#allocation7 + $0x110] sm:$0xff]
    %v2275 = vld [vmem:[#allocation7 + $0x118] sm:$0xff]
    %v2276 = vld [vmem:[#allocation7 + $0x120] sm:$0xff]
    %v2277 = vld [vmem:[#allocation7 + $0x128] sm:$0xff]
    %v2278 = vld [vmem:[#allocation7 + $0x130] sm:$0xff]
    %v2279 = vld [vmem:[#allocation7 + $0x138] sm:$0xff]
    %v2280 = vld [vmem:[#allocation7 + $0x140] sm:$0xff]
    %v2281 = vld [vmem:[#allocation7 + $0x148] sm:$0xff]
    %v2282 = vld [vmem:[#allocation7 + $0x150] sm:$0xff]
    %v2283 = vld [vmem:[#allocation7 + $0x158] sm:$0xff]
    %v2284 = vld [vmem:[#allocation7 + $0x160] sm:$0xff]
    %v2285 = vld [vmem:[#allocation7 + $0x168] sm:$0xff]
    %v2286 = vld [vmem:[#allocation7 + $0x170] sm:$0xff]
    %v2287 = vld [vmem:[#allocation7 + $0x178] sm:$0xff]
    %v2288 = vld [vmem:[#allocation7 + $0x180] sm:$0xff]
    %v2289 = vld [vmem:[#allocation7 + $0x188] sm:$0xff]
    %v2290 = vld [vmem:[#allocation7 + $0x190] sm:$0xff]
    %v2291 = vld [vmem:[#allocation7 + $0x198] sm:$0xff]
    %v2292 = vld [vmem:[#allocation7 + $0x1a0] sm:$0xff]
    %v2293 = vld [vmem:[#allocation7 + $0x1a8] sm:$0xff]
    %v2294 = vld [vmem:[#allocation7 + $0x1b0] sm:$0xff]
    %v2295 = vld [vmem:[#allocation7 + $0x1b8] sm:$0xff]
    %v2296 = vld [vmem:[#allocation7 + $0x1c0] sm:$0xff]
    %v2297 = vld [vmem:[#allocation7 + $0x1c8] sm:$0xff]
    %v2298 = vld [vmem:[#allocation7 + $0x1d0] sm:$0xff]
    %v2299 = vld [vmem:[#allocation7 + $0x1d8] sm:$0xff]
    %v2300 = vld [vmem:[#allocation7 + $0x1e0] sm:$0xff]
    %v2301 = vld [vmem:[#allocation7 + $0x1e8] sm:$0xff]
    %v2302 = vld [vmem:[#allocation7 + $0x1f0] sm:$0xff]
    %v2303 = vld [vmem:[#allocation7 + $0x1f8] sm:$0xff]
    %v2304 = vld [vmem:[#allocation7 + $0x200] sm:$0xff]
    %v2305 = vld [vmem:[#allocation7 + $0x208] sm:$0xff]
    %v2306 = vld [vmem:[#allocation7 + $0x210] sm:$0xff]
    %v2307 = vld [vmem:[#allocation7 + $0x218] sm:$0xff]
    %v2308 = vld [vmem:[#allocation7 + $0x220] sm:$0xff]
    %v2309 = vld [vmem:[#allocation7 + $0x228] sm:$0xff]
    %v2310 = vld [vmem:[#allocation7 + $0x230] sm:$0xff]
    %v2311 = vld [vmem:[#allocation7 + $0x238] sm:$0xff]
    %v2312 = vld [vmem:[#allocation7 + $0x240] sm:$0xff]
    %v2313 = vld [vmem:[#allocation7 + $0x248] sm:$0xff]
    %v2314 = vld [vmem:[#allocation7 + $0x250] sm:$0xff]
    %v2315 = vld [vmem:[#allocation7 + $0x258] sm:$0xff]
    %v2316 = vld [vmem:[#allocation7 + $0x260] sm:$0xff]
    %v2317 = vld [vmem:[#allocation7 + $0x268] sm:$0xff]
    %v2318 = vld [vmem:[#allocation7 + $0x270] sm:$0xff]
    %v2319 = vld [vmem:[#allocation7 + $0x278] sm:$0xff]
    %v2320 = vld [vmem:[#allocation7 + $0x280] sm:$0xff]
    %v2321 = vld [vmem:[#allocation7 + $0x288] sm:$0xff]
    %v2322 = vld [vmem:[#allocation7 + $0x290] sm:$0xff]
    %v2323 = vld [vmem:[#allocation7 + $0x298] sm:$0xff]
    %v2324 = vld [vmem:[#allocation7 + $0x2a0] sm:$0xff]
    %v2325 = vld [vmem:[#allocation7 + $0x2a8] sm:$0xff]
    %v2326 = vld [vmem:[#allocation7 + $0x2b0] sm:$0xff]
    %v2327 = vld [vmem:[#allocation7 + $0x2b8] sm:$0xff]
    %v2328 = vld [vmem:[#allocation7 + $0x2c0] sm:$0xff]
    %v2329 = vld [vmem:[#allocation7 + $0x2c8] sm:$0xff]
    %v2330 = vld [vmem:[#allocation7 + $0x2d0] sm:$0xff]
    %v2331 = vld [vmem:[#allocation7 + $0x2d8] sm:$0xff]
    %v2332 = vld [vmem:[#allocation7 + $0x2e0] sm:$0xff]
    %v2333 = vld [vmem:[#allocation7 + $0x2e8] sm:$0xff]
    %v2334 = vld [vmem:[#allocation7 + $0x2f0] sm:$0xff]
    %v2335 = vld [vmem:[#allocation7 + $0x2f8] sm:$0xff]
    %v2336 = vld [vmem:[#allocation7 + $0x300] sm:$0xff]
    %v2337 = vld [vmem:[#allocation7 + $0x308] sm:$0xff]
    %v2338 = vld [vmem:[#allocation7 + $0x310] sm:$0xff]
    %v2339 = vld [vmem:[#allocation7 + $0x318] sm:$0xff]
    %v2340 = vld [vmem:[#allocation7 + $0x320] sm:$0xff]
    %v2341 = vld [vmem:[#allocation7 + $0x328] sm:$0xff]
    %v2342 = vld [vmem:[#allocation7 + $0x330] sm:$0xff]
    %v2343 = vld [vmem:[#allocation7 + $0x338] sm:$0xff]
    %v2344 = vld [vmem:[#allocation7 + $0x340] sm:$0xff]
    %v2345 = vld [vmem:[#allocation7 + $0x348] sm:$0xff]
    %v2346 = vld [vmem:[#allocation7 + $0x350] sm:$0xff]
    %v2347 = vld [vmem:[#allocation7 + $0x358] sm:$0xff]
    %v2348 = vld [vmem:[#allocation7 + $0x360] sm:$0xff]
    %v2349 = vld [vmem:[#allocation7 + $0x368] sm:$0xff]
    %v2350 = vld [vmem:[#allocation7 + $0x370] sm:$0xff]
    %v2351 = vld [vmem:[#allocation7 + $0x378] sm:$0xff]
    %v2352 = vld [vmem:[#allocation7 + $0x380] sm:$0xff]
    %v2353 = vld [vmem:[#allocation7 + $0x388] sm:$0xff]
    %v2354 = vld [vmem:[#allocation7 + $0x390] sm:$0xff]
    %v2355 = vld [vmem:[#allocation7 + $0x398] sm:$0xff]
    %v2356 = vld [vmem:[#allocation7 + $0x3a0] sm:$0xff]
    %v2357 = vld [vmem:[#allocation7 + $0x3a8] sm:$0xff]
    %v2358 = vld [vmem:[#allocation7 + $0x3b0] sm:$0xff]
    %v2359 = vld [vmem:[#allocation7 + $0x3b8] sm:$0xff]
    %v2360 = vld [vmem:[#allocation7 + $0x3c0] sm:$0xff]
    %v2361 = vld [vmem:[#allocation7 + $0x3c8] sm:$0xff]
    %v2362 = vld [vmem:[#allocation7 + $0x3d0] sm:$0xff]
    %v2363 = vld [vmem:[#allocation7 + $0x3d8] sm:$0xff]
    %v2364 = vld [vmem:[#allocation7 + $0x3e0] sm:$0xff]
    %v2365 = vld [vmem:[#allocation7 + $0x3e8] sm:$0xff]
    %v2366 = vld [vmem:[#allocation7 + $0x3f0] sm:$0xff]
    %v2367 = vld [vmem:[#allocation7 + $0x3f8] sm:$0xff]
    %v2368 = vld [vmem:[#allocation7 + $0x400] sm:$0xff]
    %v2369 = vld [vmem:[#allocation7 + $0x408] sm:$0xff]
    %v2370 = vld [vmem:[#allocation7 + $0x410] sm:$0xff]
    %v2371 = vld [vmem:[#allocation7 + $0x418] sm:$0xff]
    %v2372 = vld [vmem:[#allocation7 + $0x420] sm:$0xff]
    %v2373 = vld [vmem:[#allocation7 + $0x428] sm:$0xff]
    %v2374 = vld [vmem:[#allocation7 + $0x430] sm:$0xff]
    %v2375 = vld [vmem:[#allocation7 + $0x438] sm:$0xff]
    %v2376 = vld [vmem:[#allocation7 + $0x440] sm:$0xff]
    %v2377 = vld [vmem:[#allocation7 + $0x448] sm:$0xff]
    %v2378 = vld [vmem:[#allocation7 + $0x450] sm:$0xff]
    %v2379 = vld [vmem:[#allocation7 + $0x458] sm:$0xff]
    %v2380 = vld [vmem:[#allocation7 + $0x460] sm:$0xff]
    %v2381 = vld [vmem:[#allocation7 + $0x468] sm:$0xff]
    %v2382 = vld [vmem:[#allocation7 + $0x470] sm:$0xff]
    %v2383 = vld [vmem:[#allocation7 + $0x478] sm:$0xff]
    %v2384 = vld [vmem:[#allocation7 + $0x480] sm:$0xff]
    %v2385 = vld [vmem:[#allocation7 + $0x488] sm:$0xff]
    %v2386 = vld [vmem:[#allocation7 + $0x490] sm:$0xff]
    %v2387 = vld [vmem:[#allocation7 + $0x498] sm:$0xff]
    %v2388 = vld [vmem:[#allocation7 + $0x4a0] sm:$0xff]
    %v2389 = vld [vmem:[#allocation7 + $0x4a8] sm:$0xff]
    %v2390 = vld [vmem:[#allocation7 + $0x4b0] sm:$0xff]
    %v2391 = vld [vmem:[#allocation7 + $0x4b8] sm:$0xff]
    %v2392 = vld [vmem:[#allocation7 + $0x4c0] sm:$0xff]
    %v2393 = vld [vmem:[#allocation7 + $0x4c8] sm:$0xff]
    %v2394 = vld [vmem:[#allocation7 + $0x4d0] sm:$0xff]
    %v2395 = vld [vmem:[#allocation7 + $0x4d8] sm:$0xff]
    %v2396 = vld [vmem:[#allocation7 + $0x4e0] sm:$0xff]
    %v2397 = vld [vmem:[#allocation7 + $0x4e8] sm:$0xff]
    %v2398 = vld [vmem:[#allocation7 + $0x4f0] sm:$0xff]
    %v2399 = vld [vmem:[#allocation7 + $0x4f8] sm:$0xff]
    %v2400 = vld [vmem:[#allocation7 + $0x500] sm:$0xff]
    %v2401 = vld [vmem:[#allocation7 + $0x508] sm:$0xff]
    %v2402 = vld [vmem:[#allocation7 + $0x510] sm:$0xff]
    %v2403 = vld [vmem:[#allocation7 + $0x518] sm:$0xff]
    %v2404 = vld [vmem:[#allocation7 + $0x520] sm:$0xff]
    %v2405 = vld [vmem:[#allocation7 + $0x528] sm:$0xff]
    %v2406 = vld [vmem:[#allocation7 + $0x530] sm:$0xff]
    %v2407 = vld [vmem:[#allocation7 + $0x538] sm:$0xff]
    %v2408 = vld [vmem:[#allocation7 + $0x540] sm:$0xff]
    %v2409 = vld [vmem:[#allocation7 + $0x548] sm:$0xff]
    %v2410 = vld [vmem:[#allocation7 + $0x550] sm:$0xff]
    %v2411 = vld [vmem:[#allocation7 + $0x558] sm:$0xff]
    %v2412 = vld [vmem:[#allocation7 + $0x560] sm:$0xff]
    %v2413 = vld [vmem:[#allocation7 + $0x568] sm:$0xff]
    %v2414 = vld [vmem:[#allocation7 + $0x570] sm:$0xff]
    %v2415 = vld [vmem:[#allocation7 + $0x578] sm:$0xff]
    %v2416 = vld [vmem:[#allocation7 + $0x580] sm:$0xff]
    %v2417 = vld [vmem:[#allocation7 + $0x588] sm:$0xff]
    %v2418 = vld [vmem:[#allocation7 + $0x590] sm:$0xff]
    %v2419 = vld [vmem:[#allocation7 + $0x598] sm:$0xff]
    %v2420 = vld [vmem:[#allocation7 + $0x5a0] sm:$0xff]
    %v2421 = vld [vmem:[#allocation7 + $0x5a8] sm:$0xff]
    %v2422 = vld [vmem:[#allocation7 + $0x5b0] sm:$0xff]
    %v2423 = vld [vmem:[#allocation7 + $0x5b8] sm:$0xff]
    %v2424 = vld [vmem:[#allocation7 + $0x5c0] sm:$0xff]
    %v2425 = vld [vmem:[#allocation7 + $0x5c8] sm:$0xff]
    %v2426 = vld [vmem:[#allocation7 + $0x5d0] sm:$0xff]
    %v2427 = vld [vmem:[#allocation7 + $0x5d8] sm:$0xff]
    %v2428 = vld [vmem:[#allocation7 + $0x5e0] sm:$0xff]
    %v2429 = vld [vmem:[#allocation7 + $0x5e8] sm:$0xff]
    %v2430 = vld [vmem:[#allocation7 + $0x5f0] sm:$0xff]
    %v2431 = vld [vmem:[#allocation7 + $0x5f8] sm:$0xff]
    %v2432 = vld [vmem:[#allocation8] sm:$0xf]
    %v2434 = vlaneseq
    %v2435 = vshrl.u32 %v2434, 7
    %v2436 = vsub.s32 0, %v2435
    %v2437 = vrot.slane %v2432, %v2436
    %v2438 = vlaneseq
    %v2439 = vshrl.u32 %v2438, 7
    %v2440 = vsub.s32 1, %v2439
    %v2441 = vrot.slane %v2432, %v2440
    %v2442 = vlaneseq
    %v2443 = vshrl.u32 %v2442, 7
    %v2444 = vsub.s32 2, %v2443
    %v2445 = vrot.slane %v2432, %v2444
    %v2446 = vlaneseq
    %v2447 = vshrl.u32 %v2446, 7
    %v2448 = vsub.s32 3, %v2447
    %v2449 = vrot.slane %v2432, %v2448
    %v2646 = vunpack.c.l.b16 %v2240
    %v2647 = vunpack.c.h.b16 %v2240
    %v2648 = vunpack.c.l.b16 %v2241
    %v2649 = vunpack.c.h.b16 %v2241
    %v2650 = vunpack.c.l.b16 %v2242
    %v2651 = vunpack.c.h.b16 %v2242
    %v2652 = vunpack.c.l.b16 %v2243
    %v2653 = vunpack.c.h.b16 %v2243
    %v2654 = vunpack.c.l.b16 %v2244
    %v2655 = vunpack.c.h.b16 %v2244
    %v2656 = vunpack.c.l.b16 %v2245
    %v2657 = vunpack.c.h.b16 %v2245
    %v2658 = vunpack.c.l.b16 %v2246
    %v2659 = vunpack.c.h.b16 %v2246
    %v2660 = vunpack.c.l.b16 %v2247
    %v2661 = vunpack.c.h.b16 %v2247
    %v2662 = vunpack.c.l.b16 %v2248
    %v2663 = vunpack.c.h.b16 %v2248
    %v2664 = vunpack.c.l.b16 %v2249
    %v2665 = vunpack.c.h.b16 %v2249
    %v2666 = vunpack.c.l.b16 %v2250
    %v2667 = vunpack.c.h.b16 %v2250
    %v2668 = vunpack.c.l.b16 %v2251
    %v2669 = vunpack.c.h.b16 %v2251
    %v2670 = vunpack.c.l.b16 %v2252
    %v2671 = vunpack.c.h.b16 %v2252
    %v2672 = vunpack.c.l.b16 %v2253
    %v2673 = vunpack.c.h.b16 %v2253
    %v2674 = vunpack.c.l.b16 %v2254
    %v2675 = vunpack.c.h.b16 %v2254
    %v2676 = vunpack.c.l.b16 %v2255
    %v2677 = vunpack.c.h.b16 %v2255
    %v2678 = vunpack.c.l.b16 %v2256
    %v2679 = vunpack.c.h.b16 %v2256
    %v2680 = vunpack.c.l.b16 %v2257
    %v2681 = vunpack.c.h.b16 %v2257
    %v2682 = vunpack.c.l.b16 %v2258
    %v2683 = vunpack.c.h.b16 %v2258
    %v2684 = vunpack.c.l.b16 %v2259
    %v2685 = vunpack.c.h.b16 %v2259
    %v2686 = vunpack.c.l.b16 %v2260
    %v2687 = vunpack.c.h.b16 %v2260
    %v2688 = vunpack.c.l.b16 %v2261
    %v2689 = vunpack.c.h.b16 %v2261
    %v2690 = vunpack.c.l.b16 %v2262
    %v2691 = vunpack.c.h.b16 %v2262
    %v2692 = vunpack.c.l.b16 %v2263
    %v2693 = vunpack.c.h.b16 %v2263
    %v2694 = vunpack.c.l.b16 %v2264
    %v2695 = vunpack.c.h.b16 %v2264
    %v2696 = vunpack.c.l.b16 %v2265
    %v2697 = vunpack.c.h.b16 %v2265
    %v2698 = vunpack.c.l.b16 %v2266
    %v2699 = vunpack.c.h.b16 %v2266
    %v2700 = vunpack.c.l.b16 %v2267
    %v2701 = vunpack.c.h.b16 %v2267
    %v2702 = vunpack.c.l.b16 %v2268
    %v2703 = vunpack.c.h.b16 %v2268
    %v2704 = vunpack.c.l.b16 %v2269
    %v2705 = vunpack.c.h.b16 %v2269
    %v2706 = vunpack.c.l.b16 %v2270
    %v2707 = vunpack.c.h.b16 %v2270
    %v2708 = vunpack.c.l.b16 %v2271
    %v2709 = vunpack.c.h.b16 %v2271
    %v2710 = vunpack.c.l.b16 %v2272
    %v2711 = vunpack.c.h.b16 %v2272
    %v2712 = vunpack.c.l.b16 %v2273
    %v2713 = vunpack.c.h.b16 %v2273
    %v2714 = vunpack.c.l.b16 %v2274
    %v2715 = vunpack.c.h.b16 %v2274
    %v2716 = vunpack.c.l.b16 %v2275
    %v2717 = vunpack.c.h.b16 %v2275
    %v2718 = vunpack.c.l.b16 %v2276
    %v2719 = vunpack.c.h.b16 %v2276
    %v2720 = vunpack.c.l.b16 %v2277
    %v2721 = vunpack.c.h.b16 %v2277
    %v2722 = vunpack.c.l.b16 %v2278
    %v2723 = vunpack.c.h.b16 %v2278
    %v2724 = vunpack.c.l.b16 %v2279
    %v2725 = vunpack.c.h.b16 %v2279
    %v2726 = vunpack.c.l.b16 %v2280
    %v2727 = vunpack.c.h.b16 %v2280
    %v2728 = vunpack.c.l.b16 %v2281
    %v2729 = vunpack.c.h.b16 %v2281
    %v2730 = vunpack.c.l.b16 %v2282
    %v2731 = vunpack.c.h.b16 %v2282
    %v2732 = vunpack.c.l.b16 %v2283
    %v2733 = vunpack.c.h.b16 %v2283
    %v2734 = vunpack.c.l.b16 %v2284
    %v2735 = vunpack.c.h.b16 %v2284
    %v2736 = vunpack.c.l.b16 %v2285
    %v2737 = vunpack.c.h.b16 %v2285
    %v2738 = vunpack.c.l.b16 %v2286
    %v2739 = vunpack.c.h.b16 %v2286
    %v2740 = vunpack.c.l.b16 %v2287
    %v2741 = vunpack.c.h.b16 %v2287
    %v2742 = vunpack.c.l.b16 %v2288
    %v2743 = vunpack.c.h.b16 %v2288
    %v2744 = vunpack.c.l.b16 %v2289
    %v2745 = vunpack.c.h.b16 %v2289
    %v2746 = vunpack.c.l.b16 %v2290
    %v2747 = vunpack.c.h.b16 %v2290
    %v2748 = vunpack.c.l.b16 %v2291
    %v2749 = vunpack.c.h.b16 %v2291
    %v2750 = vunpack.c.l.b16 %v2292
    %v2751 = vunpack.c.h.b16 %v2292
    %v2752 = vunpack.c.l.b16 %v2293
    %v2753 = vunpack.c.h.b16 %v2293
    %v2754 = vunpack.c.l.b16 %v2294
    %v2755 = vunpack.c.h.b16 %v2294
    %v2756 = vunpack.c.l.b16 %v2295
    %v2757 = vunpack.c.h.b16 %v2295
    %v2758 = vunpack.c.l.b16 %v2296
    %v2759 = vunpack.c.h.b16 %v2296
    %v2760 = vunpack.c.l.b16 %v2297
    %v2761 = vunpack.c.h.b16 %v2297
    %v2762 = vunpack.c.l.b16 %v2298
    %v2763 = vunpack.c.h.b16 %v2298
    %v2764 = vunpack.c.l.b16 %v2299
    %v2765 = vunpack.c.h.b16 %v2299
    %v2766 = vunpack.c.l.b16 %v2300
    %v2767 = vunpack.c.h.b16 %v2300
    %v2768 = vunpack.c.l.b16 %v2301
    %v2769 = vunpack.c.h.b16 %v2301
    %v2770 = vunpack.c.l.b16 %v2302
    %v2771 = vunpack.c.h.b16 %v2302
    %v2772 = vunpack.c.l.b16 %v2303
    %v2773 = vunpack.c.h.b16 %v2303
    %v2774 = vunpack.c.l.b16 %v2304
    %v2775 = vunpack.c.h.b16 %v2304
    %v2776 = vunpack.c.l.b16 %v2305
    %v2777 = vunpack.c.h.b16 %v2305
    %v2778 = vunpack.c.l.b16 %v2306
    %v2779 = vunpack.c.h.b16 %v2306
    %v2780 = vunpack.c.l.b16 %v2307
    %v2781 = vunpack.c.h.b16 %v2307
    %v2782 = vunpack.c.l.b16 %v2308
    %v2783 = vunpack.c.h.b16 %v2308
    %v2784 = vunpack.c.l.b16 %v2309
    %v2785 = vunpack.c.h.b16 %v2309
    %v2786 = vunpack.c.l.b16 %v2310
    %v2787 = vunpack.c.h.b16 %v2310
    %v2788 = vunpack.c.l.b16 %v2311
    %v2789 = vunpack.c.h.b16 %v2311
    %v2790 = vunpack.c.l.b16 %v2312
    %v2791 = vunpack.c.h.b16 %v2312
    %v2792 = vunpack.c.l.b16 %v2313
    %v2793 = vunpack.c.h.b16 %v2313
    %v2794 = vunpack.c.l.b16 %v2314
    %v2795 = vunpack.c.h.b16 %v2314
    %v2796 = vunpack.c.l.b16 %v2315
    %v2797 = vunpack.c.h.b16 %v2315
    %v2798 = vunpack.c.l.b16 %v2316
    %v2799 = vunpack.c.h.b16 %v2316
    %v2800 = vunpack.c.l.b16 %v2317
    %v2801 = vunpack.c.h.b16 %v2317
    %v2802 = vunpack.c.l.b16 %v2318
    %v2803 = vunpack.c.h.b16 %v2318
    %v2804 = vunpack.c.l.b16 %v2319
    %v2805 = vunpack.c.h.b16 %v2319
    %v2806 = vunpack.c.l.b16 %v2320
    %v2807 = vunpack.c.h.b16 %v2320
    %v2808 = vunpack.c.l.b16 %v2321
    %v2809 = vunpack.c.h.b16 %v2321
    %v2810 = vunpack.c.l.b16 %v2322
    %v2811 = vunpack.c.h.b16 %v2322
    %v2812 = vunpack.c.l.b16 %v2323
    %v2813 = vunpack.c.h.b16 %v2323
    %v2814 = vunpack.c.l.b16 %v2324
    %v2815 = vunpack.c.h.b16 %v2324
    %v2816 = vunpack.c.l.b16 %v2325
    %v2817 = vunpack.c.h.b16 %v2325
    %v2818 = vunpack.c.l.b16 %v2326
    %v2819 = vunpack.c.h.b16 %v2326
    %v2820 = vunpack.c.l.b16 %v2327
    %v2821 = vunpack.c.h.b16 %v2327
    %v2822 = vunpack.c.l.b16 %v2328
    %v2823 = vunpack.c.h.b16 %v2328
    %v2824 = vunpack.c.l.b16 %v2329
    %v2825 = vunpack.c.h.b16 %v2329
    %v2826 = vunpack.c.l.b16 %v2330
    %v2827 = vunpack.c.h.b16 %v2330
    %v2828 = vunpack.c.l.b16 %v2331
    %v2829 = vunpack.c.h.b16 %v2331
    %v2830 = vunpack.c.l.b16 %v2332
    %v2831 = vunpack.c.h.b16 %v2332
    %v2832 = vunpack.c.l.b16 %v2333
    %v2833 = vunpack.c.h.b16 %v2333
    %v2834 = vunpack.c.l.b16 %v2334
    %v2835 = vunpack.c.h.b16 %v2334
    %v2836 = vunpack.c.l.b16 %v2335
    %v2837 = vunpack.c.h.b16 %v2335
    %v2838 = vunpack.c.l.b16 %v2336
    %v2839 = vunpack.c.h.b16 %v2336
    %v2840 = vunpack.c.l.b16 %v2337
    %v2841 = vunpack.c.h.b16 %v2337
    %v2842 = vunpack.c.l.b16 %v2338
    %v2843 = vunpack.c.h.b16 %v2338
    %v2844 = vunpack.c.l.b16 %v2339
    %v2845 = vunpack.c.h.b16 %v2339
    %v2846 = vunpack.c.l.b16 %v2340
    %v2847 = vunpack.c.h.b16 %v2340
    %v2848 = vunpack.c.l.b16 %v2341
    %v2849 = vunpack.c.h.b16 %v2341
    %v2850 = vunpack.c.l.b16 %v2342
    %v2851 = vunpack.c.h.b16 %v2342
    %v2852 = vunpack.c.l.b16 %v2343
    %v2853 = vunpack.c.h.b16 %v2343
    %v2854 = vunpack.c.l.b16 %v2344
    %v2855 = vunpack.c.h.b16 %v2344
    %v2856 = vunpack.c.l.b16 %v2345
    %v2857 = vunpack.c.h.b16 %v2345
    %v2858 = vunpack.c.l.b16 %v2346
    %v2859 = vunpack.c.h.b16 %v2346
    %v2860 = vunpack.c.l.b16 %v2347
    %v2861 = vunpack.c.h.b16 %v2347
    %v2862 = vunpack.c.l.b16 %v2348
    %v2863 = vunpack.c.h.b16 %v2348
    %v2864 = vunpack.c.l.b16 %v2349
    %v2865 = vunpack.c.h.b16 %v2349
    %v2866 = vunpack.c.l.b16 %v2350
    %v2867 = vunpack.c.h.b16 %v2350
    %v2868 = vunpack.c.l.b16 %v2351
    %v2869 = vunpack.c.h.b16 %v2351
    %v2870 = vunpack.c.l.b16 %v2352
    %v2871 = vunpack.c.h.b16 %v2352
    %v2872 = vunpack.c.l.b16 %v2353
    %v2873 = vunpack.c.h.b16 %v2353
    %v2874 = vunpack.c.l.b16 %v2354
    %v2875 = vunpack.c.h.b16 %v2354
    %v2876 = vunpack.c.l.b16 %v2355
    %v2877 = vunpack.c.h.b16 %v2355
    %v2878 = vunpack.c.l.b16 %v2356
    %v2879 = vunpack.c.h.b16 %v2356
    %v2880 = vunpack.c.l.b16 %v2357
    %v2881 = vunpack.c.h.b16 %v2357
    %v2882 = vunpack.c.l.b16 %v2358
    %v2883 = vunpack.c.h.b16 %v2358
    %v2884 = vunpack.c.l.b16 %v2359
    %v2885 = vunpack.c.h.b16 %v2359
    %v2886 = vunpack.c.l.b16 %v2360
    %v2887 = vunpack.c.h.b16 %v2360
    %v2888 = vunpack.c.l.b16 %v2361
    %v2889 = vunpack.c.h.b16 %v2361
    %v2890 = vunpack.c.l.b16 %v2362
    %v2891 = vunpack.c.h.b16 %v2362
    %v2892 = vunpack.c.l.b16 %v2363
    %v2893 = vunpack.c.h.b16 %v2363
    %v2894 = vunpack.c.l.b16 %v2364
    %v2895 = vunpack.c.h.b16 %v2364
    %v2896 = vunpack.c.l.b16 %v2365
    %v2897 = vunpack.c.h.b16 %v2365
    %v2898 = vunpack.c.l.b16 %v2366
    %v2899 = vunpack.c.h.b16 %v2366
    %v2900 = vunpack.c.l.b16 %v2367
    %v2901 = vunpack.c.h.b16 %v2367
    %v2902 = vunpack.c.l.b16 %v2368
    %v2903 = vunpack.c.h.b16 %v2368
    %v2904 = vunpack.c.l.b16 %v2369
    %v2905 = vunpack.c.h.b16 %v2369
    %v2906 = vunpack.c.l.b16 %v2370
    %v2907 = vunpack.c.h.b16 %v2370
    %v2908 = vunpack.c.l.b16 %v2371
    %v2909 = vunpack.c.h.b16 %v2371
    %v2910 = vunpack.c.l.b16 %v2372
    %v2911 = vunpack.c.h.b16 %v2372
    %v2912 = vunpack.c.l.b16 %v2373
    %v2913 = vunpack.c.h.b16 %v2373
    %v2914 = vunpack.c.l.b16 %v2374
    %v2915 = vunpack.c.h.b16 %v2374
    %v2916 = vunpack.c.l.b16 %v2375
    %v2917 = vunpack.c.h.b16 %v2375
    %v2918 = vunpack.c.l.b16 %v2376
    %v2919 = vunpack.c.h.b16 %v2376
    %v2920 = vunpack.c.l.b16 %v2377
    %v2921 = vunpack.c.h.b16 %v2377
    %v2922 = vunpack.c.l.b16 %v2378
    %v2923 = vunpack.c.h.b16 %v2378
    %v2924 = vunpack.c.l.b16 %v2379
    %v2925 = vunpack.c.h.b16 %v2379
    %v2926 = vunpack.c.l.b16 %v2380
    %v2927 = vunpack.c.h.b16 %v2380
    %v2928 = vunpack.c.l.b16 %v2381
    %v2929 = vunpack.c.h.b16 %v2381
    %v2930 = vunpack.c.l.b16 %v2382
    %v2931 = vunpack.c.h.b16 %v2382
    %v2932 = vunpack.c.l.b16 %v2383
    %v2933 = vunpack.c.h.b16 %v2383
    %v2934 = vunpack.c.l.b16 %v2384
    %v2935 = vunpack.c.h.b16 %v2384
    %v2936 = vunpack.c.l.b16 %v2385
    %v2937 = vunpack.c.h.b16 %v2385
    %v2938 = vunpack.c.l.b16 %v2386
    %v2939 = vunpack.c.h.b16 %v2386
    %v2940 = vunpack.c.l.b16 %v2387
    %v2941 = vunpack.c.h.b16 %v2387
    %v2942 = vunpack.c.l.b16 %v2388
    %v2943 = vunpack.c.h.b16 %v2388
    %v2944 = vunpack.c.l.b16 %v2389
    %v2945 = vunpack.c.h.b16 %v2389
    %v2946 = vunpack.c.l.b16 %v2390
    %v2947 = vunpack.c.h.b16 %v2390
    %v2948 = vunpack.c.l.b16 %v2391
    %v2949 = vunpack.c.h.b16 %v2391
    %v2950 = vunpack.c.l.b16 %v2392
    %v2951 = vunpack.c.h.b16 %v2392
    %v2952 = vunpack.c.l.b16 %v2393
    %v2953 = vunpack.c.h.b16 %v2393
    %v2954 = vunpack.c.l.b16 %v2394
    %v2955 = vunpack.c.h.b16 %v2394
    %v2956 = vunpack.c.l.b16 %v2395
    %v2957 = vunpack.c.h.b16 %v2395
    %v2958 = vunpack.c.l.b16 %v2396
    %v2959 = vunpack.c.h.b16 %v2396
    %v2960 = vunpack.c.l.b16 %v2397
    %v2961 = vunpack.c.h.b16 %v2397
    %v2962 = vunpack.c.l.b16 %v2398
    %v2963 = vunpack.c.h.b16 %v2398
    %v2964 = vunpack.c.l.b16 %v2399
    %v2965 = vunpack.c.h.b16 %v2399
    %v2966 = vunpack.c.l.b16 %v2400
    %v2967 = vunpack.c.h.b16 %v2400
    %v2968 = vunpack.c.l.b16 %v2401
    %v2969 = vunpack.c.h.b16 %v2401
    %v2970 = vunpack.c.l.b16 %v2402
    %v2971 = vunpack.c.h.b16 %v2402
    %v2972 = vunpack.c.l.b16 %v2403
    %v2973 = vunpack.c.h.b16 %v2403
    %v2974 = vunpack.c.l.b16 %v2404
    %v2975 = vunpack.c.h.b16 %v2404
    %v2976 = vunpack.c.l.b16 %v2405
    %v2977 = vunpack.c.h.b16 %v2405
    %v2978 = vunpack.c.l.b16 %v2406
    %v2979 = vunpack.c.h.b16 %v2406
    %v2980 = vunpack.c.l.b16 %v2407
    %v2981 = vunpack.c.h.b16 %v2407
    %v2982 = vunpack.c.l.b16 %v2408
    %v2983 = vunpack.c.h.b16 %v2408
    %v2984 = vunpack.c.l.b16 %v2409
    %v2985 = vunpack.c.h.b16 %v2409
    %v2986 = vunpack.c.l.b16 %v2410
    %v2987 = vunpack.c.h.b16 %v2410
    %v2988 = vunpack.c.l.b16 %v2411
    %v2989 = vunpack.c.h.b16 %v2411
    %v2990 = vunpack.c.l.b16 %v2412
    %v2991 = vunpack.c.h.b16 %v2412
    %v2992 = vunpack.c.l.b16 %v2413
    %v2993 = vunpack.c.h.b16 %v2413
    %v2994 = vunpack.c.l.b16 %v2414
    %v2995 = vunpack.c.h.b16 %v2414
    %v2996 = vunpack.c.l.b16 %v2415
    %v2997 = vunpack.c.h.b16 %v2415
    %v2998 = vunpack.c.l.b16 %v2416
    %v2999 = vunpack.c.h.b16 %v2416
    %v3000 = vunpack.c.l.b16 %v2417
    %v3001 = vunpack.c.h.b16 %v2417
    %v3002 = vunpack.c.l.b16 %v2418
    %v3003 = vunpack.c.h.b16 %v2418
    %v3004 = vunpack.c.l.b16 %v2419
    %v3005 = vunpack.c.h.b16 %v2419
    %v3006 = vunpack.c.l.b16 %v2420
    %v3007 = vunpack.c.h.b16 %v2420
    %v3008 = vunpack.c.l.b16 %v2421
    %v3009 = vunpack.c.h.b16 %v2421
    %v3010 = vunpack.c.l.b16 %v2422
    %v3011 = vunpack.c.h.b16 %v2422
    %v3012 = vunpack.c.l.b16 %v2423
    %v3013 = vunpack.c.h.b16 %v2423
    %v3014 = vunpack.c.l.b16 %v2424
    %v3015 = vunpack.c.h.b16 %v2424
    %v3016 = vunpack.c.l.b16 %v2425
    %v3017 = vunpack.c.h.b16 %v2425
    %v3018 = vunpack.c.l.b16 %v2426
    %v3019 = vunpack.c.h.b16 %v2426
    %v3020 = vunpack.c.l.b16 %v2427
    %v3021 = vunpack.c.h.b16 %v2427
    %v3022 = vunpack.c.l.b16 %v2428
    %v3023 = vunpack.c.h.b16 %v2428
    %v3024 = vunpack.c.l.b16 %v2429
    %v3025 = vunpack.c.h.b16 %v2429
    %v3026 = vunpack.c.l.b16 %v2430
    %v3027 = vunpack.c.h.b16 %v2430
    %v3028 = vunpack.c.l.b16 %v2431
    %v3029 = vunpack.c.h.b16 %v2431
    %v3030 = vpack.c.b16 %v2650, %v2646
    %v3031 = vpack.c.b16 %v2651, %v2647
    %v3032 = vpack.c.b16 %v2652, %v2648
    %v3033 = vpack.c.b16 %v2653, %v2649
    %v3034 = vpack.c.b16 %v2658, %v2654
    %v3035 = vpack.c.b16 %v2659, %v2655
    %v3036 = vpack.c.b16 %v2660, %v2656
    %v3037 = vpack.c.b16 %v2661, %v2657
    %v3038 = vpack.c.b16 %v2666, %v2662
    %v3039 = vpack.c.b16 %v2667, %v2663
    %v3040 = vpack.c.b16 %v2668, %v2664
    %v3041 = vpack.c.b16 %v2669, %v2665
    %v3042 = vpack.c.b16 %v2674, %v2670
    %v3043 = vpack.c.b16 %v2675, %v2671
    %v3044 = vpack.c.b16 %v2676, %v2672
    %v3045 = vpack.c.b16 %v2677, %v2673
    %v3046 = vpack.c.b16 %v2682, %v2678
    %v3047 = vpack.c.b16 %v2683, %v2679
    %v3048 = vpack.c.b16 %v2684, %v2680
    %v3049 = vpack.c.b16 %v2685, %v2681
    %v3050 = vpack.c.b16 %v2690, %v2686
    %v3051 = vpack.c.b16 %v2691, %v2687
    %v3052 = vpack.c.b16 %v2692, %v2688
    %v3053 = vpack.c.b16 %v2693, %v2689
    %v3054 = vpack.c.b16 %v2698, %v2694
    %v3055 = vpack.c.b16 %v2699, %v2695
    %v3056 = vpack.c.b16 %v2700, %v2696
    %v3057 = vpack.c.b16 %v2701, %v2697
    %v3058 = vpack.c.b16 %v2706, %v2702
    %v3059 = vpack.c.b16 %v2707, %v2703
    %v3060 = vpack.c.b16 %v2708, %v2704
    %v3061 = vpack.c.b16 %v2709, %v2705
    %v3062 = vpack.c.b16 %v2714, %v2710
    %v3063 = vpack.c.b16 %v2715, %v2711
    %v3064 = vpack.c.b16 %v2716, %v2712
    %v3065 = vpack.c.b16 %v2717, %v2713
    %v3066 = vpack.c.b16 %v2722, %v2718
    %v3067 = vpack.c.b16 %v2723, %v2719
    %v3068 = vpack.c.b16 %v2724, %v2720
    %v3069 = vpack.c.b16 %v2725, %v2721
    %v3070 = vpack.c.b16 %v2730, %v2726
    %v3071 = vpack.c.b16 %v2731, %v2727
    %v3072 = vpack.c.b16 %v2732, %v2728
    %v3073 = vpack.c.b16 %v2733, %v2729
    %v3074 = vpack.c.b16 %v2738, %v2734
    %v3075 = vpack.c.b16 %v2739, %v2735
    %v3076 = vpack.c.b16 %v2740, %v2736
    %v3077 = vpack.c.b16 %v2741, %v2737
    %v3078 = vpack.c.b16 %v2746, %v2742
    %v3079 = vpack.c.b16 %v2747, %v2743
    %v3080 = vpack.c.b16 %v2748, %v2744
    %v3081 = vpack.c.b16 %v2749, %v2745
    %v3082 = vpack.c.b16 %v2754, %v2750
    %v3083 = vpack.c.b16 %v2755, %v2751
    %v3084 = vpack.c.b16 %v2756, %v2752
    %v3085 = vpack.c.b16 %v2757, %v2753
    %v3086 = vpack.c.b16 %v2762, %v2758
    %v3087 = vpack.c.b16 %v2763, %v2759
    %v3088 = vpack.c.b16 %v2764, %v2760
    %v3089 = vpack.c.b16 %v2765, %v2761
    %v3090 = vpack.c.b16 %v2770, %v2766
    %v3091 = vpack.c.b16 %v2771, %v2767
    %v3092 = vpack.c.b16 %v2772, %v2768
    %v3093 = vpack.c.b16 %v2773, %v2769
    %v3094 = vpack.c.b16 %v2778, %v2774
    %v3095 = vpack.c.b16 %v2779, %v2775
    %v3096 = vpack.c.b16 %v2780, %v2776
    %v3097 = vpack.c.b16 %v2781, %v2777
    %v3098 = vpack.c.b16 %v2786, %v2782
    %v3099 = vpack.c.b16 %v2787, %v2783
    %v3100 = vpack.c.b16 %v2788, %v2784
    %v3101 = vpack.c.b16 %v2789, %v2785
    %v3102 = vpack.c.b16 %v2794, %v2790
    %v3103 = vpack.c.b16 %v2795, %v2791
    %v3104 = vpack.c.b16 %v2796, %v2792
    %v3105 = vpack.c.b16 %v2797, %v2793
    %v3106 = vpack.c.b16 %v2802, %v2798
    %v3107 = vpack.c.b16 %v2803, %v2799
    %v3108 = vpack.c.b16 %v2804, %v2800
    %v3109 = vpack.c.b16 %v2805, %v2801
    %v3110 = vpack.c.b16 %v2810, %v2806
    %v3111 = vpack.c.b16 %v2811, %v2807
    %v3112 = vpack.c.b16 %v2812, %v2808
    %v3113 = vpack.c.b16 %v2813, %v2809
    %v3114 = vpack.c.b16 %v2818, %v2814
    %v3115 = vpack.c.b16 %v2819, %v2815
    %v3116 = vpack.c.b16 %v2820, %v2816
    %v3117 = vpack.c.b16 %v2821, %v2817
    %v3118 = vpack.c.b16 %v2826, %v2822
    %v3119 = vpack.c.b16 %v2827, %v2823
    %v3120 = vpack.c.b16 %v2828, %v2824
    %v3121 = vpack.c.b16 %v2829, %v2825
    %v3122 = vpack.c.b16 %v2834, %v2830
    %v3123 = vpack.c.b16 %v2835, %v2831
    %v3124 = vpack.c.b16 %v2836, %v2832
    %v3125 = vpack.c.b16 %v2837, %v2833
    %v3126 = vpack.c.b16 %v2842, %v2838
    %v3127 = vpack.c.b16 %v2843, %v2839
    %v3128 = vpack.c.b16 %v2844, %v2840
    %v3129 = vpack.c.b16 %v2845, %v2841
    %v3130 = vpack.c.b16 %v2850, %v2846
    %v3131 = vpack.c.b16 %v2851, %v2847
    %v3132 = vpack.c.b16 %v2852, %v2848
    %v3133 = vpack.c.b16 %v2853, %v2849
    %v3134 = vpack.c.b16 %v2858, %v2854
    %v3135 = vpack.c.b16 %v2859, %v2855
    %v3136 = vpack.c.b16 %v2860, %v2856
    %v3137 = vpack.c.b16 %v2861, %v2857
    %v3138 = vpack.c.b16 %v2866, %v2862
    %v3139 = vpack.c.b16 %v2867, %v2863
    %v3140 = vpack.c.b16 %v2868, %v2864
    %v3141 = vpack.c.b16 %v2869, %v2865
    %v3142 = vpack.c.b16 %v2874, %v2870
    %v3143 = vpack.c.b16 %v2875, %v2871
    %v3144 = vpack.c.b16 %v2876, %v2872
    %v3145 = vpack.c.b16 %v2877, %v2873
    %v3146 = vpack.c.b16 %v2882, %v2878
    %v3147 = vpack.c.b16 %v2883, %v2879
    %v3148 = vpack.c.b16 %v2884, %v2880
    %v3149 = vpack.c.b16 %v2885, %v2881
    %v3150 = vpack.c.b16 %v2890, %v2886
    %v3151 = vpack.c.b16 %v2891, %v2887
    %v3152 = vpack.c.b16 %v2892, %v2888
    %v3153 = vpack.c.b16 %v2893, %v2889
    %v3154 = vpack.c.b16 %v2898, %v2894
    %v3155 = vpack.c.b16 %v2899, %v2895
    %v3156 = vpack.c.b16 %v2900, %v2896
    %v3157 = vpack.c.b16 %v2901, %v2897
    %v3158 = vpack.c.b16 %v2906, %v2902
    %v3159 = vpack.c.b16 %v2907, %v2903
    %v3160 = vpack.c.b16 %v2908, %v2904
    %v3161 = vpack.c.b16 %v2909, %v2905
    %v3162 = vpack.c.b16 %v2914, %v2910
    %v3163 = vpack.c.b16 %v2915, %v2911
    %v3164 = vpack.c.b16 %v2916, %v2912
    %v3165 = vpack.c.b16 %v2917, %v2913
    %v3166 = vpack.c.b16 %v2922, %v2918
    %v3167 = vpack.c.b16 %v2923, %v2919
    %v3168 = vpack.c.b16 %v2924, %v2920
    %v3169 = vpack.c.b16 %v2925, %v2921
    %v3170 = vpack.c.b16 %v2930, %v2926
    %v3171 = vpack.c.b16 %v2931, %v2927
    %v3172 = vpack.c.b16 %v2932, %v2928
    %v3173 = vpack.c.b16 %v2933, %v2929
    %v3174 = vpack.c.b16 %v2938, %v2934
    %v3175 = vpack.c.b16 %v2939, %v2935
    %v3176 = vpack.c.b16 %v2940, %v2936
    %v3177 = vpack.c.b16 %v2941, %v2937
    %v3178 = vpack.c.b16 %v2946, %v2942
    %v3179 = vpack.c.b16 %v2947, %v2943
    %v3180 = vpack.c.b16 %v2948, %v2944
    %v3181 = vpack.c.b16 %v2949, %v2945
    %v3182 = vpack.c.b16 %v2954, %v2950
    %v3183 = vpack.c.b16 %v2955, %v2951
    %v3184 = vpack.c.b16 %v2956, %v2952
    %v3185 = vpack.c.b16 %v2957, %v2953
    %v3186 = vpack.c.b16 %v2962, %v2958
    %v3187 = vpack.c.b16 %v2963, %v2959
    %v3188 = vpack.c.b16 %v2964, %v2960
    %v3189 = vpack.c.b16 %v2965, %v2961
    %v3190 = vpack.c.b16 %v2970, %v2966
    %v3191 = vpack.c.b16 %v2971, %v2967
    %v3192 = vpack.c.b16 %v2972, %v2968
    %v3193 = vpack.c.b16 %v2973, %v2969
    %v3194 = vpack.c.b16 %v2978, %v2974
    %v3195 = vpack.c.b16 %v2979, %v2975
    %v3196 = vpack.c.b16 %v2980, %v2976
    %v3197 = vpack.c.b16 %v2981, %v2977
    %v3198 = vpack.c.b16 %v2986, %v2982
    %v3199 = vpack.c.b16 %v2987, %v2983
    %v3200 = vpack.c.b16 %v2988, %v2984
    %v3201 = vpack.c.b16 %v2989, %v2985
    %v3202 = vpack.c.b16 %v2994, %v2990
    %v3203 = vpack.c.b16 %v2995, %v2991
    %v3204 = vpack.c.b16 %v2996, %v2992
    %v3205 = vpack.c.b16 %v2997, %v2993
    %v3206 = vpack.c.b16 %v3002, %v2998
    %v3207 = vpack.c.b16 %v3003, %v2999
    %v3208 = vpack.c.b16 %v3004, %v3000
    %v3209 = vpack.c.b16 %v3005, %v3001
    %v3210 = vpack.c.b16 %v3010, %v3006
    %v3211 = vpack.c.b16 %v3011, %v3007
    %v3212 = vpack.c.b16 %v3012, %v3008
    %v3213 = vpack.c.b16 %v3013, %v3009
    %v3214 = vpack.c.b16 %v3018, %v3014
    %v3215 = vpack.c.b16 %v3019, %v3015
    %v3216 = vpack.c.b16 %v3020, %v3016
    %v3217 = vpack.c.b16 %v3021, %v3017
    %v3218 = vpack.c.b16 %v3026, %v3022
    %v3219 = vpack.c.b16 %v3027, %v3023
    %v3220 = vpack.c.b16 %v3028, %v3024
    %v3221 = vpack.c.b16 %v3029, %v3025
    %3414 = vmatprep.subr.bf16.mxu0 %v3059
    %3415 = vmatpush1.bf16.msra.mxu0 %v3058
    %3416 = vmatprep.subr.bf16.mxu0 %v3055
    %3417 = vmatpush1.bf16.msra.mxu0 %v3054
    %3418 = vmatprep.subr.bf16.mxu0 %v3051
    %3419 = vmatpush1.bf16.msra.mxu0 %v3050
    %3420 = vmatprep.subr.bf16.mxu0 %v3047
    %3421 = vmatpush1.bf16.msra.mxu0 %v3046
    %3422 = vmatprep.subr.bf16.mxu0 %v3043
    %3423 = vmatpush1.bf16.msra.mxu0 %v3042
    %3424 = vmatprep.subr.bf16.mxu0 %v3039
    %3425 = vmatpush1.bf16.msra.mxu0 %v3038
    %3426 = vmatprep.subr.bf16.mxu0 %v3035
    %3427 = vmatpush1.bf16.msra.mxu0 %v3034
    %3428 = vmatprep.subr.bf16.mxu0 %v3031
    %3429 = vmatpush1.bf16.msra.mxu0 %v3030
    %3430 = vmatprep.subr.bf16.mxu0 %v3091
    %3431 = vmatpush2.bf16.msra.mxu0 %v3090
    %3432 = vmatprep.subr.bf16.mxu0 %v3087
    %3433 = vmatpush2.bf16.msra.mxu0 %v3086
    %3434 = vmatprep.subr.bf16.mxu0 %v3083
    %3435 = vmatpush2.bf16.msra.mxu0 %v3082
    %3436 = vmatprep.subr.bf16.mxu0 %v3079
    %3437 = vmatpush2.bf16.msra.mxu0 %v3078
    %3438 = vmatprep.subr.bf16.mxu0 %v3075
    %3439 = vmatpush2.bf16.msra.mxu0 %v3074
    %3440 = vmatprep.subr.bf16.mxu0 %v3071
    %3441 = vmatpush2.bf16.msra.mxu0 %v3070
    %3442 = vmatprep.subr.bf16.mxu0 %v3067
    %3443 = vmatpush2.bf16.msra.mxu0 %v3066
    %3444 = vmatprep.subr.bf16.mxu0 %v3063
    %3445 = vmatpush2.bf16.msra.mxu0 %v3062
    %3446 = vmatprep.mubr.bf16.mxu0 %v2235
    %3447 = vmatmul.mubr.bf16.gmra.mxu0 %v2234
    %v3448 = vpop.f32.mrf.mxu0
    %v3449 = vadd.f32 %v2437, %v3448
    %v3450 = vpop.f32.mrf.mxu0
    %v3451 = vadd.f32 %v2441, %v3450
    %v3452 = vpop.f32.mrf.mxu0
    %v3453 = vpop.f32.mrf.mxu0
    %3454 = vdwg.mxu0
    %3455 = vmatprep.subr.bf16.mxu0 %v3123
    %3456 = vmatpush1.bf16.msra.mxu0 %v3122
    %3457 = vmatprep.subr.bf16.mxu0 %v3119
    %3458 = vmatpush1.bf16.msra.mxu0 %v3118
    %3459 = vmatprep.subr.bf16.mxu0 %v3115
    %3460 = vmatpush1.bf16.msra.mxu0 %v3114
    %3461 = vmatprep.subr.bf16.mxu0 %v3111
    %3462 = vmatpush1.bf16.msra.mxu0 %v3110
    %3463 = vmatprep.subr.bf16.mxu0 %v3107
    %3464 = vmatpush1.bf16.msra.mxu0 %v3106
    %3465 = vmatprep.subr.bf16.mxu0 %v3103
    %3466 = vmatpush1.bf16.msra.mxu0 %v3102
    %3467 = vmatprep.subr.bf16.mxu0 %v3099
    %3468 = vmatpush1.bf16.msra.mxu0 %v3098
    %3469 = vmatprep.subr.bf16.mxu0 %v3095
    %3470 = vmatpush1.bf16.msra.mxu0 %v3094
    %3471 = vmatprep.subr.bf16.mxu0 %v3155
    %3472 = vmatpush2.bf16.msra.mxu0 %v3154
    %3473 = vmatprep.subr.bf16.mxu0 %v3151
    %3474 = vmatpush2.bf16.msra.mxu0 %v3150
    %3475 = vmatprep.subr.bf16.mxu0 %v3147
    %3476 = vmatpush2.bf16.msra.mxu0 %v3146
    %3477 = vmatprep.subr.bf16.mxu0 %v3143
    %3478 = vmatpush2.bf16.msra.mxu0 %v3142
    %3479 = vmatprep.subr.bf16.mxu0 %v3139
    %3480 = vmatpush2.bf16.msra.mxu0 %v3138
    %3481 = vmatprep.subr.bf16.mxu0 %v3135
    %3482 = vmatpush2.bf16.msra.mxu0 %v3134
    %3483 = vmatprep.subr.bf16.mxu0 %v3131
    %3484 = vmatpush2.bf16.msra.mxu0 %v3130
    %3485 = vmatprep.subr.bf16.mxu0 %v3127
    %3486 = vmatpush2.bf16.msra.mxu0 %v3126
    %3487 = vmatprep.mubr.bf16.mxu0 %v2237
    %3488 = vmatmul.mubr.bf16.gmra.mxu0 %v2236
    %v3489 = vpop.f32.mrf.mxu0
    %v3490 = vadd.f32 %v3449, %v3489
    %v3491 = vpop.f32.mrf.mxu0
    %v3492 = vadd.f32 %v3451, %v3491
    %v3493 = vpop.f32.mrf.mxu0
    %v3494 = vpop.f32.mrf.mxu0
    %3495 = vdwg.mxu0
    %3496 = vmatprep.subr.bf16.mxu0 %v3187
    %3497 = vmatpush1.bf16.msra.mxu0 %v3186
    %3498 = vmatprep.subr.bf16.mxu0 %v3183
    %3499 = vmatpush1.bf16.msra.mxu0 %v3182
    %3500 = vmatprep.subr.bf16.mxu0 %v3179
    %3501 = vmatpush1.bf16.msra.mxu0 %v3178
    %3502 = vmatprep.subr.bf16.mxu0 %v3175
    %3503 = vmatpush1.bf16.msra.mxu0 %v3174
    %3504 = vmatprep.subr.bf16.mxu0 %v3171
    %3505 = vmatpush1.bf16.msra.mxu0 %v3170
    %3506 = vmatprep.subr.bf16.mxu0 %v3167
    %3507 = vmatpush1.bf16.msra.mxu0 %v3166
    %3508 = vmatprep.subr.bf16.mxu0 %v3163
    %3509 = vmatpush1.bf16.msra.mxu0 %v3162
    %3510 = vmatprep.subr.bf16.mxu0 %v3159
    %3511 = vmatpush1.bf16.msra.mxu0 %v3158
    %3512 = vmatprep.subr.bf16.mxu0 %v3219
    %3513 = vmatpush2.bf16.msra.mxu0 %v3218
    %3514 = vmatprep.subr.bf16.mxu0 %v3215
    %3515 = vmatpush2.bf16.msra.mxu0 %v3214
    %3516 = vmatprep.subr.bf16.mxu0 %v3211
    %3517 = vmatpush2.bf16.msra.mxu0 %v3210
    %3518 = vmatprep.subr.bf16.mxu0 %v3207
    %3519 = vmatpush2.bf16.msra.mxu0 %v3206
    %3520 = vmatprep.subr.bf16.mxu0 %v3203
    %3521 = vmatpush2.bf16.msra.mxu0 %v3202
    %3522 = vmatprep.subr.bf16.mxu0 %v3199
    %3523 = vmatpush2.bf16.msra.mxu0 %v3198
    %3524 = vmatprep.subr.bf16.mxu0 %v3195
    %3525 = vmatpush2.bf16.msra.mxu0 %v3194
    %3526 = vmatprep.subr.bf16.mxu0 %v3191
    %3527 = vmatpush2.bf16.msra.mxu0 %v3190
    %3528 = vmatprep.mubr.bf16.mxu0 %v2239
    %3529 = vmatmul.mubr.bf16.gmra.mxu0 %v2238
    %v3530 = vpop.f32.mrf.mxu0
    %v3531 = vadd.f32 %v3490, %v3530
    %v3532 = vpop.f32.mrf.mxu0
    %v3533 = vadd.f32 %v3492, %v3532
    %v3534 = vpop.f32.mrf.mxu0
    %v3535 = vpop.f32.mrf.mxu0
    %3536 = vdwg.mxu0
    %3537 = vmatprep.subr.bf16.mxu0 %v3061
    %3538 = vmatpush1.bf16.msra.mxu0 %v3060
    %3539 = vmatprep.subr.bf16.mxu0 %v3057
    %3540 = vmatpush1.bf16.msra.mxu0 %v3056
    %3541 = vmatprep.subr.bf16.mxu0 %v3053
    %3542 = vmatpush1.bf16.msra.mxu0 %v3052
    %3543 = vmatprep.subr.bf16.mxu0 %v3049
    %3544 = vmatpush1.bf16.msra.mxu0 %v3048
    %3545 = vmatprep.subr.bf16.mxu0 %v3045
    %3546 = vmatpush1.bf16.msra.mxu0 %v3044
    %3547 = vmatprep.subr.bf16.mxu0 %v3041
    %3548 = vmatpush1.bf16.msra.mxu0 %v3040
    %3549 = vmatprep.subr.bf16.mxu0 %v3037
    %3550 = vmatpush1.bf16.msra.mxu0 %v3036
    %3551 = vmatprep.subr.bf16.mxu0 %v3033
    %3552 = vmatpush1.bf16.msra.mxu0 %v3032
    %3553 = vmatprep.subr.bf16.mxu0 %v3093
    %3554 = vmatpush2.bf16.msra.mxu0 %v3092
    %3555 = vmatprep.subr.bf16.mxu0 %v3089
    %3556 = vmatpush2.bf16.msra.mxu0 %v3088
    %3557 = vmatprep.subr.bf16.mxu0 %v3085
    %3558 = vmatpush2.bf16.msra.mxu0 %v3084
    %3559 = vmatprep.subr.bf16.mxu0 %v3081
    %3560 = vmatpush2.bf16.msra.mxu0 %v3080
    %3561 = vmatprep.subr.bf16.mxu0 %v3077
    %3562 = vmatpush2.bf16.msra.mxu0 %v3076
    %3563 = vmatprep.subr.bf16.mxu0 %v3073
    %3564 = vmatpush2.bf16.msra.mxu0 %v3072
    %3565 = vmatprep.subr.bf16.mxu0 %v3069
    %3566 = vmatpush2.bf16.msra.mxu0 %v3068
    %3567 = vmatprep.subr.bf16.mxu0 %v3065
    %3568 = vmatpush2.bf16.msra.mxu0 %v3064
    %3569 = vmatprep.mubr.bf16.mxu0 %v2235
    %3570 = vmatmul.mubr.bf16.gmra.mxu0 %v2234
    %v3571 = vpop.f32.mrf.mxu0
    %v3572 = vadd.f32 %v2445, %v3571
    %v3573 = vpop.f32.mrf.mxu0
    %v3574 = vadd.f32 %v2449, %v3573
    %v3575 = vpop.f32.mrf.mxu0
    %v3576 = vpop.f32.mrf.mxu0
    %3577 = vdwg.mxu0
    %3578 = vmatprep.subr.bf16.mxu0 %v3125
    %3579 = vmatpush1.bf16.msra.mxu0 %v3124
    %3580 = vmatprep.subr.bf16.mxu0 %v3121
    %3581 = vmatpush1.bf16.msra.mxu0 %v3120
    %3582 = vmatprep.subr.bf16.mxu0 %v3117
    %3583 = vmatpush1.bf16.msra.mxu0 %v3116
    %3584 = vmatprep.subr.bf16.mxu0 %v3113
    %3585 = vmatpush1.bf16.msra.mxu0 %v3112
    %3586 = vmatprep.subr.bf16.mxu0 %v3109
    %3587 = vmatpush1.bf16.msra.mxu0 %v3108
    %3588 = vmatprep.subr.bf16.mxu0 %v3105
    %3589 = vmatpush1.bf16.msra.mxu0 %v3104
    %3590 = vmatprep.subr.bf16.mxu0 %v3101
    %3591 = vmatpush1.bf16.msra.mxu0 %v3100
    %3592 = vmatprep.subr.bf16.mxu0 %v3097
    %3593 = vmatpush1.bf16.msra.mxu0 %v3096
    %3594 = vmatprep.subr.bf16.mxu0 %v3157
    %3595 = vmatpush2.bf16.msra.mxu0 %v3156
    %3596 = vmatprep.subr.bf16.mxu0 %v3153
    %3597 = vmatpush2.bf16.msra.mxu0 %v3152
    %3598 = vmatprep.subr.bf16.mxu0 %v3149
    %3599 = vmatpush2.bf16.msra.mxu0 %v3148
    %3600 = vmatprep.subr.bf16.mxu0 %v3145
    %3601 = vmatpush2.bf16.msra.mxu0 %v3144
    %3602 = vmatprep.subr.bf16.mxu0 %v3141
    %3603 = vmatpush2.bf16.msra.mxu0 %v3140
    %3604 = vmatprep.subr.bf16.mxu0 %v3137
    %3605 = vmatpush2.bf16.msra.mxu0 %v3136
    %3606 = vmatprep.subr.bf16.mxu0 %v3133
    %3607 = vmatpush2.bf16.msra.mxu0 %v3132
    %3608 = vmatprep.subr.bf16.mxu0 %v3129
    %3609 = vmatpush2.bf16.msra.mxu0 %v3128
    %3610 = vmatprep.mubr.bf16.mxu0 %v2237
    %3611 = vmatmul.mubr.bf16.gmra.mxu0 %v2236
    %v3612 = vpop.f32.mrf.mxu0
    %v3613 = vadd.f32 %v3572, %v3612
    %v3614 = vpop.f32.mrf.mxu0
    %v3615 = vadd.f32 %v3574, %v3614
    %v3616 = vpop.f32.mrf.mxu0
    %v3617 = vpop.f32.mrf.mxu0
    %3618 = vdwg.mxu0
    %3619 = vmatprep.subr.bf16.mxu0 %v3189
    %3620 = vmatpush1.bf16.msra.mxu0 %v3188
    %3621 = vmatprep.subr.bf16.mxu0 %v3185
    %3622 = vmatpush1.bf16.msra.mxu0 %v3184
    %3623 = vmatprep.subr.bf16.mxu0 %v3181
    %3624 = vmatpush1.bf16.msra.mxu0 %v3180
    %3625 = vmatprep.subr.bf16.mxu0 %v3177
    %3626 = vmatpush1.bf16.msra.mxu0 %v3176
    %3627 = vmatprep.subr.bf16.mxu0 %v3173
    %3628 = vmatpush1.bf16.msra.mxu0 %v3172
    %3629 = vmatprep.subr.bf16.mxu0 %v3169
    %3630 = vmatpush1.bf16.msra.mxu0 %v3168
    %3631 = vmatprep.subr.bf16.mxu0 %v3165
    %3632 = vmatpush1.bf16.msra.mxu0 %v3164
    %3633 = vmatprep.subr.bf16.mxu0 %v3161
    %3634 = vmatpush1.bf16.msra.mxu0 %v3160
    %3635 = vmatprep.subr.bf16.mxu0 %v3221
    %3636 = vmatpush2.bf16.msra.mxu0 %v3220
    %3637 = vmatprep.subr.bf16.mxu0 %v3217
    %3638 = vmatpush2.bf16.msra.mxu0 %v3216
    %3639 = vmatprep.subr.bf16.mxu0 %v3213
    %3640 = vmatpush2.bf16.msra.mxu0 %v3212
    %3641 = vmatprep.subr.bf16.mxu0 %v3209
    %3642 = vmatpush2.bf16.msra.mxu0 %v3208
    %3643 = vmatprep.subr.bf16.mxu0 %v3205
    %3644 = vmatpush2.bf16.msra.mxu0 %v3204
    %3645 = vmatprep.subr.bf16.mxu0 %v3201
    %3646 = vmatpush2.bf16.msra.mxu0 %v3200
    %3647 = vmatprep.subr.bf16.mxu0 %v3197
    %3648 = vmatpush2.bf16.msra.mxu0 %v3196
    %3649 = vmatprep.subr.bf16.mxu0 %v3193
    %3650 = vmatpush2.bf16.msra.mxu0 %v3192
    %3651 = vmatprep.mubr.bf16.mxu0 %v2239
    %3652 = vmatmul.mubr.bf16.gmra.mxu0 %v2238
    %v3653 = vpop.f32.mrf.mxu0
    %v3654 = vadd.f32 %v3613, %v3653
    %v3655 = vpop.f32.mrf.mxu0
    %v3656 = vadd.f32 %v3615, %v3655
    %v3657 = vpop.f32.mrf.mxu0
    %v3658 = vpop.f32.mrf.mxu0
    %3659 = vdwg.mxu0
    %v3660 = vmul.f32 %v3531, %v3531
    %v3661 = vmul.f32 %v3533, %v3533
    %v3662 = vmul.f32 %v3654, %v3654
    %v3663 = vmul.f32 %v3656, %v3656
    %v3664 = vadd.f32 %v3660, %v3661
    %v3665 = vadd.f32 %v3664, %v3662
    %v3666 = vadd.f32 %v3665, %v3663
    %3667 = vadd.xlane.f32.xlu0 %v3666
    %v3668 = vpop.xlane.xlu0 %3667
    %v3669 = vmax.f32 %v3668, 1e-24
    %v3670 = vrsqrt.pop %v3669
    %s3671 = sld [smem:[#allocation2]]
    %v3672 = vstv %s3671
    %v3673 = vmul.f32 %v3672, 1.442695
    %v3674 = vpow.pop %v3673
    %s3675 = vtos %v3674
    %v3676 = vmul.f32 %v3531, %v3670
    %v3677 = vmul.f32 %v3533, %v3670
    %v3678 = vmul.f32 %v3654, %v3670
    %v3679 = vmul.f32 %v3656, %v3670
    %v3680 = vstv %s3675
    %v3681 = vmul.f32 %v3676, %v3680
    %v3682 = vmul.f32 %v3677, %v3680
    %v3683 = vmul.f32 %v3678, %v3680
    %v3684 = vmul.f32 %v3679, %v3680
    %v3685 = vpack.c.bf16 %v3681, %v3681
    %v3686 = vpack.c.bf16 %v3682, %v3682
    %v3687 = vpack.c.bf16 %v3683, %v3683
    %v3688 = vpack.c.bf16 %v3684, %v3684
    %v3693 = vunpack.c.l.b16 %v3685
    %v3694 = vunpack.c.l.b16 %v3686
    %v3695 = vunpack.c.l.b16 %v3687
    %v3696 = vunpack.c.l.b16 %v3688
    %v3697 = vpack.c.b16 %v3694, %v3693
    %v3698 = vpack.c.b16 %v3696, %v3695
    %3701 = vst [vmem:[%s6] sm:$0xff] %v3697
    %3702 = vst [vmem:[%s6 + $0x8] sm:$0xff] %v3698
    // Predicated region
    $region42: #{geoclip_forward.2} parent=1 // pred_check
      _
    $region43: #{geoclip_forward.2} parent=1 // pred_check_branch
      %3704 = sbr.rel (0) target = $region45
    $region44: #{geoclip_forward.2} parent=1 // pred_region
      _
    $region45: #{geoclip_forward.2} parent=1 // pred_fallthru
      _
    // Predicated region
    $region46: #{geoclip_forward.2} parent=1 // pred_check
      _
    $region47: #{geoclip_forward.2} parent=1 // pred_check_branch
      %3706 = sbr.rel (0) target = $region49
    $region48: #{geoclip_forward.2} parent=1 // pred_region
      _
    $region49: #{geoclip_forward.2} parent=1 // pred_fallthru
      _
    %3707 = vsyncpa [#allocation4], 1
    %3708 = vsyncpa [#allocation6], 1
    %3709 = vsyncpa [#allocation9], 1

</llo_original>
